<compile_context>
chip_gen: v7x
topology: tpu7x:2x2x1
jax: 0.10.0
libtpu: 0.0.40
codegen_flags: <defaults>
</compile_context>

<pallas_src>
import functools
import math

import jax
import jax.numpy as jnp
from jax import lax
from jax.experimental import pallas as pl
from jax.experimental.pallas import tpu as pltpu


def _layer_norm(x, gamma, beta, eps=1e-5):
    mu = jnp.mean(x, axis=-1, keepdims=True)
    var = jnp.mean((x - mu) ** 2, axis=-1, keepdims=True)
    return (x - mu) * lax.rsqrt(var + eps) * gamma + beta


def lstm_attention_kernel(
    # inputs
    emb_ref, kv_ref,
    wih_ref, whh_ref, bih_ref,
    ln1_g_ref, ln1_b_ref,
    lna_g_ref, lna_b_ref,
    wqkv_ref, bqkv_ref,
    w1_ref, b1_ref, ln2_g_ref, ln2_b_ref,
    w2_ref, b2_ref,
    # outputs
    logits_ref, attn_ref,
    # scratch
    gin_scr, hf_scr, hb_scr,
    *, hidden_dim, attention_dim):
    B, _, S = kv_ref.shape                 # kv mask is [B, 1, S]
    H = hidden_dim
    G = 4 * H                              # per-direction gate width (i, f, g, o)
    H2 = 2 * H
    A = attention_dim
    f32 = jnp.float32
    inv_scale = f32(1.0 / math.sqrt(float(A)))

    # ---- Stage 1: hoisted input->hidden projection, both directions fused ---
    # One [S*B, E] @ [E, 8H] matmul; bias_ih + bias_hh folded in here so the
    # serial loop never re-adds biases.
    gate_in = (jnp.dot(emb_ref[...], wih_ref[...],
                       preferred_element_type=f32) + bih_ref[...])    # [S*B, 8H]
    # Repack time-major flat rows into (S, B, 8H) so the recurrence does
    # aligned whole-slab gin_scr[t] loads instead of misaligned pl.ds(t*B, B).
    # TODO(synk): at large S replace these per-t copies with a tile-boundary
    # reshape / chunked pltpu.emit_pipeline stage (bf16 gin) to bound VMEM.
    for t in range(S):
        gin_scr[t] = gate_in[t * B:(t + 1) * B, :]

    whh = whh_ref[...]   # [2H, 8H] block-diagonal (fwd rows :H -> cols :4H,
                         #                          bwd rows H: -> cols 4H:)

    def gate_update(gates, c):             # gates: [B, 4H], PyTorch order i,f,g,o
        # TODO(synk): with H=32 the gate slices are intra-vreg lane extracts;
        # full 128-lane alignment would require padding H to 128.
        i = jax.nn.sigmoid(gates[:, 0:H])
        f = jax.nn.sigmoid(gates[:, H:2 * H])
        g = jnp.tanh(gates[:, 2 * H:3 * H])
        o = jax.nn.sigmoid(gates[:, 3 * H:4 * H])
        c_new = f * c + i * g
        return o * jnp.tanh(c_new), c_new

    # ---- fused fwd/bwd recurrence: one MXU dot per step ----------------------
    def step(t, carry):
        h, c_f, c_b = carry                                   # h = [h_f | h_b], [B, 2H]
        rec = jnp.dot(h, whh, preferred_element_type=f32)     # single [B,2H]@[2H,8H] dot
        gates_f = rec[:, :G] + gin_scr[t][:, :G]              # fwd consumes x_t
        gates_b = rec[:, G:] + gin_scr[S - 1 - t][:, G:]      # bwd consumes x_{S-1-t}
        h_f, c_f = gate_update(gates_f, c_f)
        h_b, c_b = gate_update(gates_b, c_b)
        # Batch-major writeback (row = b*S + time); off the serial dependency
        # chain, so these masked single-row stores are hidden under the dots.
        for b in range(B):
            hf_scr[pl.ds(b * S + t, 1), :] = h_f[b:b + 1, :]
            hb_scr[pl.ds(b * S + (S - 1 - t), 1), :] = h_b[b:b + 1, :]
        return jnp.concatenate([h_f, h_b], axis=-1), c_f, c_b

    zeros2 = jnp.zeros((B, H2), f32)
    zeros1 = jnp.zeros((B, H), f32)
    lax.fori_loop(0, S, step, (zeros2, zeros1, zeros1), unroll=True)

    # ---- Stage 2: LayerNorms + batched QKV on dense flat [B*S, 2H] tiles -----
    hid_flat = jnp.concatenate([hf_scr[...], hb_scr[...]], axis=-1)   # [B*S, 2H] batch-major
    lstm_out = _layer_norm(hid_flat, ln1_g_ref[...], ln1_b_ref[...])  # layer_norm1
    normed = _layer_norm(lstm_out, lna_g_ref[...], lna_b_ref[...])    # attention's LayerNorm
    qkv = (jnp.dot(normed, wqkv_ref[...],
                   preferred_element_type=f32) + bqkv_ref[...])       # [B*S, 2A+2H]

    # ---- Stage 3: batched masked self-attention ------------------------------
    # Batch-major rows are contiguous full-tile blocks -> cheap leading-dim stack.
    qkv_bm = jnp.stack([qkv[b * S:(b + 1) * S, :] for b in range(B)], axis=0)       # [B,S,2A+2H]
    hid_bm = jnp.stack([lstm_out[b * S:(b + 1) * S, :] for b in range(B)], axis=0)  # [B,S,2H]
    q = qkv_bm[:, :, 0:A]
    k = qkv_bm[:, :, A:2 * A]
    v = qkv_bm[:, :, 2 * A:]

    energy = jnp.einsum('bqa,bka->bqk', q, k,
                        preferred_element_type=f32) * inv_scale        # [B,S,S]
    energy = jnp.where(kv_ref[...] > 0.5, energy, f32(-1e10))          # mask key dim
    e_max = jnp.max(energy, axis=-1, keepdims=True)
    p = jnp.exp(energy - e_max)
    attn = p / jnp.sum(p, axis=-1, keepdims=True)   # exact softmax (external output)
    attn_ref[...] = attn                            # single [B,S,S] store

    context = jnp.einsum('bqk,bkd->bqd', attn, v,
                         preferred_element_type=f32) + hid_bm          # residual add
    pooled = jnp.max(context, axis=1)               # max over time (pads included, as in ref)

    # ---- Stage 4: classifier head --------------------------------------------
    x1 = jnp.dot(pooled, w1_ref[...], preferred_element_type=f32) + b1_ref[...]
    x1 = jnp.maximum(_layer_norm(x1, ln2_g_ref[...], ln2_b_ref[...]), 0.0)
    logits_ref[...] = (jnp.dot(x1, w2_ref[...],
                               preferred_element_type=f32) + b2_ref[...])


def init_params(key, vocab_size, embedding_dim, hidden_dim, output_dim,
                attention_dim=None, pad_idx=0):
    H = hidden_dim
    H2 = 2 * H
    if attention_dim is None:
        attention_dim = H2
    A = attention_dim
    ks = jax.random.split(key, 20)
    f32 = jnp.float32

    def rnd(k, shape, scale=0.1):
        return (scale * jax.random.normal(k, shape)).astype(f32)

    emb = rnd(ks[0], (vocab_size, embedding_dim))
    emb = emb.at[pad_idx].set(0.0)                      # padding_idx row = 0

    # PyTorch LSTM layout [4H, E] / [4H, H], gate order (i, f, g, o);
    # transposed for x @ W and biases (b_ih + b_hh) summed.
    wih_f = rnd(ks[1], (4 * H, embedding_dim)).T        # [E, 4H]
    whh_f = rnd(ks[2], (4 * H, H)).T                    # [H, 4H]
    b_f = rnd(ks[3], (4 * H,)) + rnd(ks[4], (4 * H,))
    wih_b = rnd(ks[5], (4 * H, embedding_dim)).T
    whh_b = rnd(ks[6], (4 * H, H)).T
    b_b = rnd(ks[7], (4 * H,)) + rnd(ks[8], (4 * H,))

    # Host-side fused, direction-blocked weights: one input matmul and a
    # block-diagonal recurrent weight -> single MXU dot per recurrence step.
    wih_fused = jnp.concatenate([wih_f, wih_b], axis=1)             # [E, 8H]
    b_fused = jnp.concatenate([b_f, b_b]).reshape(1, 8 * H)         # [1, 8H]
    whh_fused = jnp.zeros((H2, 8 * H), f32)
    whh_fused = whh_fused.at[:H, :4 * H].set(whh_f)
    whh_fused = whh_fused.at[H:, 4 * H:].set(whh_b)                 # [2H, 8H]

    # attention Q/K/V (PyTorch Linear [out, in] -> transposed), concatenated.
    wq = rnd(ks[9], (A, H2)).T
    bq = rnd(ks[10], (A,))
    wk = rnd(ks[11], (A, H2)).T
    bk = rnd(ks[12], (A,))
    wv = rnd(ks[13], (H2, H2)).T
    bv = rnd(ks[14], (H2,))

    params = dict(
        hidden_dim=H,
        attention_dim=A,
        embedding=emb,
        wih_fused=wih_fused, whh_fused=whh_fused, b_fused=b_fused,
        ln1_g=jnp.ones((1, H2), f32), ln1_b=jnp.zeros((1, H2), f32),
        lna_g=jnp.ones((1, H2), f32), lna_b=jnp.zeros((1, H2), f32),
        wqkv=jnp.concatenate([wq, wk, wv], axis=1),                 # [2H, 2A+2H]
        bqkv=jnp.concatenate([bq, bk, bv]).reshape(1, 2 * A + H2),  # [1, 2A+2H]
        w1=rnd(ks[15], (H, H2)).T, b1=rnd(ks[16], (H,)).reshape(1, H),
        ln2_g=jnp.ones((1, H), f32), ln2_b=jnp.zeros((1, H), f32),
        w2=rnd(ks[17], (output_dim, H)).T,
        b2=rnd(ks[18], (output_dim,)).reshape(1, output_dim),
    )
    return params


def lstm_with_attention_forward(text, params, pad_idx=0):
    B, S = text.shape
    H = params["hidden_dim"]
    A = params["attention_dim"]
    O = params["w2"].shape[1]
    E = params["embedding"].shape[1]
    f32 = jnp.float32

    # glue: embedding gather + dropout(identity, eval) + time-major flat layout.
    # Only the un-reversed embedding is passed (backward direction reads the
    # hoisted gate slab at S-1-t in-kernel), halving the embedding DMA.
    embedded = params["embedding"][text]                                 # [B, S, E]
    emb_flat = jnp.transpose(embedded, (1, 0, 2)).reshape(S * B, E).astype(f32)
    key_valid = (text != pad_idx).astype(f32).reshape(B, 1, S)           # key-dim mask

    inputs = (
        emb_flat, key_valid,
        params["wih_fused"], params["whh_fused"], params["b_fused"],
        params["ln1_g"], params["ln1_b"],
        params["lna_g"], params["lna_b"],
        params["wqkv"], params["bqkv"],
        params["w1"], params["b1"], params["ln2_g"], params["ln2_b"],
        params["w2"], params["b2"],
    )

    vmem_spec = lambda: pl.BlockSpec(memory_space=pltpu.MemorySpace.VMEM)
    kernel = functools.partial(lstm_attention_kernel, hidden_dim=H,
                               attention_dim=A)

    # TODO(synk): on v7x, shard the batch over the 2 TensorCores with a
    # "parallel" grid axis (or pl.core_map); at B=2 toy size one invocation.
    logits, attn = pl.pallas_call(
        kernel,
        out_shape=(
            jax.ShapeDtypeStruct((B, O), f32),
            jax.ShapeDtypeStruct((B, S, S), f32),
        ),
        in_specs=[vmem_spec() for _ in inputs],
        out_specs=(vmem_spec(), vmem_spec()),
        scratch_shapes=[
            pltpu.VMEM((S, B, 8 * H), f32),   # time-aligned fused input gates
            pltpu.VMEM((B * S, H), f32),      # forward hidden states, batch-major
            pltpu.VMEM((B * S, H), f32),      # backward hidden states, batch-major
        ],
        compiler_params=pltpu.CompilerParams(
            # explicit VMEM budget (buffers here are <<1 MiB; 32 MiB leaves
            # headroom and stays under the 64 MiB v7x physical limit).
            vmem_limit_bytes=32 * 1024 * 1024,
        ),
    )(*inputs)
    return logits, attn


if __name__ == "__main__":
    vocab_size, embedding_dim, hidden_dim, output_dim = 50, 16, 32, 6
    pad_idx = 0
    B, S = 2, 8

    key = jax.random.PRNGKey(0)
    k_text, k_params = jax.random.split(key)

    text = jax.random.randint(k_text, (B, S), 1, vocab_size, dtype=jnp.int32)
    # a couple of pad tokens so the attention mask path is exercised
    text = text.at[0, -2:].set(pad_idx)

    params = init_params(k_params, vocab_size, embedding_dim, hidden_dim,
                         output_dim, attention_dim=None, pad_idx=pad_idx)

    logits, attn_weights = lstm_with_attention_forward(text, params,
                                                       pad_idx=pad_idx)
    jax.block_until_ready((logits, attn_weights))
    assert logits.shape == (B, output_dim)
    assert attn_weights.shape == (B, S, S)
    # TODO(synk): nn.Dropout layers are identity at inference and are omitted.
    print("KERNEL_OK")
</pallas_src>

<mosaic_0001>
module attributes {stable_mosaic.version = 11 : i64} {
  func.func @lstm_attention_kernel(%arg0: memref<16x16xf32, #tpu.memory_space<vmem>>, %arg1: memref<2x1x8xf32, #tpu.memory_space<vmem>>, %arg2: memref<16x256xf32, #tpu.memory_space<vmem>>, %arg3: memref<64x256xf32, #tpu.memory_space<vmem>>, %arg4: memref<1x256xf32, #tpu.memory_space<vmem>>, %arg5: memref<1x64xf32, #tpu.memory_space<vmem>>, %arg6: memref<1x64xf32, #tpu.memory_space<vmem>>, %arg7: memref<1x64xf32, #tpu.memory_space<vmem>>, %arg8: memref<1x64xf32, #tpu.memory_space<vmem>>, %arg9: memref<64x192xf32, #tpu.memory_space<vmem>>, %arg10: memref<1x192xf32, #tpu.memory_space<vmem>>, %arg11: memref<64x32xf32, #tpu.memory_space<vmem>>, %arg12: memref<1x32xf32, #tpu.memory_space<vmem>>, %arg13: memref<1x32xf32, #tpu.memory_space<vmem>>, %arg14: memref<1x32xf32, #tpu.memory_space<vmem>>, %arg15: memref<32x6xf32, #tpu.memory_space<vmem>>, %arg16: memref<1x6xf32, #tpu.memory_space<vmem>>, %arg17: memref<2x6xf32, #tpu.memory_space<vmem>>, %arg18: memref<2x8x8xf32, #tpu.memory_space<vmem>>, %arg19: memref<8x2x256xf32, #tpu.memory_space<vmem>>, %arg20: memref<16x32xf32, #tpu.memory_space<vmem>>, %arg21: memref<16x32xf32, #tpu.memory_space<vmem>>) attributes {dimension_semantics = [], scalar_prefetch = 0 : i64, scratch_operands = 3 : i64, tpu.core_type = #tpu.core_type<tc>} {
    %c0 = arith.constant 0 : index
    %c0_0 = arith.constant 0 : index
    %0 = vector.load %arg0[%c0, %c0_0] : memref<16x16xf32, #tpu.memory_space<vmem>>, vector<16x16xf32>
    %c0_1 = arith.constant 0 : index
    %c0_2 = arith.constant 0 : index
    %1 = vector.load %arg2[%c0_1, %c0_2] : memref<16x256xf32, #tpu.memory_space<vmem>>, vector<16x256xf32>
    %cst = arith.constant dense<0.000000e+00> : vector<16x256xf32>
    %2 = tpu.matmul %0, %1, %cst {dimension_numbers = #tpu.dot_dimension_numbers<[1], [0], [0], [1], [0, 0, 1, 1], [], []>} : vector<16x16xf32>, vector<16x256xf32>, vector<16x256xf32> -> vector<16x256xf32>
    %c0_3 = arith.constant 0 : index
    %c0_4 = arith.constant 0 : index
    %3 = vector.load %arg4[%c0_3, %c0_4] : memref<1x256xf32, #tpu.memory_space<vmem>>, vector<1x256xf32>
    %4 = vector.broadcast %3 : vector<1x256xf32> to vector<16x256xf32>
    %5 = arith.addf %2, %4 : vector<16x256xf32>
    %6 = vector.extract_strided_slice %5 {offsets = [0, 0], sizes = [2, 256], strides = [1, 1]} : vector<16x256xf32> to vector<2x256xf32>
    %c0_5 = arith.constant 0 : index
    %c0_6 = arith.constant 0 : index
    %c0_7 = arith.constant 0 : index
    %7 = vector.load %arg19[%c0_5, %c0_6, %c0_7] : memref<8x2x256xf32, #tpu.memory_space<vmem>>, vector<1x2x256xf32>
    %8 = vector.shape_cast %7 : vector<1x2x256xf32> to vector<2x256xf32>
    %9 = vector.shape_cast %6 : vector<2x256xf32> to vector<1x2x256xf32>
    tpu.vector_store %arg19[%c0_5, %c0_6, %c0_7], %9 {strides = array<i32>} : memref<8x2x256xf32, #tpu.memory_space<vmem>>, vector<1x2x256xf32>,
    %10 = vector.extract_strided_slice %5 {offsets = [2, 0], sizes = [2, 256], strides = [1, 1]} : vector<16x256xf32> to vector<2x256xf32>
    %c1 = arith.constant 1 : index
    %c0_8 = arith.constant 0 : index
    %c0_9 = arith.constant 0 : index
    %11 = vector.load %arg19[%c1, %c0_8, %c0_9] : memref<8x2x256xf32, #tpu.memory_space<vmem>>, vector<1x2x256xf32>
    %12 = vector.shape_cast %11 : vector<1x2x256xf32> to vector<2x256xf32>
    %13 = vector.shape_cast %10 : vector<2x256xf32> to vector<1x2x256xf32>
    tpu.vector_store %arg19[%c1, %c0_8, %c0_9], %13 {strides = array<i32>} : memref<8x2x256xf32, #tpu.memory_space<vmem>>, vector<1x2x256xf32>,
    %14 = vector.extract_strided_slice %5 {offsets = [4, 0], sizes = [2, 256], strides = [1, 1]} : vector<16x256xf32> to vector<2x256xf32>
    %c2 = arith.constant 2 : index
    %c0_10 = arith.constant 0 : index
    %c0_11 = arith.constant 0 : index
    %15 = vector.load %arg19[%c2, %c0_10, %c0_11] : memref<8x2x256xf32, #tpu.memory_space<vmem>>, vector<1x2x256xf32>
    %16 = vector.shape_cast %15 : vector<1x2x256xf32> to vector<2x256xf32>
    %17 = vector.shape_cast %14 : vector<2x256xf32> to vector<1x2x256xf32>
    tpu.vector_store %arg19[%c2, %c0_10, %c0_11], %17 {strides = array<i32>} : memref<8x2x256xf32, #tpu.memory_space<vmem>>, vector<1x2x256xf32>,
    %18 = vector.extract_strided_slice %5 {offsets = [6, 0], sizes = [2, 256], strides = [1, 1]} : vector<16x256xf32> to vector<2x256xf32>
    %c3 = arith.constant 3 : index
    %c0_12 = arith.constant 0 : index
    %c0_13 = arith.constant 0 : index
    %19 = vector.load %arg19[%c3, %c0_12, %c0_13] : memref<8x2x256xf32, #tpu.memory_space<vmem>>, vector<1x2x256xf32>
    %20 = vector.shape_cast %19 : vector<1x2x256xf32> to vector<2x256xf32>
    %21 = vector.shape_cast %18 : vector<2x256xf32> to vector<1x2x256xf32>
    tpu.vector_store %arg19[%c3, %c0_12, %c0_13], %21 {strides = array<i32>} : memref<8x2x256xf32, #tpu.memory_space<vmem>>, vector<1x2x256xf32>,
    %22 = vector.extract_strided_slice %5 {offsets = [8, 0], sizes = [2, 256], strides = [1, 1]} : vector<16x256xf32> to vector<2x256xf32>
    %c4 = arith.constant 4 : index
    %c0_14 = arith.constant 0 : index
    %c0_15 = arith.constant 0 : index
    %23 = vector.load %arg19[%c4, %c0_14, %c0_15] : memref<8x2x256xf32, #tpu.memory_space<vmem>>, vector<1x2x256xf32>
    %24 = vector.shape_cast %23 : vector<1x2x256xf32> to vector<2x256xf32>
    %25 = vector.shape_cast %22 : vector<2x256xf32> to vector<1x2x256xf32>
    tpu.vector_store %arg19[%c4, %c0_14, %c0_15], %25 {strides = array<i32>} : memref<8x2x256xf32, #tpu.memory_space<vmem>>, vector<1x2x256xf32>,
    %26 = vector.extract_strided_slice %5 {offsets = [10, 0], sizes = [2, 256], strides = [1, 1]} : vector<16x256xf32> to vector<2x256xf32>
    %c5 = arith.constant 5 : index
    %c0_16 = arith.constant 0 : index
    %c0_17 = arith.constant 0 : index
    %27 = vector.load %arg19[%c5, %c0_16, %c0_17] : memref<8x2x256xf32, #tpu.memory_space<vmem>>, vector<1x2x256xf32>
    %28 = vector.shape_cast %27 : vector<1x2x256xf32> to vector<2x256xf32>
    %29 = vector.shape_cast %26 : vector<2x256xf32> to vector<1x2x256xf32>
    tpu.vector_store %arg19[%c5, %c0_16, %c0_17], %29 {strides = array<i32>} : memref<8x2x256xf32, #tpu.memory_space<vmem>>, vector<1x2x256xf32>,
    %30 = vector.extract_strided_slice %5 {offsets = [12, 0], sizes = [2, 256], strides = [1, 1]} : vector<16x256xf32> to vector<2x256xf32>
    %c6 = arith.constant 6 : index
    %c0_18 = arith.constant 0 : index
    %c0_19 = arith.constant 0 : index
    %31 = vector.load %arg19[%c6, %c0_18, %c0_19] : memref<8x2x256xf32, #tpu.memory_space<vmem>>, vector<1x2x256xf32>
    %32 = vector.shape_cast %31 : vector<1x2x256xf32> to vector<2x256xf32>
    %33 = vector.shape_cast %30 : vector<2x256xf32> to vector<1x2x256xf32>
    tpu.vector_store %arg19[%c6, %c0_18, %c0_19], %33 {strides = array<i32>} : memref<8x2x256xf32, #tpu.memory_space<vmem>>, vector<1x2x256xf32>,
    %34 = vector.extract_strided_slice %5 {offsets = [14, 0], sizes = [2, 256], strides = [1, 1]} : vector<16x256xf32> to vector<2x256xf32>
    %c7 = arith.constant 7 : index
    %c0_20 = arith.constant 0 : index
    %c0_21 = arith.constant 0 : index
    %35 = vector.load %arg19[%c7, %c0_20, %c0_21] : memref<8x2x256xf32, #tpu.memory_space<vmem>>, vector<1x2x256xf32>
    %36 = vector.shape_cast %35 : vector<1x2x256xf32> to vector<2x256xf32>
    %37 = vector.shape_cast %34 : vector<2x256xf32> to vector<1x2x256xf32>
    tpu.vector_store %arg19[%c7, %c0_20, %c0_21], %37 {strides = array<i32>} : memref<8x2x256xf32, #tpu.memory_space<vmem>>, vector<1x2x256xf32>,
    %c0_22 = arith.constant 0 : index
    %c0_23 = arith.constant 0 : index
    %38 = vector.load %arg3[%c0_22, %c0_23] : memref<64x256xf32, #tpu.memory_space<vmem>>, vector<64x256xf32>
    %cst_24 = arith.constant 0.000000e+00 : f32
    %39 = vector.broadcast %cst_24 : f32 to vector<2x64xf32>
    %cst_25 = arith.constant 0.000000e+00 : f32
    %40 = vector.broadcast %cst_25 : f32 to vector<2x32xf32>
    %c0_i32 = arith.constant 0 : i32
    %cst_26 = arith.constant dense<0.000000e+00> : vector<2x256xf32>
    %41 = tpu.matmul %39, %38, %cst_26 {dimension_numbers = #tpu.dot_dimension_numbers<[1], [0], [0], [1], [0, 0, 1, 1], [], []>} : vector<2x64xf32>, vector<64x256xf32>, vector<2x256xf32> -> vector<2x256xf32>
    %42 = vector.extract_strided_slice %41 {offsets = [0, 0], sizes = [2, 128], strides = [1, 1]} : vector<2x256xf32> to vector<2x128xf32>
    %43 = arith.index_cast %c0_i32 : i32 to index
    %c0_27 = arith.constant 0 : index
    %c0_28 = arith.constant 0 : index
    %44 = vector.load %arg19[%43, %c0_27, %c0_28] : memref<8x2x256xf32, #tpu.memory_space<vmem>>, vector<1x2x256xf32>
    %45 = vector.shape_cast %44 : vector<1x2x256xf32> to vector<2x256xf32>
    %46 = vector.extract_strided_slice %45 {offsets = [0, 0], sizes = [2, 128], strides = [1, 1]} : vector<2x256xf32> to vector<2x128xf32>
    %47 = arith.addf %42, %46 : vector<2x128xf32>
    %48 = vector.extract_strided_slice %41 {offsets = [0, 128], sizes = [2, 128], strides = [1, 1]} : vector<2x256xf32> to vector<2x128xf32>
    %c7_i32 = arith.constant 7 : i32
    %49 = arith.subi %c7_i32, %c0_i32 : i32
    %50 = arith.index_cast %49 : i32 to index
    %c0_29 = arith.constant 0 : index
    %c0_30 = arith.constant 0 : index
    %51 = vector.load %arg19[%50, %c0_29, %c0_30] : memref<8x2x256xf32, #tpu.memory_space<vmem>>, vector<1x2x256xf32>
    %52 = vector.shape_cast %51 : vector<1x2x256xf32> to vector<2x256xf32>
    %53 = vector.extract_strided_slice %52 {offsets = [0, 128], sizes = [2, 128], strides = [1, 1]} : vector<2x256xf32> to vector<2x128xf32>
    %54 = arith.addf %48, %53 : vector<2x128xf32>
    %55 = vector.extract_strided_slice %47 {offsets = [0, 0], sizes = [2, 32], strides = [1, 1]} : vector<2x128xf32> to vector<2x32xf32>
    %56 = arith.negf %55 : vector<2x32xf32>
    %57 = math.exp %56 : vector<2x32xf32>
    %cst_31 = arith.constant 1.000000e+00 : f32
    %58 = vector.broadcast %cst_31 : f32 to vector<2x32xf32>
    %59 = arith.addf %58, %57 : vector<2x32xf32>
    %60 = arith.divf %58, %59 : vector<2x32xf32>
    %61 = vector.extract_strided_slice %47 {offsets = [0, 32], sizes = [2, 32], strides = [1, 1]} : vector<2x128xf32> to vector<2x32xf32>
    %62 = arith.negf %61 : vector<2x32xf32>
    %63 = math.exp %62 : vector<2x32xf32>
    %cst_32 = arith.constant 1.000000e+00 : f32
    %64 = vector.broadcast %cst_32 : f32 to vector<2x32xf32>
    %65 = arith.addf %64, %63 : vector<2x32xf32>
    %66 = arith.divf %64, %65 : vector<2x32xf32>
    %67 = vector.extract_strided_slice %47 {offsets = [0, 64], sizes = [2, 32], strides = [1, 1]} : vector<2x128xf32> to vector<2x32xf32>
    %68 = math.tanh %67 : vector<2x32xf32>
    %69 = vector.extract_strided_slice %47 {offsets = [0, 96], sizes = [2, 32], strides = [1, 1]} : vector<2x128xf32> to vector<2x32xf32>
    %70 = arith.negf %69 : vector<2x32xf32>
    %71 = math.exp %70 : vector<2x32xf32>
    %cst_33 = arith.constant 1.000000e+00 : f32
    %72 = vector.broadcast %cst_33 : f32 to vector<2x32xf32>
    %73 = arith.addf %72, %71 : vector<2x32xf32>
    %74 = arith.divf %72, %73 : vector<2x32xf32>
    %75 = arith.mulf %66, %40 : vector<2x32xf32>
    %76 = arith.mulf %60, %68 : vector<2x32xf32>
    %77 = arith.addf %75, %76 : vector<2x32xf32>
    %78 = math.tanh %77 : vector<2x32xf32>
    %79 = arith.mulf %74, %78 : vector<2x32xf32>
    %80 = vector.extract_strided_slice %54 {offsets = [0, 0], sizes = [2, 32], strides = [1, 1]} : vector<2x128xf32> to vector<2x32xf32>
    %81 = arith.negf %80 : vector<2x32xf32>
    %82 = math.exp %81 : vector<2x32xf32>
    %cst_34 = arith.constant 1.000000e+00 : f32
    %83 = vector.broadcast %cst_34 : f32 to vector<2x32xf32>
    %84 = arith.addf %83, %82 : vector<2x32xf32>
    %85 = arith.divf %83, %84 : vector<2x32xf32>
    %86 = vector.extract_strided_slice %54 {offsets = [0, 32], sizes = [2, 32], strides = [1, 1]} : vector<2x128xf32> to vector<2x32xf32>
    %87 = arith.negf %86 : vector<2x32xf32>
    %88 = math.exp %87 : vector<2x32xf32>
    %cst_35 = arith.constant 1.000000e+00 : f32
    %89 = vector.broadcast %cst_35 : f32 to vector<2x32xf32>
    %90 = arith.addf %89, %88 : vector<2x32xf32>
    %91 = arith.divf %89, %90 : vector<2x32xf32>
    %92 = vector.extract_strided_slice %54 {offsets = [0, 64], sizes = [2, 32], strides = [1, 1]} : vector<2x128xf32> to vector<2x32xf32>
    %93 = math.tanh %92 : vector<2x32xf32>
    %94 = vector.extract_strided_slice %54 {offsets = [0, 96], sizes = [2, 32], strides = [1, 1]} : vector<2x128xf32> to vector<2x32xf32>
    %95 = arith.negf %94 : vector<2x32xf32>
    %96 = math.exp %95 : vector<2x32xf32>
    %cst_36 = arith.constant 1.000000e+00 : f32
    %97 = vector.broadcast %cst_36 : f32 to vector<2x32xf32>
    %98 = arith.addf %97, %96 : vector<2x32xf32>
    %99 = arith.divf %97, %98 : vector<2x32xf32>
    %100 = arith.mulf %91, %40 : vector<2x32xf32>
    %101 = arith.mulf %85, %93 : vector<2x32xf32>
    %102 = arith.addf %100, %101 : vector<2x32xf32>
    %103 = math.tanh %102 : vector<2x32xf32>
    %104 = arith.mulf %99, %103 : vector<2x32xf32>
    %105 = vector.extract_strided_slice %79 {offsets = [0, 0], sizes = [1, 32], strides = [1, 1]} : vector<2x32xf32> to vector<1x32xf32>
    %c0_i32_37 = arith.constant 0 : i32
    %106 = arith.addi %c0_i32_37, %c0_i32 : i32
    %107 = arith.index_cast %106 : i32 to index
    %c0_38 = arith.constant 0 : index
    %108 = vector.load %arg20[%107, %c0_38] : memref<16x32xf32, #tpu.memory_space<vmem>>, vector<1x32xf32>
    tpu.vector_store %arg20[%107, %c0_38], %105 {strides = array<i32>} : memref<16x32xf32, #tpu.memory_space<vmem>>, vector<1x32xf32>,
    %109 = vector.extract_strided_slice %104 {offsets = [0, 0], sizes = [1, 32], strides = [1, 1]} : vector<2x32xf32> to vector<1x32xf32>
    %c7_i32_39 = arith.constant 7 : i32
    %110 = arith.subi %c7_i32_39, %c0_i32 : i32
    %c0_i32_40 = arith.constant 0 : i32
    %111 = arith.addi %c0_i32_40, %110 : i32
    %112 = arith.index_cast %111 : i32 to index
    %c0_41 = arith.constant 0 : index
    %113 = vector.load %arg21[%112, %c0_41] : memref<16x32xf32, #tpu.memory_space<vmem>>, vector<1x32xf32>
    tpu.vector_store %arg21[%112, %c0_41], %109 {strides = array<i32>} : memref<16x32xf32, #tpu.memory_space<vmem>>, vector<1x32xf32>,
    %114 = vector.extract_strided_slice %79 {offsets = [1, 0], sizes = [1, 32], strides = [1, 1]} : vector<2x32xf32> to vector<1x32xf32>
    %c8_i32 = arith.constant 8 : i32
    %115 = arith.addi %c8_i32, %c0_i32 : i32
    %116 = arith.index_cast %115 : i32 to index
    %c0_42 = arith.constant 0 : index
    %117 = vector.load %arg20[%116, %c0_42] : memref<16x32xf32, #tpu.memory_space<vmem>>, vector<1x32xf32>
    tpu.vector_store %arg20[%116, %c0_42], %114 {strides = array<i32>} : memref<16x32xf32, #tpu.memory_space<vmem>>, vector<1x32xf32>,
    %118 = vector.extract_strided_slice %104 {offsets = [1, 0], sizes = [1, 32], strides = [1, 1]} : vector<2x32xf32> to vector<1x32xf32>
    %c7_i32_43 = arith.constant 7 : i32
    %119 = arith.subi %c7_i32_43, %c0_i32 : i32
    %c8_i32_44 = arith.constant 8 : i32
    %120 = arith.addi %c8_i32_44, %119 : i32
    %121 = arith.index_cast %120 : i32 to index
    %c0_45 = arith.constant 0 : index
    %122 = vector.load %arg21[%121, %c0_45] : memref<16x32xf32, #tpu.memory_space<vmem>>, vector<1x32xf32>
    tpu.vector_store %arg21[%121, %c0_45], %118 {strides = array<i32>} : memref<16x32xf32, #tpu.memory_space<vmem>>, vector<1x32xf32>,
    %123 = tpu.concatenate %79, %104 in 1 : vector<2x32xf32>, vector<2x32xf32> -> vector<2x64xf32>
    %c1_i32 = arith.constant 1 : i32
    %cst_46 = arith.constant dense<0.000000e+00> : vector<2x256xf32>
    %124 = tpu.matmul %123, %38, %cst_46 {dimension_numbers = #tpu.dot_dimension_numbers<[1], [0], [0], [1], [0, 0, 1, 1], [], []>} : vector<2x64xf32>, vector<64x256xf32>, vector<2x256xf32> -> vector<2x256xf32>
    %125 = vector.extract_strided_slice %124 {offsets = [0, 0], sizes = [2, 128], strides = [1, 1]} : vector<2x256xf32> to vector<2x128xf32>
    %126 = arith.index_cast %c1_i32 : i32 to index
    %c0_47 = arith.constant 0 : index
    %c0_48 = arith.constant 0 : index
    %127 = vector.load %arg19[%126, %c0_47, %c0_48] : memref<8x2x256xf32, #tpu.memory_space<vmem>>, vector<1x2x256xf32>
    %128 = vector.shape_cast %127 : vector<1x2x256xf32> to vector<2x256xf32>
    %129 = vector.extract_strided_slice %128 {offsets = [0, 0], sizes = [2, 128], strides = [1, 1]} : vector<2x256xf32> to vector<2x128xf32>
    %130 = arith.addf %125, %129 : vector<2x128xf32>
    %131 = vector.extract_strided_slice %124 {offsets = [0, 128], sizes = [2, 128], strides = [1, 1]} : vector<2x256xf32> to vector<2x128xf32>
    %c7_i32_49 = arith.constant 7 : i32
    %132 = arith.subi %c7_i32_49, %c1_i32 : i32
    %133 = arith.index_cast %132 : i32 to index
    %c0_50 = arith.constant 0 : index
    %c0_51 = arith.constant 0 : index
    %134 = vector.load %arg19[%133, %c0_50, %c0_51] : memref<8x2x256xf32, #tpu.memory_space<vmem>>, vector<1x2x256xf32>
    %135 = vector.shape_cast %134 : vector<1x2x256xf32> to vector<2x256xf32>
    %136 = vector.extract_strided_slice %135 {offsets = [0, 128], sizes = [2, 128], strides = [1, 1]} : vector<2x256xf32> to vector<2x128xf32>
    %137 = arith.addf %131, %136 : vector<2x128xf32>
    %138 = vector.extract_strided_slice %130 {offsets = [0, 0], sizes = [2, 32], strides = [1, 1]} : vector<2x128xf32> to vector<2x32xf32>
    %139 = arith.negf %138 : vector<2x32xf32>
    %140 = math.exp %139 : vector<2x32xf32>
    %cst_52 = arith.constant 1.000000e+00 : f32
    %141 = vector.broadcast %cst_52 : f32 to vector<2x32xf32>
    %142 = arith.addf %141, %140 : vector<2x32xf32>
    %143 = arith.divf %141, %142 : vector<2x32xf32>
    %144 = vector.extract_strided_slice %130 {offsets = [0, 32], sizes = [2, 32], strides = [1, 1]} : vector<2x128xf32> to vector<2x32xf32>
    %145 = arith.negf %144 : vector<2x32xf32>
    %146 = math.exp %145 : vector<2x32xf32>
    %cst_53 = arith.constant 1.000000e+00 : f32
    %147 = vector.broadcast %cst_53 : f32 to vector<2x32xf32>
    %148 = arith.addf %147, %146 : vector<2x32xf32>
    %149 = arith.divf %147, %148 : vector<2x32xf32>
    %150 = vector.extract_strided_slice %130 {offsets = [0, 64], sizes = [2, 32], strides = [1, 1]} : vector<2x128xf32> to vector<2x32xf32>
    %151 = math.tanh %150 : vector<2x32xf32>
    %152 = vector.extract_strided_slice %130 {offsets = [0, 96], sizes = [2, 32], strides = [1, 1]} : vector<2x128xf32> to vector<2x32xf32>
    %153 = arith.negf %152 : vector<2x32xf32>
    %154 = math.exp %153 : vector<2x32xf32>
    %cst_54 = arith.constant 1.000000e+00 : f32
    %155 = vector.broadcast %cst_54 : f32 to vector<2x32xf32>
    %156 = arith.addf %155, %154 : vector<2x32xf32>
    %157 = arith.divf %155, %156 : vector<2x32xf32>
    %158 = arith.mulf %149, %77 : vector<2x32xf32>
    %159 = arith.mulf %143, %151 : vector<2x32xf32>
    %160 = arith.addf %158, %159 : vector<2x32xf32>
    %161 = math.tanh %160 : vector<2x32xf32>
    %162 = arith.mulf %157, %161 : vector<2x32xf32>
    %163 = vector.extract_strided_slice %137 {offsets = [0, 0], sizes = [2, 32], strides = [1, 1]} : vector<2x128xf32> to vector<2x32xf32>
    %164 = arith.negf %163 : vector<2x32xf32>
    %165 = math.exp %164 : vector<2x32xf32>
    %cst_55 = arith.constant 1.000000e+00 : f32
    %166 = vector.broadcast %cst_55 : f32 to vector<2x32xf32>
    %167 = arith.addf %166, %165 : vector<2x32xf32>
    %168 = arith.divf %166, %167 : vector<2x32xf32>
    %169 = vector.extract_strided_slice %137 {offsets = [0, 32], sizes = [2, 32], strides = [1, 1]} : vector<2x128xf32> to vector<2x32xf32>
    %170 = arith.negf %169 : vector<2x32xf32>
    %171 = math.exp %170 : vector<2x32xf32>
    %cst_56 = arith.constant 1.000000e+00 : f32
    %172 = vector.broadcast %cst_56 : f32 to vector<2x32xf32>
    %173 = arith.addf %172, %171 : vector<2x32xf32>
    %174 = arith.divf %172, %173 : vector<2x32xf32>
    %175 = vector.extract_strided_slice %137 {offsets = [0, 64], sizes = [2, 32], strides = [1, 1]} : vector<2x128xf32> to vector<2x32xf32>
    %176 = math.tanh %175 : vector<2x32xf32>
    %177 = vector.extract_strided_slice %137 {offsets = [0, 96], sizes = [2, 32], strides = [1, 1]} : vector<2x128xf32> to vector<2x32xf32>
    %178 = arith.negf %177 : vector<2x32xf32>
    %179 = math.exp %178 : vector<2x32xf32>
    %cst_57 = arith.constant 1.000000e+00 : f32
    %180 = vector.broadcast %cst_57 : f32 to vector<2x32xf32>
    %181 = arith.addf %180, %179 : vector<2x32xf32>
    %182 = arith.divf %180, %181 : vector<2x32xf32>
    %183 = arith.mulf %174, %102 : vector<2x32xf32>
    %184 = arith.mulf %168, %176 : vector<2x32xf32>
    %185 = arith.addf %183, %184 : vector<2x32xf32>
    %186 = math.tanh %185 : vector<2x32xf32>
    %187 = arith.mulf %182, %186 : vector<2x32xf32>
    %188 = vector.extract_strided_slice %162 {offsets = [0, 0], sizes = [1, 32], strides = [1, 1]} : vector<2x32xf32> to vector<1x32xf32>
    %c0_i32_58 = arith.constant 0 : i32
    %189 = arith.addi %c0_i32_58, %c1_i32 : i32
    %190 = arith.index_cast %189 : i32 to index
    %c0_59 = arith.constant 0 : index
    %191 = vector.load %arg20[%190, %c0_59] : memref<16x32xf32, #tpu.memory_space<vmem>>, vector<1x32xf32>
    tpu.vector_store %arg20[%190, %c0_59], %188 {strides = array<i32>} : memref<16x32xf32, #tpu.memory_space<vmem>>, vector<1x32xf32>,
    %192 = vector.extract_strided_slice %187 {offsets = [0, 0], sizes = [1, 32], strides = [1, 1]} : vector<2x32xf32> to vector<1x32xf32>
    %c7_i32_60 = arith.constant 7 : i32
    %193 = arith.subi %c7_i32_60, %c1_i32 : i32
    %c0_i32_61 = arith.constant 0 : i32
    %194 = arith.addi %c0_i32_61, %193 : i32
    %195 = arith.index_cast %194 : i32 to index
    %c0_62 = arith.constant 0 : index
    %196 = vector.load %arg21[%195, %c0_62] : memref<16x32xf32, #tpu.memory_space<vmem>>, vector<1x32xf32>
    tpu.vector_store %arg21[%195, %c0_62], %192 {strides = array<i32>} : memref<16x32xf32, #tpu.memory_space<vmem>>, vector<1x32xf32>,
    %197 = vector.extract_strided_slice %162 {offsets = [1, 0], sizes = [1, 32], strides = [1, 1]} : vector<2x32xf32> to vector<1x32xf32>
    %c8_i32_63 = arith.constant 8 : i32
    %198 = arith.addi %c8_i32_63, %c1_i32 : i32
    %199 = arith.index_cast %198 : i32 to index
    %c0_64 = arith.constant 0 : index
    %200 = vector.load %arg20[%199, %c0_64] : memref<16x32xf32, #tpu.memory_space<vmem>>, vector<1x32xf32>
    tpu.vector_store %arg20[%199, %c0_64], %197 {strides = array<i32>} : memref<16x32xf32, #tpu.memory_space<vmem>>, vector<1x32xf32>,
    %201 = vector.extract_strided_slice %187 {offsets = [1, 0], sizes = [1, 32], strides = [1, 1]} : vector<2x32xf32> to vector<1x32xf32>
    %c7_i32_65 = arith.constant 7 : i32
    %202 = arith.subi %c7_i32_65, %c1_i32 : i32
    %c8_i32_66 = arith.constant 8 : i32
    %203 = arith.addi %c8_i32_66, %202 : i32
    %204 = arith.index_cast %203 : i32 to index
    %c0_67 = arith.constant 0 : index
    %205 = vector.load %arg21[%204, %c0_67] : memref<16x32xf32, #tpu.memory_space<vmem>>, vector<1x32xf32>
    tpu.vector_store %arg21[%204, %c0_67], %201 {strides = array<i32>} : memref<16x32xf32, #tpu.memory_space<vmem>>, vector<1x32xf32>,
    %206 = tpu.concatenate %162, %187 in 1 : vector<2x32xf32>, vector<2x32xf32> -> vector<2x64xf32>
    %c2_i32 = arith.constant 2 : i32
    %cst_68 = arith.constant dense<0.000000e+00> : vector<2x256xf32>
    %207 = tpu.matmul %206, %38, %cst_68 {dimension_numbers = #tpu.dot_dimension_numbers<[1], [0], [0], [1], [0, 0, 1, 1], [], []>} : vector<2x64xf32>, vector<64x256xf32>, vector<2x256xf32> -> vector<2x256xf32>
    %208 = vector.extract_strided_slice %207 {offsets = [0, 0], sizes = [2, 128], strides = [1, 1]} : vector<2x256xf32> to vector<2x128xf32>
    %209 = arith.index_cast %c2_i32 : i32 to index
    %c0_69 = arith.constant 0 : index
    %c0_70 = arith.constant 0 : index
    %210 = vector.load %arg19[%209, %c0_69, %c0_70] : memref<8x2x256xf32, #tpu.memory_space<vmem>>, vector<1x2x256xf32>
    %211 = vector.shape_cast %210 : vector<1x2x256xf32> to vector<2x256xf32>
    %212 = vector.extract_strided_slice %211 {offsets = [0, 0], sizes = [2, 128], strides = [1, 1]} : vector<2x256xf32> to vector<2x128xf32>
    %213 = arith.addf %208, %212 : vector<2x128xf32>
    %214 = vector.extract_strided_slice %207 {offsets = [0, 128], sizes = [2, 128], strides = [1, 1]} : vector<2x256xf32> to vector<2x128xf32>
    %c7_i32_71 = arith.constant 7 : i32
    %215 = arith.subi %c7_i32_71, %c2_i32 : i32
    %216 = arith.index_cast %215 : i32 to index
    %c0_72 = arith.constant 0 : index
    %c0_73 = arith.constant 0 : index
    %217 = vector.load %arg19[%216, %c0_72, %c0_73] : memref<8x2x256xf32, #tpu.memory_space<vmem>>, vector<1x2x256xf32>
    %218 = vector.shape_cast %217 : vector<1x2x256xf32> to vector<2x256xf32>
    %219 = vector.extract_strided_slice %218 {offsets = [0, 128], sizes = [2, 128], strides = [1, 1]} : vector<2x256xf32> to vector<2x128xf32>
    %220 = arith.addf %214, %219 : vector<2x128xf32>
    %221 = vector.extract_strided_slice %213 {offsets = [0, 0], sizes = [2, 32], strides = [1, 1]} : vector<2x128xf32> to vector<2x32xf32>
    %222 = arith.negf %221 : vector<2x32xf32>
    %223 = math.exp %222 : vector<2x32xf32>
    %cst_74 = arith.constant 1.000000e+00 : f32
    %224 = vector.broadcast %cst_74 : f32 to vector<2x32xf32>
    %225 = arith.addf %224, %223 : vector<2x32xf32>
    %226 = arith.divf %224, %225 : vector<2x32xf32>
    %227 = vector.extract_strided_slice %213 {offsets = [0, 32], sizes = [2, 32], strides = [1, 1]} : vector<2x128xf32> to vector<2x32xf32>
    %228 = arith.negf %227 : vector<2x32xf32>
    %229 = math.exp %228 : vector<2x32xf32>
    %cst_75 = arith.constant 1.000000e+00 : f32
    %230 = vector.broadcast %cst_75 : f32 to vector<2x32xf32>
    %231 = arith.addf %230, %229 : vector<2x32xf32>
    %232 = arith.divf %230, %231 : vector<2x32xf32>
    %233 = vector.extract_strided_slice %213 {offsets = [0, 64], sizes = [2, 32], strides = [1, 1]} : vector<2x128xf32> to vector<2x32xf32>
    %234 = math.tanh %233 : vector<2x32xf32>
    %235 = vector.extract_strided_slice %213 {offsets = [0, 96], sizes = [2, 32], strides = [1, 1]} : vector<2x128xf32> to vector<2x32xf32>
    %236 = arith.negf %235 : vector<2x32xf32>
    %237 = math.exp %236 : vector<2x32xf32>
    %cst_76 = arith.constant 1.000000e+00 : f32
    %238 = vector.broadcast %cst_76 : f32 to vector<2x32xf32>
    %239 = arith.addf %238, %237 : vector<2x32xf32>
    %240 = arith.divf %238, %239 : vector<2x32xf32>
    %241 = arith.mulf %232, %160 : vector<2x32xf32>
    %242 = arith.mulf %226, %234 : vector<2x32xf32>
    %243 = arith.addf %241, %242 : vector<2x32xf32>
    %244 = math.tanh %243 : vector<2x32xf32>
    %245 = arith.mulf %240, %244 : vector<2x32xf32>
    %246 = vector.extract_strided_slice %220 {offsets = [0, 0], sizes = [2, 32], strides = [1, 1]} : vector<2x128xf32> to vector<2x32xf32>
    %247 = arith.negf %246 : vector<2x32xf32>
    %248 = math.exp %247 : vector<2x32xf32>
    %cst_77 = arith.constant 1.000000e+00 : f32
    %249 = vector.broadcast %cst_77 : f32 to vector<2x32xf32>
    %250 = arith.addf %249, %248 : vector<2x32xf32>
    %251 = arith.divf %249, %250 : vector<2x32xf32>
    %252 = vector.extract_strided_slice %220 {offsets = [0, 32], sizes = [2, 32], strides = [1, 1]} : vector<2x128xf32> to vector<2x32xf32>
    %253 = arith.negf %252 : vector<2x32xf32>
    %254 = math.exp %253 : vector<2x32xf32>
    %cst_78 = arith.constant 1.000000e+00 : f32
    %255 = vector.broadcast %cst_78 : f32 to vector<2x32xf32>
    %256 = arith.addf %255, %254 : vector<2x32xf32>
    %257 = arith.divf %255, %256 : vector<2x32xf32>
    %258 = vector.extract_strided_slice %220 {offsets = [0, 64], sizes = [2, 32], strides = [1, 1]} : vector<2x128xf32> to vector<2x32xf32>
    %259 = math.tanh %258 : vector<2x32xf32>
    %260 = vector.extract_strided_slice %220 {offsets = [0, 96], sizes = [2, 32], strides = [1, 1]} : vector<2x128xf32> to vector<2x32xf32>
    %261 = arith.negf %260 : vector<2x32xf32>
    %262 = math.exp %261 : vector<2x32xf32>
    %cst_79 = arith.constant 1.000000e+00 : f32
    %263 = vector.broadcast %cst_79 : f32 to vector<2x32xf32>
    %264 = arith.addf %263, %262 : vector<2x32xf32>
    %265 = arith.divf %263, %264 : vector<2x32xf32>
    %266 = arith.mulf %257, %185 : vector<2x32xf32>
    %267 = arith.mulf %251, %259 : vector<2x32xf32>
    %268 = arith.addf %266, %267 : vector<2x32xf32>
    %269 = math.tanh %268 : vector<2x32xf32>
    %270 = arith.mulf %265, %269 : vector<2x32xf32>
    %271 = vector.extract_strided_slice %245 {offsets = [0, 0], sizes = [1, 32], strides = [1, 1]} : vector<2x32xf32> to vector<1x32xf32>
    %c0_i32_80 = arith.constant 0 : i32
    %272 = arith.addi %c0_i32_80, %c2_i32 : i32
    %273 = arith.index_cast %272 : i32 to index
    %c0_81 = arith.constant 0 : index
    %274 = vector.load %arg20[%273, %c0_81] : memref<16x32xf32, #tpu.memory_space<vmem>>, vector<1x32xf32>
    tpu.vector_store %arg20[%273, %c0_81], %271 {strides = array<i32>} : memref<16x32xf32, #tpu.memory_space<vmem>>, vector<1x32xf32>,
    %275 = vector.extract_strided_slice %270 {offsets = [0, 0], sizes = [1, 32], strides = [1, 1]} : vector<2x32xf32> to vector<1x32xf32>
    %c7_i32_82 = arith.constant 7 : i32
    %276 = arith.subi %c7_i32_82, %c2_i32 : i32
    %c0_i32_83 = arith.constant 0 : i32
    %277 = arith.addi %c0_i32_83, %276 : i32
    %278 = arith.index_cast %277 : i32 to index
    %c0_84 = arith.constant 0 : index
    %279 = vector.load %arg21[%278, %c0_84] : memref<16x32xf32, #tpu.memory_space<vmem>>, vector<1x32xf32>
    tpu.vector_store %arg21[%278, %c0_84], %275 {strides = array<i32>} : memref<16x32xf32, #tpu.memory_space<vmem>>, vector<1x32xf32>,
    %280 = vector.extract_strided_slice %245 {offsets = [1, 0], sizes = [1, 32], strides = [1, 1]} : vector<2x32xf32> to vector<1x32xf32>
    %c8_i32_85 = arith.constant 8 : i32
    %281 = arith.addi %c8_i32_85, %c2_i32 : i32
    %282 = arith.index_cast %281 : i32 to index
    %c0_86 = arith.constant 0 : index
    %283 = vector.load %arg20[%282, %c0_86] : memref<16x32xf32, #tpu.memory_space<vmem>>, vector<1x32xf32>
    tpu.vector_store %arg20[%282, %c0_86], %280 {strides = array<i32>} : memref<16x32xf32, #tpu.memory_space<vmem>>, vector<1x32xf32>,
    %284 = vector.extract_strided_slice %270 {offsets = [1, 0], sizes = [1, 32], strides = [1, 1]} : vector<2x32xf32> to vector<1x32xf32>
    %c7_i32_87 = arith.constant 7 : i32
    %285 = arith.subi %c7_i32_87, %c2_i32 : i32
    %c8_i32_88 = arith.constant 8 : i32
    %286 = arith.addi %c8_i32_88, %285 : i32
    %287 = arith.index_cast %286 : i32 to index
    %c0_89 = arith.constant 0 : index
    %288 = vector.load %arg21[%287, %c0_89] : memref<16x32xf32, #tpu.memory_space<vmem>>, vector<1x32xf32>
    tpu.vector_store %arg21[%287, %c0_89], %284 {strides = array<i32>} : memref<16x32xf32, #tpu.memory_space<vmem>>, vector<1x32xf32>,
    %289 = tpu.concatenate %245, %270 in 1 : vector<2x32xf32>, vector<2x32xf32> -> vector<2x64xf32>
    %c3_i32 = arith.constant 3 : i32
    %cst_90 = arith.constant dense<0.000000e+00> : vector<2x256xf32>
    %290 = tpu.matmul %289, %38, %cst_90 {dimension_numbers = #tpu.dot_dimension_numbers<[1], [0], [0], [1], [0, 0, 1, 1], [], []>} : vector<2x64xf32>, vector<64x256xf32>, vector<2x256xf32> -> vector<2x256xf32>
    %291 = vector.extract_strided_slice %290 {offsets = [0, 0], sizes = [2, 128], strides = [1, 1]} : vector<2x256xf32> to vector<2x128xf32>
    %292 = arith.index_cast %c3_i32 : i32 to index
    %c0_91 = arith.constant 0 : index
    %c0_92 = arith.constant 0 : index
    %293 = vector.load %arg19[%292, %c0_91, %c0_92] : memref<8x2x256xf32, #tpu.memory_space<vmem>>, vector<1x2x256xf32>
    %294 = vector.shape_cast %293 : vector<1x2x256xf32> to vector<2x256xf32>
    %295 = vector.extract_strided_slice %294 {offsets = [0, 0], sizes = [2, 128], strides = [1, 1]} : vector<2x256xf32> to vector<2x128xf32>
    %296 = arith.addf %291, %295 : vector<2x128xf32>
    %297 = vector.extract_strided_slice %290 {offsets = [0, 128], sizes = [2, 128], strides = [1, 1]} : vector<2x256xf32> to vector<2x128xf32>
    %c7_i32_93 = arith.constant 7 : i32
    %298 = arith.subi %c7_i32_93, %c3_i32 : i32
    %299 = arith.index_cast %298 : i32 to index
    %c0_94 = arith.constant 0 : index
    %c0_95 = arith.constant 0 : index
    %300 = vector.load %arg19[%299, %c0_94, %c0_95] : memref<8x2x256xf32, #tpu.memory_space<vmem>>, vector<1x2x256xf32>
    %301 = vector.shape_cast %300 : vector<1x2x256xf32> to vector<2x256xf32>
    %302 = vector.extract_strided_slice %301 {offsets = [0, 128], sizes = [2, 128], strides = [1, 1]} : vector<2x256xf32> to vector<2x128xf32>
    %303 = arith.addf %297, %302 : vector<2x128xf32>
    %304 = vector.extract_strided_slice %296 {offsets = [0, 0], sizes = [2, 32], strides = [1, 1]} : vector<2x128xf32> to vector<2x32xf32>
    %305 = arith.negf %304 : vector<2x32xf32>
    %306 = math.exp %305 : vector<2x32xf32>
    %cst_96 = arith.constant 1.000000e+00 : f32
    %307 = vector.broadcast %cst_96 : f32 to vector<2x32xf32>
    %308 = arith.addf %307, %306 : vector<2x32xf32>
    %309 = arith.divf %307, %308 : vector<2x32xf32>
    %310 = vector.extract_strided_slice %296 {offsets = [0, 32], sizes = [2, 32], strides = [1, 1]} : vector<2x128xf32> to vector<2x32xf32>
    %311 = arith.negf %310 : vector<2x32xf32>
    %312 = math.exp %311 : vector<2x32xf32>
    %cst_97 = arith.constant 1.000000e+00 : f32
    %313 = vector.broadcast %cst_97 : f32 to vector<2x32xf32>
    %314 = arith.addf %313, %312 : vector<2x32xf32>
    %315 = arith.divf %313, %314 : vector<2x32xf32>
    %316 = vector.extract_strided_slice %296 {offsets = [0, 64], sizes = [2, 32], strides = [1, 1]} : vector<2x128xf32> to vector<2x32xf32>
    %317 = math.tanh %316 : vector<2x32xf32>
    %318 = vector.extract_strided_slice %296 {offsets = [0, 96], sizes = [2, 32], strides = [1, 1]} : vector<2x128xf32> to vector<2x32xf32>
    %319 = arith.negf %318 : vector<2x32xf32>
    %320 = math.exp %319 : vector<2x32xf32>
    %cst_98 = arith.constant 1.000000e+00 : f32
    %321 = vector.broadcast %cst_98 : f32 to vector<2x32xf32>
    %322 = arith.addf %321, %320 : vector<2x32xf32>
    %323 = arith.divf %321, %322 : vector<2x32xf32>
    %324 = arith.mulf %315, %243 : vector<2x32xf32>
    %325 = arith.mulf %309, %317 : vector<2x32xf32>
    %326 = arith.addf %324, %325 : vector<2x32xf32>
    %327 = math.tanh %326 : vector<2x32xf32>
    %328 = arith.mulf %323, %327 : vector<2x32xf32>
    %329 = vector.extract_strided_slice %303 {offsets = [0, 0], sizes = [2, 32], strides = [1, 1]} : vector<2x128xf32> to vector<2x32xf32>
    %330 = arith.negf %329 : vector<2x32xf32>
    %331 = math.exp %330 : vector<2x32xf32>
    %cst_99 = arith.constant 1.000000e+00 : f32
    %332 = vector.broadcast %cst_99 : f32 to vector<2x32xf32>
    %333 = arith.addf %332, %331 : vector<2x32xf32>
    %334 = arith.divf %332, %333 : vector<2x32xf32>
    %335 = vector.extract_strided_slice %303 {offsets = [0, 32], sizes = [2, 32], strides = [1, 1]} : vector<2x128xf32> to vector<2x32xf32>
    %336 = arith.negf %335 : vector<2x32xf32>
    %337 = math.exp %336 : vector<2x32xf32>
    %cst_100 = arith.constant 1.000000e+00 : f32
    %338 = vector.broadcast %cst_100 : f32 to vector<2x32xf32>
    %339 = arith.addf %338, %337 : vector<2x32xf32>
    %340 = arith.divf %338, %339 : vector<2x32xf32>
    %341 = vector.extract_strided_slice %303 {offsets = [0, 64], sizes = [2, 32], strides = [1, 1]} : vector<2x128xf32> to vector<2x32xf32>
    %342 = math.tanh %341 : vector<2x32xf32>
    %343 = vector.extract_strided_slice %303 {offsets = [0, 96], sizes = [2, 32], strides = [1, 1]} : vector<2x128xf32> to vector<2x32xf32>
    %344 = arith.negf %343 : vector<2x32xf32>
    %345 = math.exp %344 : vector<2x32xf32>
    %cst_101 = arith.constant 1.000000e+00 : f32
    %346 = vector.broadcast %cst_101 : f32 to vector<2x32xf32>
    %347 = arith.addf %346, %345 : vector<2x32xf32>
    %348 = arith.divf %346, %347 : vector<2x32xf32>
    %349 = arith.mulf %340, %268 : vector<2x32xf32>
    %350 = arith.mulf %334, %342 : vector<2x32xf32>
    %351 = arith.addf %349, %350 : vector<2x32xf32>
    %352 = math.tanh %351 : vector<2x32xf32>
    %353 = arith.mulf %348, %352 : vector<2x32xf32>
    %354 = vector.extract_strided_slice %328 {offsets = [0, 0], sizes = [1, 32], strides = [1, 1]} : vector<2x32xf32> to vector<1x32xf32>
    %c0_i32_102 = arith.constant 0 : i32
    %355 = arith.addi %c0_i32_102, %c3_i32 : i32
    %356 = arith.index_cast %355 : i32 to index
    %c0_103 = arith.constant 0 : index
    %357 = vector.load %arg20[%356, %c0_103] : memref<16x32xf32, #tpu.memory_space<vmem>>, vector<1x32xf32>
    tpu.vector_store %arg20[%356, %c0_103], %354 {strides = array<i32>} : memref<16x32xf32, #tpu.memory_space<vmem>>, vector<1x32xf32>,
    %358 = vector.extract_strided_slice %353 {offsets = [0, 0], sizes = [1, 32], strides = [1, 1]} : vector<2x32xf32> to vector<1x32xf32>
    %c7_i32_104 = arith.constant 7 : i32
    %359 = arith.subi %c7_i32_104, %c3_i32 : i32
    %c0_i32_105 = arith.constant 0 : i32
    %360 = arith.addi %c0_i32_105, %359 : i32
    %361 = arith.index_cast %360 : i32 to index
    %c0_106 = arith.constant 0 : index
    %362 = vector.load %arg21[%361, %c0_106] : memref<16x32xf32, #tpu.memory_space<vmem>>, vector<1x32xf32>
    tpu.vector_store %arg21[%361, %c0_106], %358 {strides = array<i32>} : memref<16x32xf32, #tpu.memory_space<vmem>>, vector<1x32xf32>,
    %363 = vector.extract_strided_slice %328 {offsets = [1, 0], sizes = [1, 32], strides = [1, 1]} : vector<2x32xf32> to vector<1x32xf32>
    %c8_i32_107 = arith.constant 8 : i32
    %364 = arith.addi %c8_i32_107, %c3_i32 : i32
    %365 = arith.index_cast %364 : i32 to index
    %c0_108 = arith.constant 0 : index
    %366 = vector.load %arg20[%365, %c0_108] : memref<16x32xf32, #tpu.memory_space<vmem>>, vector<1x32xf32>
    tpu.vector_store %arg20[%365, %c0_108], %363 {strides = array<i32>} : memref<16x32xf32, #tpu.memory_space<vmem>>, vector<1x32xf32>,
    %367 = vector.extract_strided_slice %353 {offsets = [1, 0], sizes = [1, 32], strides = [1, 1]} : vector<2x32xf32> to vector<1x32xf32>
    %c7_i32_109 = arith.constant 7 : i32
    %368 = arith.subi %c7_i32_109, %c3_i32 : i32
    %c8_i32_110 = arith.constant 8 : i32
    %369 = arith.addi %c8_i32_110, %368 : i32
    %370 = arith.index_cast %369 : i32 to index
    %c0_111 = arith.constant 0 : index
    %371 = vector.load %arg21[%370, %c0_111] : memref<16x32xf32, #tpu.memory_space<vmem>>, vector<1x32xf32>
    tpu.vector_store %arg21[%370, %c0_111], %367 {strides = array<i32>} : memref<16x32xf32, #tpu.memory_space<vmem>>, vector<1x32xf32>,
    %372 = tpu.concatenate %328, %353 in 1 : vector<2x32xf32>, vector<2x32xf32> -> vector<2x64xf32>
    %c4_i32 = arith.constant 4 : i32
    %cst_112 = arith.constant dense<0.000000e+00> : vector<2x256xf32>
    %373 = tpu.matmul %372, %38, %cst_112 {dimension_numbers = #tpu.dot_dimension_numbers<[1], [0], [0], [1], [0, 0, 1, 1], [], []>} : vector<2x64xf32>, vector<64x256xf32>, vector<2x256xf32> -> vector<2x256xf32>
    %374 = vector.extract_strided_slice %373 {offsets = [0, 0], sizes = [2, 128], strides = [1, 1]} : vector<2x256xf32> to vector<2x128xf32>
    %375 = arith.index_cast %c4_i32 : i32 to index
    %c0_113 = arith.constant 0 : index
    %c0_114 = arith.constant 0 : index
    %376 = vector.load %arg19[%375, %c0_113, %c0_114] : memref<8x2x256xf32, #tpu.memory_space<vmem>>, vector<1x2x256xf32>
    %377 = vector.shape_cast %376 : vector<1x2x256xf32> to vector<2x256xf32>
    %378 = vector.extract_strided_slice %377 {offsets = [0, 0], sizes = [2, 128], strides = [1, 1]} : vector<2x256xf32> to vector<2x128xf32>
    %379 = arith.addf %374, %378 : vector<2x128xf32>
    %380 = vector.extract_strided_slice %373 {offsets = [0, 128], sizes = [2, 128], strides = [1, 1]} : vector<2x256xf32> to vector<2x128xf32>
    %c7_i32_115 = arith.constant 7 : i32
    %381 = arith.subi %c7_i32_115, %c4_i32 : i32
    %382 = arith.index_cast %381 : i32 to index
    %c0_116 = arith.constant 0 : index
    %c0_117 = arith.constant 0 : index
    %383 = vector.load %arg19[%382, %c0_116, %c0_117] : memref<8x2x256xf32, #tpu.memory_space<vmem>>, vector<1x2x256xf32>
    %384 = vector.shape_cast %383 : vector<1x2x256xf32> to vector<2x256xf32>
    %385 = vector.extract_strided_slice %384 {offsets = [0, 128], sizes = [2, 128], strides = [1, 1]} : vector<2x256xf32> to vector<2x128xf32>
    %386 = arith.addf %380, %385 : vector<2x128xf32>
    %387 = vector.extract_strided_slice %379 {offsets = [0, 0], sizes = [2, 32], strides = [1, 1]} : vector<2x128xf32> to vector<2x32xf32>
    %388 = arith.negf %387 : vector<2x32xf32>
    %389 = math.exp %388 : vector<2x32xf32>
    %cst_118 = arith.constant 1.000000e+00 : f32
    %390 = vector.broadcast %cst_118 : f32 to vector<2x32xf32>
    %391 = arith.addf %390, %389 : vector<2x32xf32>
    %392 = arith.divf %390, %391 : vector<2x32xf32>
    %393 = vector.extract_strided_slice %379 {offsets = [0, 32], sizes = [2, 32], strides = [1, 1]} : vector<2x128xf32> to vector<2x32xf32>
    %394 = arith.negf %393 : vector<2x32xf32>
    %395 = math.exp %394 : vector<2x32xf32>
    %cst_119 = arith.constant 1.000000e+00 : f32
    %396 = vector.broadcast %cst_119 : f32 to vector<2x32xf32>
    %397 = arith.addf %396, %395 : vector<2x32xf32>
    %398 = arith.divf %396, %397 : vector<2x32xf32>
    %399 = vector.extract_strided_slice %379 {offsets = [0, 64], sizes = [2, 32], strides = [1, 1]} : vector<2x128xf32> to vector<2x32xf32>
    %400 = math.tanh %399 : vector<2x32xf32>
    %401 = vector.extract_strided_slice %379 {offsets = [0, 96], sizes = [2, 32], strides = [1, 1]} : vector<2x128xf32> to vector<2x32xf32>
    %402 = arith.negf %401 : vector<2x32xf32>
    %403 = math.exp %402 : vector<2x32xf32>
    %cst_120 = arith.constant 1.000000e+00 : f32
    %404 = vector.broadcast %cst_120 : f32 to vector<2x32xf32>
    %405 = arith.addf %404, %403 : vector<2x32xf32>
    %406 = arith.divf %404, %405 : vector<2x32xf32>
    %407 = arith.mulf %398, %326 : vector<2x32xf32>
    %408 = arith.mulf %392, %400 : vector<2x32xf32>
    %409 = arith.addf %407, %408 : vector<2x32xf32>
    %410 = math.tanh %409 : vector<2x32xf32>
    %411 = arith.mulf %406, %410 : vector<2x32xf32>
    %412 = vector.extract_strided_slice %386 {offsets = [0, 0], sizes = [2, 32], strides = [1, 1]} : vector<2x128xf32> to vector<2x32xf32>
    %413 = arith.negf %412 : vector<2x32xf32>
    %414 = math.exp %413 : vector<2x32xf32>
    %cst_121 = arith.constant 1.000000e+00 : f32
    %415 = vector.broadcast %cst_121 : f32 to vector<2x32xf32>
    %416 = arith.addf %415, %414 : vector<2x32xf32>
    %417 = arith.divf %415, %416 : vector<2x32xf32>
    %418 = vector.extract_strided_slice %386 {offsets = [0, 32], sizes = [2, 32], strides = [1, 1]} : vector<2x128xf32> to vector<2x32xf32>
    %419 = arith.negf %418 : vector<2x32xf32>
    %420 = math.exp %419 : vector<2x32xf32>
    %cst_122 = arith.constant 1.000000e+00 : f32
    %421 = vector.broadcast %cst_122 : f32 to vector<2x32xf32>
    %422 = arith.addf %421, %420 : vector<2x32xf32>
    %423 = arith.divf %421, %422 : vector<2x32xf32>
    %424 = vector.extract_strided_slice %386 {offsets = [0, 64], sizes = [2, 32], strides = [1, 1]} : vector<2x128xf32> to vector<2x32xf32>
    %425 = math.tanh %424 : vector<2x32xf32>
    %426 = vector.extract_strided_slice %386 {offsets = [0, 96], sizes = [2, 32], strides = [1, 1]} : vector<2x128xf32> to vector<2x32xf32>
    %427 = arith.negf %426 : vector<2x32xf32>
    %428 = math.exp %427 : vector<2x32xf32>
    %cst_123 = arith.constant 1.000000e+00 : f32
    %429 = vector.broadcast %cst_123 : f32 to vector<2x32xf32>
    %430 = arith.addf %429, %428 : vector<2x32xf32>
    %431 = arith.divf %429, %430 : vector<2x32xf32>
    %432 = arith.mulf %423, %351 : vector<2x32xf32>
    %433 = arith.mulf %417, %425 : vector<2x32xf32>
    %434 = arith.addf %432, %433 : vector<2x32xf32>
    %435 = math.tanh %434 : vector<2x32xf32>
    %436 = arith.mulf %431, %435 : vector<2x32xf32>
    %437 = vector.extract_strided_slice %411 {offsets = [0, 0], sizes = [1, 32], strides = [1, 1]} : vector<2x32xf32> to vector<1x32xf32>
    %c0_i32_124 = arith.constant 0 : i32
    %438 = arith.addi %c0_i32_124, %c4_i32 : i32
    %439 = arith.index_cast %438 : i32 to index
    %c0_125 = arith.constant 0 : index
    %440 = vector.load %arg20[%439, %c0_125] : memref<16x32xf32, #tpu.memory_space<vmem>>, vector<1x32xf32>
    tpu.vector_store %arg20[%439, %c0_125], %437 {strides = array<i32>} : memref<16x32xf32, #tpu.memory_space<vmem>>, vector<1x32xf32>,
    %441 = vector.extract_strided_slice %436 {offsets = [0, 0], sizes = [1, 32], strides = [1, 1]} : vector<2x32xf32> to vector<1x32xf32>
    %c7_i32_126 = arith.constant 7 : i32
    %442 = arith.subi %c7_i32_126, %c4_i32 : i32
    %c0_i32_127 = arith.constant 0 : i32
    %443 = arith.addi %c0_i32_127, %442 : i32
    %444 = arith.index_cast %443 : i32 to index
    %c0_128 = arith.constant 0 : index
    %445 = vector.load %arg21[%444, %c0_128] : memref<16x32xf32, #tpu.memory_space<vmem>>, vector<1x32xf32>
    tpu.vector_store %arg21[%444, %c0_128], %441 {strides = array<i32>} : memref<16x32xf32, #tpu.memory_space<vmem>>, vector<1x32xf32>,
    %446 = vector.extract_strided_slice %411 {offsets = [1, 0], sizes = [1, 32], strides = [1, 1]} : vector<2x32xf32> to vector<1x32xf32>
    %c8_i32_129 = arith.constant 8 : i32
    %447 = arith.addi %c8_i32_129, %c4_i32 : i32
    %448 = arith.index_cast %447 : i32 to index
    %c0_130 = arith.constant 0 : index
    %449 = vector.load %arg20[%448, %c0_130] : memref<16x32xf32, #tpu.memory_space<vmem>>, vector<1x32xf32>
    tpu.vector_store %arg20[%448, %c0_130], %446 {strides = array<i32>} : memref<16x32xf32, #tpu.memory_space<vmem>>, vector<1x32xf32>,
    %450 = vector.extract_strided_slice %436 {offsets = [1, 0], sizes = [1, 32], strides = [1, 1]} : vector<2x32xf32> to vector<1x32xf32>
    %c7_i32_131 = arith.constant 7 : i32
    %451 = arith.subi %c7_i32_131, %c4_i32 : i32
    %c8_i32_132 = arith.constant 8 : i32
    %452 = arith.addi %c8_i32_132, %451 : i32
    %453 = arith.index_cast %452 : i32 to index
    %c0_133 = arith.constant 0 : index
    %454 = vector.load %arg21[%453, %c0_133] : memref<16x32xf32, #tpu.memory_space<vmem>>, vector<1x32xf32>
    tpu.vector_store %arg21[%453, %c0_133], %450 {strides = array<i32>} : memref<16x32xf32, #tpu.memory_space<vmem>>, vector<1x32xf32>,
    %455 = tpu.concatenate %411, %436 in 1 : vector<2x32xf32>, vector<2x32xf32> -> vector<2x64xf32>
    %c5_i32 = arith.constant 5 : i32
    %cst_134 = arith.constant dense<0.000000e+00> : vector<2x256xf32>
    %456 = tpu.matmul %455, %38, %cst_134 {dimension_numbers = #tpu.dot_dimension_numbers<[1], [0], [0], [1], [0, 0, 1, 1], [], []>} : vector<2x64xf32>, vector<64x256xf32>, vector<2x256xf32> -> vector<2x256xf32>
    %457 = vector.extract_strided_slice %456 {offsets = [0, 0], sizes = [2, 128], strides = [1, 1]} : vector<2x256xf32> to vector<2x128xf32>
    %458 = arith.index_cast %c5_i32 : i32 to index
    %c0_135 = arith.constant 0 : index
    %c0_136 = arith.constant 0 : index
    %459 = vector.load %arg19[%458, %c0_135, %c0_136] : memref<8x2x256xf32, #tpu.memory_space<vmem>>, vector<1x2x256xf32>
    %460 = vector.shape_cast %459 : vector<1x2x256xf32> to vector<2x256xf32>
    %461 = vector.extract_strided_slice %460 {offsets = [0, 0], sizes = [2, 128], strides = [1, 1]} : vector<2x256xf32> to vector<2x128xf32>
    %462 = arith.addf %457, %461 : vector<2x128xf32>
    %463 = vector.extract_strided_slice %456 {offsets = [0, 128], sizes = [2, 128], strides = [1, 1]} : vector<2x256xf32> to vector<2x128xf32>
    %c7_i32_137 = arith.constant 7 : i32
    %464 = arith.subi %c7_i32_137, %c5_i32 : i32
    %465 = arith.index_cast %464 : i32 to index
    %c0_138 = arith.constant 0 : index
    %c0_139 = arith.constant 0 : index
    %466 = vector.load %arg19[%465, %c0_138, %c0_139] : memref<8x2x256xf32, #tpu.memory_space<vmem>>, vector<1x2x256xf32>
    %467 = vector.shape_cast %466 : vector<1x2x256xf32> to vector<2x256xf32>
    %468 = vector.extract_strided_slice %467 {offsets = [0, 128], sizes = [2, 128], strides = [1, 1]} : vector<2x256xf32> to vector<2x128xf32>
    %469 = arith.addf %463, %468 : vector<2x128xf32>
    %470 = vector.extract_strided_slice %462 {offsets = [0, 0], sizes = [2, 32], strides = [1, 1]} : vector<2x128xf32> to vector<2x32xf32>
    %471 = arith.negf %470 : vector<2x32xf32>
    %472 = math.exp %471 : vector<2x32xf32>
    %cst_140 = arith.constant 1.000000e+00 : f32
    %473 = vector.broadcast %cst_140 : f32 to vector<2x32xf32>
    %474 = arith.addf %473, %472 : vector<2x32xf32>
    %475 = arith.divf %473, %474 : vector<2x32xf32>
    %476 = vector.extract_strided_slice %462 {offsets = [0, 32], sizes = [2, 32], strides = [1, 1]} : vector<2x128xf32> to vector<2x32xf32>
    %477 = arith.negf %476 : vector<2x32xf32>
    %478 = math.exp %477 : vector<2x32xf32>
    %cst_141 = arith.constant 1.000000e+00 : f32
    %479 = vector.broadcast %cst_141 : f32 to vector<2x32xf32>
    %480 = arith.addf %479, %478 : vector<2x32xf32>
    %481 = arith.divf %479, %480 : vector<2x32xf32>
    %482 = vector.extract_strided_slice %462 {offsets = [0, 64], sizes = [2, 32], strides = [1, 1]} : vector<2x128xf32> to vector<2x32xf32>
    %483 = math.tanh %482 : vector<2x32xf32>
    %484 = vector.extract_strided_slice %462 {offsets = [0, 96], sizes = [2, 32], strides = [1, 1]} : vector<2x128xf32> to vector<2x32xf32>
    %485 = arith.negf %484 : vector<2x32xf32>
    %486 = math.exp %485 : vector<2x32xf32>
    %cst_142 = arith.constant 1.000000e+00 : f32
    %487 = vector.broadcast %cst_142 : f32 to vector<2x32xf32>
    %488 = arith.addf %487, %486 : vector<2x32xf32>
    %489 = arith.divf %487, %488 : vector<2x32xf32>
    %490 = arith.mulf %481, %409 : vector<2x32xf32>
    %491 = arith.mulf %475, %483 : vector<2x32xf32>
    %492 = arith.addf %490, %491 : vector<2x32xf32>
    %493 = math.tanh %492 : vector<2x32xf32>
    %494 = arith.mulf %489, %493 : vector<2x32xf32>
    %495 = vector.extract_strided_slice %469 {offsets = [0, 0], sizes = [2, 32], strides = [1, 1]} : vector<2x128xf32> to vector<2x32xf32>
    %496 = arith.negf %495 : vector<2x32xf32>
    %497 = math.exp %496 : vector<2x32xf32>
    %cst_143 = arith.constant 1.000000e+00 : f32
    %498 = vector.broadcast %cst_143 : f32 to vector<2x32xf32>
    %499 = arith.addf %498, %497 : vector<2x32xf32>
    %500 = arith.divf %498, %499 : vector<2x32xf32>
    %501 = vector.extract_strided_slice %469 {offsets = [0, 32], sizes = [2, 32], strides = [1, 1]} : vector<2x128xf32> to vector<2x32xf32>
    %502 = arith.negf %501 : vector<2x32xf32>
    %503 = math.exp %502 : vector<2x32xf32>
    %cst_144 = arith.constant 1.000000e+00 : f32
    %504 = vector.broadcast %cst_144 : f32 to vector<2x32xf32>
    %505 = arith.addf %504, %503 : vector<2x32xf32>
    %506 = arith.divf %504, %505 : vector<2x32xf32>
    %507 = vector.extract_strided_slice %469 {offsets = [0, 64], sizes = [2, 32], strides = [1, 1]} : vector<2x128xf32> to vector<2x32xf32>
    %508 = math.tanh %507 : vector<2x32xf32>
    %509 = vector.extract_strided_slice %469 {offsets = [0, 96], sizes = [2, 32], strides = [1, 1]} : vector<2x128xf32> to vector<2x32xf32>
    %510 = arith.negf %509 : vector<2x32xf32>
    %511 = math.exp %510 : vector<2x32xf32>
    %cst_145 = arith.constant 1.000000e+00 : f32
    %512 = vector.broadcast %cst_145 : f32 to vector<2x32xf32>
    %513 = arith.addf %512, %511 : vector<2x32xf32>
    %514 = arith.divf %512, %513 : vector<2x32xf32>
    %515 = arith.mulf %506, %434 : vector<2x32xf32>
    %516 = arith.mulf %500, %508 : vector<2x32xf32>
    %517 = arith.addf %515, %516 : vector<2x32xf32>
    %518 = math.tanh %517 : vector<2x32xf32>
    %519 = arith.mulf %514, %518 : vector<2x32xf32>
    %520 = vector.extract_strided_slice %494 {offsets = [0, 0], sizes = [1, 32], strides = [1, 1]} : vector<2x32xf32> to vector<1x32xf32>
    %c0_i32_146 = arith.constant 0 : i32
    %521 = arith.addi %c0_i32_146, %c5_i32 : i32
    %522 = arith.index_cast %521 : i32 to index
    %c0_147 = arith.constant 0 : index
    %523 = vector.load %arg20[%522, %c0_147] : memref<16x32xf32, #tpu.memory_space<vmem>>, vector<1x32xf32>
    tpu.vector_store %arg20[%522, %c0_147], %520 {strides = array<i32>} : memref<16x32xf32, #tpu.memory_space<vmem>>, vector<1x32xf32>,
    %524 = vector.extract_strided_slice %519 {offsets = [0, 0], sizes = [1, 32], strides = [1, 1]} : vector<2x32xf32> to vector<1x32xf32>
    %c7_i32_148 = arith.constant 7 : i32
    %525 = arith.subi %c7_i32_148, %c5_i32 : i32
    %c0_i32_149 = arith.constant 0 : i32
    %526 = arith.addi %c0_i32_149, %525 : i32
    %527 = arith.index_cast %526 : i32 to index
    %c0_150 = arith.constant 0 : index
    %528 = vector.load %arg21[%527, %c0_150] : memref<16x32xf32, #tpu.memory_space<vmem>>, vector<1x32xf32>
    tpu.vector_store %arg21[%527, %c0_150], %524 {strides = array<i32>} : memref<16x32xf32, #tpu.memory_space<vmem>>, vector<1x32xf32>,
    %529 = vector.extract_strided_slice %494 {offsets = [1, 0], sizes = [1, 32], strides = [1, 1]} : vector<2x32xf32> to vector<1x32xf32>
    %c8_i32_151 = arith.constant 8 : i32
    %530 = arith.addi %c8_i32_151, %c5_i32 : i32
    %531 = arith.index_cast %530 : i32 to index
    %c0_152 = arith.constant 0 : index
    %532 = vector.load %arg20[%531, %c0_152] : memref<16x32xf32, #tpu.memory_space<vmem>>, vector<1x32xf32>
    tpu.vector_store %arg20[%531, %c0_152], %529 {strides = array<i32>} : memref<16x32xf32, #tpu.memory_space<vmem>>, vector<1x32xf32>,
    %533 = vector.extract_strided_slice %519 {offsets = [1, 0], sizes = [1, 32], strides = [1, 1]} : vector<2x32xf32> to vector<1x32xf32>
    %c7_i32_153 = arith.constant 7 : i32
    %534 = arith.subi %c7_i32_153, %c5_i32 : i32
    %c8_i32_154 = arith.constant 8 : i32
    %535 = arith.addi %c8_i32_154, %534 : i32
    %536 = arith.index_cast %535 : i32 to index
    %c0_155 = arith.constant 0 : index
    %537 = vector.load %arg21[%536, %c0_155] : memref<16x32xf32, #tpu.memory_space<vmem>>, vector<1x32xf32>
    tpu.vector_store %arg21[%536, %c0_155], %533 {strides = array<i32>} : memref<16x32xf32, #tpu.memory_space<vmem>>, vector<1x32xf32>,
    %538 = tpu.concatenate %494, %519 in 1 : vector<2x32xf32>, vector<2x32xf32> -> vector<2x64xf32>
    %c6_i32 = arith.constant 6 : i32
    %cst_156 = arith.constant dense<0.000000e+00> : vector<2x256xf32>
    %539 = tpu.matmul %538, %38, %cst_156 {dimension_numbers = #tpu.dot_dimension_numbers<[1], [0], [0], [1], [0, 0, 1, 1], [], []>} : vector<2x64xf32>, vector<64x256xf32>, vector<2x256xf32> -> vector<2x256xf32>
    %540 = vector.extract_strided_slice %539 {offsets = [0, 0], sizes = [2, 128], strides = [1, 1]} : vector<2x256xf32> to vector<2x128xf32>
    %541 = arith.index_cast %c6_i32 : i32 to index
    %c0_157 = arith.constant 0 : index
    %c0_158 = arith.constant 0 : index
    %542 = vector.load %arg19[%541, %c0_157, %c0_158] : memref<8x2x256xf32, #tpu.memory_space<vmem>>, vector<1x2x256xf32>
    %543 = vector.shape_cast %542 : vector<1x2x256xf32> to vector<2x256xf32>
    %544 = vector.extract_strided_slice %543 {offsets = [0, 0], sizes = [2, 128], strides = [1, 1]} : vector<2x256xf32> to vector<2x128xf32>
    %545 = arith.addf %540, %544 : vector<2x128xf32>
    %546 = vector.extract_strided_slice %539 {offsets = [0, 128], sizes = [2, 128], strides = [1, 1]} : vector<2x256xf32> to vector<2x128xf32>
    %c7_i32_159 = arith.constant 7 : i32
    %547 = arith.subi %c7_i32_159, %c6_i32 : i32
    %548 = arith.index_cast %547 : i32 to index
    %c0_160 = arith.constant 0 : index
    %c0_161 = arith.constant 0 : index
    %549 = vector.load %arg19[%548, %c0_160, %c0_161] : memref<8x2x256xf32, #tpu.memory_space<vmem>>, vector<1x2x256xf32>
    %550 = vector.shape_cast %549 : vector<1x2x256xf32> to vector<2x256xf32>
    %551 = vector.extract_strided_slice %550 {offsets = [0, 128], sizes = [2, 128], strides = [1, 1]} : vector<2x256xf32> to vector<2x128xf32>
    %552 = arith.addf %546, %551 : vector<2x128xf32>
    %553 = vector.extract_strided_slice %545 {offsets = [0, 0], sizes = [2, 32], strides = [1, 1]} : vector<2x128xf32> to vector<2x32xf32>
    %554 = arith.negf %553 : vector<2x32xf32>
    %555 = math.exp %554 : vector<2x32xf32>
    %cst_162 = arith.constant 1.000000e+00 : f32
    %556 = vector.broadcast %cst_162 : f32 to vector<2x32xf32>
    %557 = arith.addf %556, %555 : vector<2x32xf32>
    %558 = arith.divf %556, %557 : vector<2x32xf32>
    %559 = vector.extract_strided_slice %545 {offsets = [0, 32], sizes = [2, 32], strides = [1, 1]} : vector<2x128xf32> to vector<2x32xf32>
    %560 = arith.negf %559 : vector<2x32xf32>
    %561 = math.exp %560 : vector<2x32xf32>
    %cst_163 = arith.constant 1.000000e+00 : f32
    %562 = vector.broadcast %cst_163 : f32 to vector<2x32xf32>
    %563 = arith.addf %562, %561 : vector<2x32xf32>
    %564 = arith.divf %562, %563 : vector<2x32xf32>
    %565 = vector.extract_strided_slice %545 {offsets = [0, 64], sizes = [2, 32], strides = [1, 1]} : vector<2x128xf32> to vector<2x32xf32>
    %566 = math.tanh %565 : vector<2x32xf32>
    %567 = vector.extract_strided_slice %545 {offsets = [0, 96], sizes = [2, 32], strides = [1, 1]} : vector<2x128xf32> to vector<2x32xf32>
    %568 = arith.negf %567 : vector<2x32xf32>
    %569 = math.exp %568 : vector<2x32xf32>
    %cst_164 = arith.constant 1.000000e+00 : f32
    %570 = vector.broadcast %cst_164 : f32 to vector<2x32xf32>
    %571 = arith.addf %570, %569 : vector<2x32xf32>
    %572 = arith.divf %570, %571 : vector<2x32xf32>
    %573 = arith.mulf %564, %492 : vector<2x32xf32>
    %574 = arith.mulf %558, %566 : vector<2x32xf32>
    %575 = arith.addf %573, %574 : vector<2x32xf32>
    %576 = math.tanh %575 : vector<2x32xf32>
    %577 = arith.mulf %572, %576 : vector<2x32xf32>
    %578 = vector.extract_strided_slice %552 {offsets = [0, 0], sizes = [2, 32], strides = [1, 1]} : vector<2x128xf32> to vector<2x32xf32>
    %579 = arith.negf %578 : vector<2x32xf32>
    %580 = math.exp %579 : vector<2x32xf32>
    %cst_165 = arith.constant 1.000000e+00 : f32
    %581 = vector.broadcast %cst_165 : f32 to vector<2x32xf32>
    %582 = arith.addf %581, %580 : vector<2x32xf32>
    %583 = arith.divf %581, %582 : vector<2x32xf32>
    %584 = vector.extract_strided_slice %552 {offsets = [0, 32], sizes = [2, 32], strides = [1, 1]} : vector<2x128xf32> to vector<2x32xf32>
    %585 = arith.negf %584 : vector<2x32xf32>
    %586 = math.exp %585 : vector<2x32xf32>
    %cst_166 = arith.constant 1.000000e+00 : f32
    %587 = vector.broadcast %cst_166 : f32 to vector<2x32xf32>
    %588 = arith.addf %587, %586 : vector<2x32xf32>
    %589 = arith.divf %587, %588 : vector<2x32xf32>
    %590 = vector.extract_strided_slice %552 {offsets = [0, 64], sizes = [2, 32], strides = [1, 1]} : vector<2x128xf32> to vector<2x32xf32>
    %591 = math.tanh %590 : vector<2x32xf32>
    %592 = vector.extract_strided_slice %552 {offsets = [0, 96], sizes = [2, 32], strides = [1, 1]} : vector<2x128xf32> to vector<2x32xf32>
    %593 = arith.negf %592 : vector<2x32xf32>
    %594 = math.exp %593 : vector<2x32xf32>
    %cst_167 = arith.constant 1.000000e+00 : f32
    %595 = vector.broadcast %cst_167 : f32 to vector<2x32xf32>
    %596 = arith.addf %595, %594 : vector<2x32xf32>
    %597 = arith.divf %595, %596 : vector<2x32xf32>
    %598 = arith.mulf %589, %517 : vector<2x32xf32>
    %599 = arith.mulf %583, %591 : vector<2x32xf32>
    %600 = arith.addf %598, %599 : vector<2x32xf32>
    %601 = math.tanh %600 : vector<2x32xf32>
    %602 = arith.mulf %597, %601 : vector<2x32xf32>
    %603 = vector.extract_strided_slice %577 {offsets = [0, 0], sizes = [1, 32], strides = [1, 1]} : vector<2x32xf32> to vector<1x32xf32>
    %c0_i32_168 = arith.constant 0 : i32
    %604 = arith.addi %c0_i32_168, %c6_i32 : i32
    %605 = arith.index_cast %604 : i32 to index
    %c0_169 = arith.constant 0 : index
    %606 = vector.load %arg20[%605, %c0_169] : memref<16x32xf32, #tpu.memory_space<vmem>>, vector<1x32xf32>
    tpu.vector_store %arg20[%605, %c0_169], %603 {strides = array<i32>} : memref<16x32xf32, #tpu.memory_space<vmem>>, vector<1x32xf32>,
    %607 = vector.extract_strided_slice %602 {offsets = [0, 0], sizes = [1, 32], strides = [1, 1]} : vector<2x32xf32> to vector<1x32xf32>
    %c7_i32_170 = arith.constant 7 : i32
    %608 = arith.subi %c7_i32_170, %c6_i32 : i32
    %c0_i32_171 = arith.constant 0 : i32
    %609 = arith.addi %c0_i32_171, %608 : i32
    %610 = arith.index_cast %609 : i32 to index
    %c0_172 = arith.constant 0 : index
    %611 = vector.load %arg21[%610, %c0_172] : memref<16x32xf32, #tpu.memory_space<vmem>>, vector<1x32xf32>
    tpu.vector_store %arg21[%610, %c0_172], %607 {strides = array<i32>} : memref<16x32xf32, #tpu.memory_space<vmem>>, vector<1x32xf32>,
    %612 = vector.extract_strided_slice %577 {offsets = [1, 0], sizes = [1, 32], strides = [1, 1]} : vector<2x32xf32> to vector<1x32xf32>
    %c8_i32_173 = arith.constant 8 : i32
    %613 = arith.addi %c8_i32_173, %c6_i32 : i32
    %614 = arith.index_cast %613 : i32 to index
    %c0_174 = arith.constant 0 : index
    %615 = vector.load %arg20[%614, %c0_174] : memref<16x32xf32, #tpu.memory_space<vmem>>, vector<1x32xf32>
    tpu.vector_store %arg20[%614, %c0_174], %612 {strides = array<i32>} : memref<16x32xf32, #tpu.memory_space<vmem>>, vector<1x32xf32>,
    %616 = vector.extract_strided_slice %602 {offsets = [1, 0], sizes = [1, 32], strides = [1, 1]} : vector<2x32xf32> to vector<1x32xf32>
    %c7_i32_175 = arith.constant 7 : i32
    %617 = arith.subi %c7_i32_175, %c6_i32 : i32
    %c8_i32_176 = arith.constant 8 : i32
    %618 = arith.addi %c8_i32_176, %617 : i32
    %619 = arith.index_cast %618 : i32 to index
    %c0_177 = arith.constant 0 : index
    %620 = vector.load %arg21[%619, %c0_177] : memref<16x32xf32, #tpu.memory_space<vmem>>, vector<1x32xf32>
    tpu.vector_store %arg21[%619, %c0_177], %616 {strides = array<i32>} : memref<16x32xf32, #tpu.memory_space<vmem>>, vector<1x32xf32>,
    %621 = tpu.concatenate %577, %602 in 1 : vector<2x32xf32>, vector<2x32xf32> -> vector<2x64xf32>
    %c7_i32_178 = arith.constant 7 : i32
    %cst_179 = arith.constant dense<0.000000e+00> : vector<2x256xf32>
    %622 = tpu.matmul %621, %38, %cst_179 {dimension_numbers = #tpu.dot_dimension_numbers<[1], [0], [0], [1], [0, 0, 1, 1], [], []>} : vector<2x64xf32>, vector<64x256xf32>, vector<2x256xf32> -> vector<2x256xf32>
    %623 = vector.extract_strided_slice %622 {offsets = [0, 0], sizes = [2, 128], strides = [1, 1]} : vector<2x256xf32> to vector<2x128xf32>
    %624 = arith.index_cast %c7_i32_178 : i32 to index
    %c0_180 = arith.constant 0 : index
    %c0_181 = arith.constant 0 : index
    %625 = vector.load %arg19[%624, %c0_180, %c0_181] : memref<8x2x256xf32, #tpu.memory_space<vmem>>, vector<1x2x256xf32>
    %626 = vector.shape_cast %625 : vector<1x2x256xf32> to vector<2x256xf32>
    %627 = vector.extract_strided_slice %626 {offsets = [0, 0], sizes = [2, 128], strides = [1, 1]} : vector<2x256xf32> to vector<2x128xf32>
    %628 = arith.addf %623, %627 : vector<2x128xf32>
    %629 = vector.extract_strided_slice %622 {offsets = [0, 128], sizes = [2, 128], strides = [1, 1]} : vector<2x256xf32> to vector<2x128xf32>
    %c7_i32_182 = arith.constant 7 : i32
    %630 = arith.subi %c7_i32_182, %c7_i32_178 : i32
    %631 = arith.index_cast %630 : i32 to index
    %c0_183 = arith.constant 0 : index
    %c0_184 = arith.constant 0 : index
    %632 = vector.load %arg19[%631, %c0_183, %c0_184] : memref<8x2x256xf32, #tpu.memory_space<vmem>>, vector<1x2x256xf32>
    %633 = vector.shape_cast %632 : vector<1x2x256xf32> to vector<2x256xf32>
    %634 = vector.extract_strided_slice %633 {offsets = [0, 128], sizes = [2, 128], strides = [1, 1]} : vector<2x256xf32> to vector<2x128xf32>
    %635 = arith.addf %629, %634 : vector<2x128xf32>
    %636 = vector.extract_strided_slice %628 {offsets = [0, 0], sizes = [2, 32], strides = [1, 1]} : vector<2x128xf32> to vector<2x32xf32>
    %637 = arith.negf %636 : vector<2x32xf32>
    %638 = math.exp %637 : vector<2x32xf32>
    %cst_185 = arith.constant 1.000000e+00 : f32
    %639 = vector.broadcast %cst_185 : f32 to vector<2x32xf32>
    %640 = arith.addf %639, %638 : vector<2x32xf32>
    %641 = arith.divf %639, %640 : vector<2x32xf32>
    %642 = vector.extract_strided_slice %628 {offsets = [0, 32], sizes = [2, 32], strides = [1, 1]} : vector<2x128xf32> to vector<2x32xf32>
    %643 = arith.negf %642 : vector<2x32xf32>
    %644 = math.exp %643 : vector<2x32xf32>
    %cst_186 = arith.constant 1.000000e+00 : f32
    %645 = vector.broadcast %cst_186 : f32 to vector<2x32xf32>
    %646 = arith.addf %645, %644 : vector<2x32xf32>
    %647 = arith.divf %645, %646 : vector<2x32xf32>
    %648 = vector.extract_strided_slice %628 {offsets = [0, 64], sizes = [2, 32], strides = [1, 1]} : vector<2x128xf32> to vector<2x32xf32>
    %649 = math.tanh %648 : vector<2x32xf32>
    %650 = vector.extract_strided_slice %628 {offsets = [0, 96], sizes = [2, 32], strides = [1, 1]} : vector<2x128xf32> to vector<2x32xf32>
    %651 = arith.negf %650 : vector<2x32xf32>
    %652 = math.exp %651 : vector<2x32xf32>
    %cst_187 = arith.constant 1.000000e+00 : f32
    %653 = vector.broadcast %cst_187 : f32 to vector<2x32xf32>
    %654 = arith.addf %653, %652 : vector<2x32xf32>
    %655 = arith.divf %653, %654 : vector<2x32xf32>
    %656 = arith.mulf %647, %575 : vector<2x32xf32>
    %657 = arith.mulf %641, %649 : vector<2x32xf32>
    %658 = arith.addf %656, %657 : vector<2x32xf32>
    %659 = math.tanh %658 : vector<2x32xf32>
    %660 = arith.mulf %655, %659 : vector<2x32xf32>
    %661 = vector.extract_strided_slice %635 {offsets = [0, 0], sizes = [2, 32], strides = [1, 1]} : vector<2x128xf32> to vector<2x32xf32>
    %662 = arith.negf %661 : vector<2x32xf32>
    %663 = math.exp %662 : vector<2x32xf32>
    %cst_188 = arith.constant 1.000000e+00 : f32
    %664 = vector.broadcast %cst_188 : f32 to vector<2x32xf32>
    %665 = arith.addf %664, %663 : vector<2x32xf32>
    %666 = arith.divf %664, %665 : vector<2x32xf32>
    %667 = vector.extract_strided_slice %635 {offsets = [0, 32], sizes = [2, 32], strides = [1, 1]} : vector<2x128xf32> to vector<2x32xf32>
    %668 = arith.negf %667 : vector<2x32xf32>
    %669 = math.exp %668 : vector<2x32xf32>
    %cst_189 = arith.constant 1.000000e+00 : f32
    %670 = vector.broadcast %cst_189 : f32 to vector<2x32xf32>
    %671 = arith.addf %670, %669 : vector<2x32xf32>
    %672 = arith.divf %670, %671 : vector<2x32xf32>
    %673 = vector.extract_strided_slice %635 {offsets = [0, 64], sizes = [2, 32], strides = [1, 1]} : vector<2x128xf32> to vector<2x32xf32>
    %674 = math.tanh %673 : vector<2x32xf32>
    %675 = vector.extract_strided_slice %635 {offsets = [0, 96], sizes = [2, 32], strides = [1, 1]} : vector<2x128xf32> to vector<2x32xf32>
    %676 = arith.negf %675 : vector<2x32xf32>
    %677 = math.exp %676 : vector<2x32xf32>
    %cst_190 = arith.constant 1.000000e+00 : f32
    %678 = vector.broadcast %cst_190 : f32 to vector<2x32xf32>
    %679 = arith.addf %678, %677 : vector<2x32xf32>
    %680 = arith.divf %678, %679 : vector<2x32xf32>
    %681 = arith.mulf %672, %600 : vector<2x32xf32>
    %682 = arith.mulf %666, %674 : vector<2x32xf32>
    %683 = arith.addf %681, %682 : vector<2x32xf32>
    %684 = math.tanh %683 : vector<2x32xf32>
    %685 = arith.mulf %680, %684 : vector<2x32xf32>
    %686 = vector.extract_strided_slice %660 {offsets = [0, 0], sizes = [1, 32], strides = [1, 1]} : vector<2x32xf32> to vector<1x32xf32>
    %c0_i32_191 = arith.constant 0 : i32
    %687 = arith.addi %c0_i32_191, %c7_i32_178 : i32
    %688 = arith.index_cast %687 : i32 to index
    %c0_192 = arith.constant 0 : index
    %689 = vector.load %arg20[%688, %c0_192] : memref<16x32xf32, #tpu.memory_space<vmem>>, vector<1x32xf32>
    tpu.vector_store %arg20[%688, %c0_192], %686 {strides = array<i32>} : memref<16x32xf32, #tpu.memory_space<vmem>>, vector<1x32xf32>,
    %690 = vector.extract_strided_slice %685 {offsets = [0, 0], sizes = [1, 32], strides = [1, 1]} : vector<2x32xf32> to vector<1x32xf32>
    %c7_i32_193 = arith.constant 7 : i32
    %691 = arith.subi %c7_i32_193, %c7_i32_178 : i32
    %c0_i32_194 = arith.constant 0 : i32
    %692 = arith.addi %c0_i32_194, %691 : i32
    %693 = arith.index_cast %692 : i32 to index
    %c0_195 = arith.constant 0 : index
    %694 = vector.load %arg21[%693, %c0_195] : memref<16x32xf32, #tpu.memory_space<vmem>>, vector<1x32xf32>
    tpu.vector_store %arg21[%693, %c0_195], %690 {strides = array<i32>} : memref<16x32xf32, #tpu.memory_space<vmem>>, vector<1x32xf32>,
    %695 = vector.extract_strided_slice %660 {offsets = [1, 0], sizes = [1, 32], strides = [1, 1]} : vector<2x32xf32> to vector<1x32xf32>
    %c8_i32_196 = arith.constant 8 : i32
    %696 = arith.addi %c8_i32_196, %c7_i32_178 : i32
    %697 = arith.index_cast %696 : i32 to index
    %c0_197 = arith.constant 0 : index
    %698 = vector.load %arg20[%697, %c0_197] : memref<16x32xf32, #tpu.memory_space<vmem>>, vector<1x32xf32>
    tpu.vector_store %arg20[%697, %c0_197], %695 {strides = array<i32>} : memref<16x32xf32, #tpu.memory_space<vmem>>, vector<1x32xf32>,
    %699 = vector.extract_strided_slice %685 {offsets = [1, 0], sizes = [1, 32], strides = [1, 1]} : vector<2x32xf32> to vector<1x32xf32>
    %c7_i32_198 = arith.constant 7 : i32
    %700 = arith.subi %c7_i32_198, %c7_i32_178 : i32
    %c8_i32_199 = arith.constant 8 : i32
    %701 = arith.addi %c8_i32_199, %700 : i32
    %702 = arith.index_cast %701 : i32 to index
    %c0_200 = arith.constant 0 : index
    %703 = vector.load %arg21[%702, %c0_200] : memref<16x32xf32, #tpu.memory_space<vmem>>, vector<1x32xf32>
    tpu.vector_store %arg21[%702, %c0_200], %699 {strides = array<i32>} : memref<16x32xf32, #tpu.memory_space<vmem>>, vector<1x32xf32>,
    %704 = tpu.concatenate %660, %685 in 1 : vector<2x32xf32>, vector<2x32xf32> -> vector<2x64xf32>
    %c8_i32_201 = arith.constant 8 : i32
    %c0_202 = arith.constant 0 : index
    %c0_203 = arith.constant 0 : index
    %705 = vector.load %arg20[%c0_202, %c0_203] : memref<16x32xf32, #tpu.memory_space<vmem>>, vector<16x32xf32>
    %c0_204 = arith.constant 0 : index
    %c0_205 = arith.constant 0 : index
    %706 = vector.load %arg21[%c0_204, %c0_205] : memref<16x32xf32, #tpu.memory_space<vmem>>, vector<16x32xf32>
    %707 = tpu.concatenate %705, %706 in 1 : vector<16x32xf32>, vector<16x32xf32> -> vector<16x64xf32>
    %c0_206 = arith.constant 0 : index
    %c0_207 = arith.constant 0 : index
    %708 = vector.load %arg5[%c0_206, %c0_207] : memref<1x64xf32, #tpu.memory_space<vmem>>, vector<1x64xf32>
    %c0_208 = arith.constant 0 : index
    %c0_209 = arith.constant 0 : index
    %709 = vector.load %arg6[%c0_208, %c0_209] : memref<1x64xf32, #tpu.memory_space<vmem>>, vector<1x64xf32>
    %cst_210 = arith.constant dense<0.000000e+00> : vector<16xf32>
    %710 = vector.multi_reduction <add>, %707, %cst_210 [1] : vector<16x64xf32> to vector<16xf32>
    %711 = vector.shape_cast %710 : vector<16xf32> to vector<16x1xf32>
    %cst_211 = arith.constant 6.400000e+01 : f32
    %712 = vector.broadcast %cst_211 : f32 to vector<16x1xf32>
    %713 = arith.divf %711, %712 : vector<16x1xf32>
    %714 = vector.broadcast %713 : vector<16x1xf32> to vector<16x64xf32>
    %715 = arith.subf %707, %714 : vector<16x64xf32>
    %716 = arith.mulf %715, %715 : vector<16x64xf32>
    %cst_212 = arith.constant dense<0.000000e+00> : vector<16xf32>
    %717 = vector.multi_reduction <add>, %716, %cst_212 [1] : vector<16x64xf32> to vector<16xf32>
    %718 = vector.shape_cast %717 : vector<16xf32> to vector<16x1xf32>
    %cst_213 = arith.constant 6.400000e+01 : f32
    %719 = vector.broadcast %cst_213 : f32 to vector<16x1xf32>
    %720 = arith.divf %718, %719 : vector<16x1xf32>
    %721 = vector.broadcast %713 : vector<16x1xf32> to vector<16x64xf32>
    %722 = arith.subf %707, %721 : vector<16x64xf32>
    %cst_214 = arith.constant 9.99999974E-6 : f32
    %723 = vector.broadcast %cst_214 : f32 to vector<16x1xf32>
    %724 = arith.addf %720, %723 : vector<16x1xf32>
    %725 = math.rsqrt %724 : vector<16x1xf32>
    %726 = vector.broadcast %725 : vector<16x1xf32> to vector<16x64xf32>
    %727 = arith.mulf %722, %726 : vector<16x64xf32>
    %728 = vector.broadcast %708 : vector<1x64xf32> to vector<16x64xf32>
    %729 = arith.mulf %727, %728 : vector<16x64xf32>
    %730 = vector.broadcast %709 : vector<1x64xf32> to vector<16x64xf32>
    %731 = arith.addf %729, %730 : vector<16x64xf32>
    %c0_215 = arith.constant 0 : index
    %c0_216 = arith.constant 0 : index
    %732 = vector.load %arg7[%c0_215, %c0_216] : memref<1x64xf32, #tpu.memory_space<vmem>>, vector<1x64xf32>
    %c0_217 = arith.constant 0 : index
    %c0_218 = arith.constant 0 : index
    %733 = vector.load %arg8[%c0_217, %c0_218] : memref<1x64xf32, #tpu.memory_space<vmem>>, vector<1x64xf32>
    %cst_219 = arith.constant dense<0.000000e+00> : vector<16xf32>
    %734 = vector.multi_reduction <add>, %731, %cst_219 [1] : vector<16x64xf32> to vector<16xf32>
    %735 = vector.shape_cast %734 : vector<16xf32> to vector<16x1xf32>
    %cst_220 = arith.constant 6.400000e+01 : f32
    %736 = vector.broadcast %cst_220 : f32 to vector<16x1xf32>
    %737 = arith.divf %735, %736 : vector<16x1xf32>
    %738 = vector.broadcast %737 : vector<16x1xf32> to vector<16x64xf32>
    %739 = arith.subf %731, %738 : vector<16x64xf32>
    %740 = arith.mulf %739, %739 : vector<16x64xf32>
    %cst_221 = arith.constant dense<0.000000e+00> : vector<16xf32>
    %741 = vector.multi_reduction <add>, %740, %cst_221 [1] : vector<16x64xf32> to vector<16xf32>
    %742 = vector.shape_cast %741 : vector<16xf32> to vector<16x1xf32>
    %cst_222 = arith.constant 6.400000e+01 : f32
    %743 = vector.broadcast %cst_222 : f32 to vector<16x1xf32>
    %744 = arith.divf %742, %743 : vector<16x1xf32>
    %745 = vector.broadcast %737 : vector<16x1xf32> to vector<16x64xf32>
    %746 = arith.subf %731, %745 : vector<16x64xf32>
    %cst_223 = arith.constant 9.99999974E-6 : f32
    %747 = vector.broadcast %cst_223 : f32 to vector<16x1xf32>
    %748 = arith.addf %744, %747 : vector<16x1xf32>
    %749 = math.rsqrt %748 : vector<16x1xf32>
    %750 = vector.broadcast %749 : vector<16x1xf32> to vector<16x64xf32>
    %751 = arith.mulf %746, %750 : vector<16x64xf32>
    %752 = vector.broadcast %732 : vector<1x64xf32> to vector<16x64xf32>
    %753 = arith.mulf %751, %752 : vector<16x64xf32>
    %754 = vector.broadcast %733 : vector<1x64xf32> to vector<16x64xf32>
    %755 = arith.addf %753, %754 : vector<16x64xf32>
    %c0_224 = arith.constant 0 : index
    %c0_225 = arith.constant 0 : index
    %756 = vector.load %arg9[%c0_224, %c0_225] : memref<64x192xf32, #tpu.memory_space<vmem>>, vector<64x192xf32>
    %cst_226 = arith.constant dense<0.000000e+00> : vector<16x192xf32>
    %757 = tpu.matmul %755, %756, %cst_226 {dimension_numbers = #tpu.dot_dimension_numbers<[1], [0], [0], [1], [0, 0, 1, 1], [], []>} : vector<16x64xf32>, vector<64x192xf32>, vector<16x192xf32> -> vector<16x192xf32>
    %c0_227 = arith.constant 0 : index
    %c0_228 = arith.constant 0 : index
    %758 = vector.load %arg10[%c0_227, %c0_228] : memref<1x192xf32, #tpu.memory_space<vmem>>, vector<1x192xf32>
    %759 = vector.broadcast %758 : vector<1x192xf32> to vector<16x192xf32>
    %760 = arith.addf %757, %759 : vector<16x192xf32>
    %761 = vector.extract_strided_slice %760 {offsets = [0, 0], sizes = [8, 192], strides = [1, 1]} : vector<16x192xf32> to vector<8x192xf32>
    %762 = vector.extract_strided_slice %760 {offsets = [8, 0], sizes = [8, 192], strides = [1, 1]} : vector<16x192xf32> to vector<8x192xf32>
    %763 = vector.shape_cast %761 : vector<8x192xf32> to vector<1x8x192xf32>
    %764 = vector.shape_cast %762 : vector<8x192xf32> to vector<1x8x192xf32>
    %765 = tpu.concatenate %763, %764 in 0 : vector<1x8x192xf32>, vector<1x8x192xf32> -> vector<2x8x192xf32>
    %766 = vector.extract_strided_slice %731 {offsets = [0, 0], sizes = [8, 64], strides = [1, 1]} : vector<16x64xf32> to vector<8x64xf32>
    %767 = vector.extract_strided_slice %731 {offsets = [8, 0], sizes = [8, 64], strides = [1, 1]} : vector<16x64xf32> to vector<8x64xf32>
    %768 = vector.shape_cast %766 : vector<8x64xf32> to vector<1x8x64xf32>
    %769 = vector.shape_cast %767 : vector<8x64xf32> to vector<1x8x64xf32>
    %770 = tpu.concatenate %768, %769 in 0 : vector<1x8x64xf32>, vector<1x8x64xf32> -> vector<2x8x64xf32>
    %771 = vector.extract_strided_slice %765 {offsets = [0, 0, 0], sizes = [2, 8, 64], strides = [1, 1, 1]} : vector<2x8x192xf32> to vector<2x8x64xf32>
    %772 = vector.extract_strided_slice %765 {offsets = [0, 0, 64], sizes = [2, 8, 64], strides = [1, 1, 1]} : vector<2x8x192xf32> to vector<2x8x64xf32>
    %773 = vector.extract_strided_slice %765 {offsets = [0, 0, 128], sizes = [2, 8, 64], strides = [1, 1, 1]} : vector<2x8x192xf32> to vector<2x8x64xf32>
    "tpu.trace_start"() <{level = 10 : i32, message = "bqa,bka->bqk"}> : () -> ()
    %cst_229 = arith.constant dense<0.000000e+00> : vector<2x8x8xf32>
    %774 = tpu.matmul %771, %772, %cst_229 {dimension_numbers = #tpu.dot_dimension_numbers<[2], [2], [1], [1], [0, 0, 0, 1, 1, 1], [0], [0]>} : vector<2x8x64xf32>, vector<2x8x64xf32>, vector<2x8x8xf32> -> vector<2x8x8xf32>
    "tpu.trace_stop"() : () -> ()
    %cst_230 = arith.constant 1.250000e-01 : f32
    %775 = vector.broadcast %cst_230 : f32 to vector<2x8x8xf32>
    %776 = arith.mulf %774, %775 : vector<2x8x8xf32>
    %c0_231 = arith.constant 0 : index
    %c0_232 = arith.constant 0 : index
    %c0_233 = arith.constant 0 : index
    %777 = vector.load %arg1[%c0_231, %c0_232, %c0_233] : memref<2x1x8xf32, #tpu.memory_space<vmem>>, vector<2x1x8xf32>
    %cst_234 = arith.constant 5.000000e-01 : f32
    %778 = vector.broadcast %cst_234 : f32 to vector<2x1x8xf32>
    %779 = arith.cmpf ogt, %777, %778 : vector<2x1x8xf32>
    %cst_235 = arith.constant -1.000000e+10 : f32
    %780 = vector.shape_cast %779 : vector<2x1x8xi1> to vector<2x1x8xi1>
    %781 = vector.broadcast %780 : vector<2x1x8xi1> to vector<2x8x8xi1>
    %782 = vector.broadcast %cst_235 : f32 to vector<2x8x8xf32>
    %783 = arith.select %781, %776, %782 : vector<2x8x8xi1>, vector<2x8x8xf32>
    %cst_236 = arith.constant dense<0xFF800000> : vector<2x8xf32>
    %784 = vector.multi_reduction <maximumf>, %783, %cst_236 [2] : vector<2x8x8xf32> to vector<2x8xf32>
    %785 = vector.shape_cast %784 : vector<2x8xf32> to vector<2x8x1xf32>
    %786 = vector.broadcast %785 : vector<2x8x1xf32> to vector<2x8x8xf32>
    %787 = arith.subf %783, %786 : vector<2x8x8xf32>
    %788 = math.exp %787 : vector<2x8x8xf32>
    %cst_237 = arith.constant dense<0.000000e+00> : vector<2x8xf32>
    %789 = vector.multi_reduction <add>, %788, %cst_237 [2] : vector<2x8x8xf32> to vector<2x8xf32>
    %790 = vector.shape_cast %789 : vector<2x8xf32> to vector<2x8x1xf32>
    %791 = vector.broadcast %790 : vector<2x8x1xf32> to vector<2x8x8xf32>
    %792 = arith.divf %788, %791 : vector<2x8x8xf32>
    %c0_238 = arith.constant 0 : index
    %c0_239 = arith.constant 0 : index
    %c0_240 = arith.constant 0 : index
    %793 = vector.load %arg18[%c0_238, %c0_239, %c0_240] : memref<2x8x8xf32, #tpu.memory_space<vmem>>, vector<2x8x8xf32>
    tpu.vector_store %arg18[%c0_238, %c0_239, %c0_240], %792 {strides = array<i32>} : memref<2x8x8xf32, #tpu.memory_space<vmem>>, vector<2x8x8xf32>,
    "tpu.trace_start"() <{level = 10 : i32, message = "bqk,bkd->bqd"}> : () -> ()
    %cst_241 = arith.constant dense<0.000000e+00> : vector<2x8x64xf32>
    %794 = tpu.matmul %792, %773, %cst_241 {dimension_numbers = #tpu.dot_dimension_numbers<[2], [1], [1], [2], [0, 0, 0, 1, 1, 2], [0], [0]>} : vector<2x8x8xf32>, vector<2x8x64xf32>, vector<2x8x64xf32> -> vector<2x8x64xf32>
    "tpu.trace_stop"() : () -> ()
    %795 = arith.addf %794, %770 : vector<2x8x64xf32>
    %cst_242 = arith.constant dense<0xFF800000> : vector<2x64xf32>
    %796 = vector.multi_reduction <maximumf>, %795, %cst_242 [1] : vector<2x8x64xf32> to vector<2x64xf32>
    %c0_243 = arith.constant 0 : index
    %c0_244 = arith.constant 0 : index
    %797 = vector.load %arg11[%c0_243, %c0_244] : memref<64x32xf32, #tpu.memory_space<vmem>>, vector<64x32xf32>
    %cst_245 = arith.constant dense<0.000000e+00> : vector<2x32xf32>
    %798 = tpu.matmul %796, %797, %cst_245 {dimension_numbers = #tpu.dot_dimension_numbers<[1], [0], [0], [1], [0, 0, 1, 1], [], []>} : vector<2x64xf32>, vector<64x32xf32>, vector<2x32xf32> -> vector<2x32xf32>
    %c0_246 = arith.constant 0 : index
    %c0_247 = arith.constant 0 : index
    %799 = vector.load %arg12[%c0_246, %c0_247] : memref<1x32xf32, #tpu.memory_space<vmem>>, vector<1x32xf32>
    %800 = vector.broadcast %799 : vector<1x32xf32> to vector<2x32xf32>
    %801 = arith.addf %798, %800 : vector<2x32xf32>
    %c0_248 = arith.constant 0 : index
    %c0_249 = arith.constant 0 : index
    %802 = vector.load %arg13[%c0_248, %c0_249] : memref<1x32xf32, #tpu.memory_space<vmem>>, vector<1x32xf32>
    %c0_250 = arith.constant 0 : index
    %c0_251 = arith.constant 0 : index
    %803 = vector.load %arg14[%c0_250, %c0_251] : memref<1x32xf32, #tpu.memory_space<vmem>>, vector<1x32xf32>
    %cst_252 = arith.constant dense<0.000000e+00> : vector<2xf32>
    %804 = vector.multi_reduction <add>, %801, %cst_252 [1] : vector<2x32xf32> to vector<2xf32>
    %805 = vector.shape_cast %804 : vector<2xf32> to vector<2x1xf32>
    %cst_253 = arith.constant 3.200000e+01 : f32
    %806 = vector.broadcast %cst_253 : f32 to vector<2x1xf32>
    %807 = arith.divf %805, %806 : vector<2x1xf32>
    %808 = vector.broadcast %807 : vector<2x1xf32> to vector<2x32xf32>
    %809 = arith.subf %801, %808 : vector<2x32xf32>
    %810 = arith.mulf %809, %809 : vector<2x32xf32>
    %cst_254 = arith.constant dense<0.000000e+00> : vector<2xf32>
    %811 = vector.multi_reduction <add>, %810, %cst_254 [1] : vector<2x32xf32> to vector<2xf32>
    %812 = vector.shape_cast %811 : vector<2xf32> to vector<2x1xf32>
    %cst_255 = arith.constant 3.200000e+01 : f32
    %813 = vector.broadcast %cst_255 : f32 to vector<2x1xf32>
    %814 = arith.divf %812, %813 : vector<2x1xf32>
    %815 = vector.broadcast %807 : vector<2x1xf32> to vector<2x32xf32>
    %816 = arith.subf %801, %815 : vector<2x32xf32>
    %cst_256 = arith.constant 9.99999974E-6 : f32
    %817 = vector.broadcast %cst_256 : f32 to vector<2x1xf32>
    %818 = arith.addf %814, %817 : vector<2x1xf32>
    %819 = math.rsqrt %818 : vector<2x1xf32>
    %820 = vector.broadcast %819 : vector<2x1xf32> to vector<2x32xf32>
    %821 = arith.mulf %816, %820 : vector<2x32xf32>
    %822 = vector.broadcast %802 : vector<1x32xf32> to vector<2x32xf32>
    %823 = arith.mulf %821, %822 : vector<2x32xf32>
    %824 = vector.broadcast %803 : vector<1x32xf32> to vector<2x32xf32>
    %825 = arith.addf %823, %824 : vector<2x32xf32>
    %cst_257 = arith.constant 0.000000e+00 : f32
    %826 = vector.broadcast %cst_257 : f32 to vector<2x32xf32>
    %827 = arith.maximumf %825, %826 : vector<2x32xf32>
    %c0_258 = arith.constant 0 : index
    %c0_259 = arith.constant 0 : index
    %828 = vector.load %arg15[%c0_258, %c0_259] : memref<32x6xf32, #tpu.memory_space<vmem>>, vector<32x6xf32>
    %cst_260 = arith.constant dense<0.000000e+00> : vector<2x6xf32>
    %829 = tpu.matmul %827, %828, %cst_260 {dimension_numbers = #tpu.dot_dimension_numbers<[1], [0], [0], [1], [0, 0, 1, 1], [], []>} : vector<2x32xf32>, vector<32x6xf32>, vector<2x6xf32> -> vector<2x6xf32>
    %c0_261 = arith.constant 0 : index
    %c0_262 = arith.constant 0 : index
    %830 = vector.load %arg16[%c0_261, %c0_262] : memref<1x6xf32, #tpu.memory_space<vmem>>, vector<1x6xf32>
    %831 = vector.broadcast %830 : vector<1x6xf32> to vector<2x6xf32>
    %832 = arith.addf %829, %831 : vector<2x6xf32>
    %c0_263 = arith.constant 0 : index
    %c0_264 = arith.constant 0 : index
    %833 = vector.load %arg17[%c0_263, %c0_264] : memref<2x6xf32, #tpu.memory_space<vmem>>, vector<2x6xf32>
    tpu.vector_store %arg17[%c0_263, %c0_264], %832 {strides = array<i32>} : memref<2x6xf32, #tpu.memory_space<vmem>>, vector<2x6xf32>,
    return
  }
}

</mosaic_0001>

<llo_original>
// kernel: tpu_custom_call.1
$region0: #{tpu_custom_call.1}
  #allocation0 [shape = 'u32[]', space=smem, size = 0x4, offset = 0x4, fixed_abs, tag = 'smem constant byte address 0x4 - core index']
  #allocation1 [shape = 'u32[144,128]{1,0:T(1,128)}', space=vmem, size = 0x12000, scoped, tag = 'internal scratch']
  #allocation2 [shape = 'f32[8,2,256]{2,1,0:T(2,128)}', space=vmem, size = 0x4000, scoped, tag = 'scratch operand']
  #allocation3 [shape = 'f32[16,32]{1,0:T(8,128)}', space=vmem, size = 0x2000, scoped, tag = 'scratch operand']
  #allocation4 [shape = 'f32[16,32]{1,0:T(8,128)}', space=vmem, size = 0x2000, scoped, tag = 'scratch operand']
  %s0 = inlined_call_operand.hbm [shape: f32[16,16], index: 0, kind: input, shape index: {}]
  %s1 = inlined_call_operand.vmem [shape: f32[2,1,8], index: 1, kind: input, shape index: {}]
  %s2 = inlined_call_operand.hbm [shape: f32[16,256], index: 2, kind: input, shape index: {}]
  %s3 = inlined_call_operand.vmem [shape: f32[64,256], index: 3, kind: input, shape index: {}]
  %s4 = inlined_call_operand.hbm [shape: f32[1,256], index: 4, kind: input, shape index: {}]
  %s5 = inlined_call_operand.hbm [shape: f32[1,64], index: 5, kind: input, shape index: {}]
  %s6 = inlined_call_operand.hbm [shape: f32[1,64], index: 6, kind: input, shape index: {}]
  %s7 = inlined_call_operand.hbm [shape: f32[1,64], index: 7, kind: input, shape index: {}]
  %s8 = inlined_call_operand.hbm [shape: f32[1,64], index: 8, kind: input, shape index: {}]
  %s9 = inlined_call_operand.hbm [shape: f32[64,192], index: 9, kind: input, shape index: {}]
  %s10 = inlined_call_operand.vmem [shape: f32[1,192], index: 10, kind: input, shape index: {}]
  %s11 = inlined_call_operand.vmem [shape: f32[64,32], index: 11, kind: input, shape index: {}]
  %s12 = inlined_call_operand.vmem [shape: f32[1,32], index: 12, kind: input, shape index: {}]
  %s13 = inlined_call_operand.vmem [shape: f32[1,32], index: 13, kind: input, shape index: {}]
  %s14 = inlined_call_operand.vmem [shape: f32[1,32], index: 14, kind: input, shape index: {}]
  %s15 = inlined_call_operand.vmem [shape: f32[32,6], index: 15, kind: input, shape index: {}]
  %s16 = inlined_call_operand.vmem [shape: f32[1,6], index: 16, kind: input, shape index: {}]
  %s17 = inlined_call_operand.hbm [shape: f32[2,6], index: 17, kind: output, shape index: {0}]
  %s18 = inlined_call_operand.hbm [shape: f32[2,8,8], index: 18, kind: output, shape index: {1}]
  %19 = xla_tuple %s17, %s18
  %s20 = sld [smem:[#allocation0]]
  $region118: #{tpu_custom_call.1} parent=0
    _
  %s22 = ssub.s32 1, %s20
  %s23 = scalar_select 0, %s22, %s20
  $region1: #{tpu_custom_call.1} parent=0
    #allocation5 [shape = 'u8[8192]{0}', space=vmem, size = 0x2000, scoped, tag = 'input window, operand 0, single buffered']
    #allocation6 [shape = 's32[1]{0}', space=sflag, size = 0x4, scoped, tag = 'scoped memory for tpu_custom_call.1']
    #allocation7 [shape = 's32[1]{0}', space=sflag, size = 0x4, scoped, tag = 'scoped memory for tpu_custom_call.1']
    #allocation8 [shape = 'u8[16384]{0}', space=vmem, size = 0x4000, scoped, tag = 'input window, operand 2, single buffered']
    #allocation9 [shape = 's32[1]{0}', space=sflag, size = 0x4, scoped, tag = 'scoped memory for tpu_custom_call.1']
    #allocation10 [shape = 'u8[1024]{0}', space=vmem, size = 0x400, scoped, tag = 'input window, operand 4, single buffered']
    #allocation11 [shape = 'u8[512]{0}', space=vmem, size = 0x400, scoped, tag = 'input window, operand 5, single buffered']
    #allocation12 [shape = 's32[1]{0}', space=sflag, size = 0x4, scoped, tag = 'scoped memory for tpu_custom_call.1']
    #allocation13 [shape = 'u8[512]{0}', space=vmem, size = 0x400, scoped, tag = 'input window, operand 6, single buffered']
    #allocation14 [shape = 'u8[512]{0}', space=vmem, size = 0x400, scoped, tag = 'input window, operand 7, single buffered']
    #allocation15 [shape = 's32[1]{0}', space=sflag, size = 0x4, scoped, tag = 'scoped memory for tpu_custom_call.1']
    #allocation16 [shape = 'u8[512]{0}', space=vmem, size = 0x400, scoped, tag = 'input window, operand 8, single buffered']
    #allocation17 [shape = 'u8[65536]{0}', space=vmem, size = 0x10000, scoped, tag = 'input window, operand 9, single buffered']
    #allocation18 [shape = 's32[1]{0}', space=sflag, size = 0x4, scoped, tag = 'scoped memory for tpu_custom_call.1']
    #allocation19 [shape = 'u8[1024]{0}', space=vmem, size = 0x400, scoped, tag = 'output window, operand 0, single buffered']
    #allocation20 [shape = 'u8[8192]{0}', space=vmem, size = 0x2000, scoped, tag = 'output window, operand 1, single buffered']
    #allocation21 [shape = 's32[1]{0}', space=sflag, size = 0x4, scoped, tag = 'scoped memory for tpu_custom_call.1']
    %24 = vsyncpa [#allocation6], 0
    %25 = vsyncpa [#allocation9], 0
    %26 = vsyncpa [#allocation12], 0
    %27 = vsyncpa [#allocation15], 0
    %28 = vsyncpa [#allocation18], 0
    %29 = vsyncpa [#allocation7], 0
    %30 = vsyncpa [#allocation21], 0
    // Predicated region
    $region2: #{tpu_custom_call.1} parent=1 // pred_check
      _
    $region3: #{tpu_custom_call.1} parent=1 // pred_check_branch
      %32 = sbr.rel (0) target = $region5
    $region4: #{tpu_custom_call.1} parent=1 // pred_region
      %s34 = ssub.s32 256, 256
      %35 = vsyncadd [#allocation6], %s34
      %s36 = sshll.u32 [#allocation5], 4
      %s37 = int_to_ptr.vmem [resolvable:$true] %s36
      %42 = dma.hbm_to_vmem [thread:$0]  %s0, 256, %s37, [#allocation6], 128, 128, 8
    $region5: #{tpu_custom_call.1} parent=1 // pred_fallthru
      _
    // Predicated region
    $region6: #{tpu_custom_call.1} parent=1 // pred_check
      _
    $region7: #{tpu_custom_call.1} parent=1 // pred_check_branch
      %44 = sbr.rel (0) target = $region9
    $region8: #{tpu_custom_call.1} parent=1 // pred_region
      _
    $region9: #{tpu_custom_call.1} parent=1 // pred_fallthru
      _
    // Predicated region
    $region10: #{tpu_custom_call.1} parent=1 // pred_check
      _
    $region11: #{tpu_custom_call.1} parent=1 // pred_check_branch
      %46 = sbr.rel (0) target = $region13
    $region12: #{tpu_custom_call.1} parent=1 // pred_region
      %s48 = ssub.s32 512, 512
      %49 = vsyncadd [#allocation9], %s48
      %s50 = sshll.u32 [#allocation8], 4
      %s51 = int_to_ptr.vmem [resolvable:$true] %s50
      %56 = dma.hbm_to_vmem [thread:$0]  %s2, 512, %s51, [#allocation9], 256, 256, 16
    $region13: #{tpu_custom_call.1} parent=1 // pred_fallthru
      _
    // Predicated region
    $region14: #{tpu_custom_call.1} parent=1 // pred_check
      _
    $region15: #{tpu_custom_call.1} parent=1 // pred_check_branch
      %58 = sbr.rel (0) target = $region17
    $region16: #{tpu_custom_call.1} parent=1 // pred_region
      _
    $region17: #{tpu_custom_call.1} parent=1 // pred_fallthru
      _
    // Predicated region
    $region18: #{tpu_custom_call.1} parent=1 // pred_check
      _
    $region19: #{tpu_custom_call.1} parent=1 // pred_check_branch
      %60 = sbr.rel (0) target = $region21
    $region20: #{tpu_custom_call.1} parent=1 // pred_region
      %s62 = ssub.s32 32, 32
      %63 = vsyncadd [#allocation9], %s62
      %s65 = sshll.u32 [#allocation10], 4
      %s66 = int_to_ptr.vmem [resolvable:$true] %s65
      %68 = dma.hbm_to_vmem [thread:$0]  %s4, 32, %s66, [#allocation9]
    $region21: #{tpu_custom_call.1} parent=1 // pred_fallthru
      _
    // Predicated region
    $region22: #{tpu_custom_call.1} parent=1 // pred_check
      _
    $region23: #{tpu_custom_call.1} parent=1 // pred_check_branch
      %70 = sbr.rel (0) target = $region25
    $region24: #{tpu_custom_call.1} parent=1 // pred_region
      %s72 = ssub.s32 16, 16
      %73 = vsyncadd [#allocation12], %s72
      %s75 = sshll.u32 [#allocation11], 4
      %s76 = int_to_ptr.vmem [resolvable:$true] %s75
      %78 = dma.hbm_to_vmem [thread:$0]  %s5, 16, %s76, [#allocation12]
    $region25: #{tpu_custom_call.1} parent=1 // pred_fallthru
      _
    // Predicated region
    $region26: #{tpu_custom_call.1} parent=1 // pred_check
      _
    $region27: #{tpu_custom_call.1} parent=1 // pred_check_branch
      %80 = sbr.rel (0) target = $region29
    $region28: #{tpu_custom_call.1} parent=1 // pred_region
      %s82 = ssub.s32 16, 16
      %83 = vsyncadd [#allocation12], %s82
      %s85 = sshll.u32 [#allocation13], 4
      %s86 = int_to_ptr.vmem [resolvable:$true] %s85
      %88 = dma.hbm_to_vmem [thread:$0]  %s6, 16, %s86, [#allocation12]
    $region29: #{tpu_custom_call.1} parent=1 // pred_fallthru
      _
    // Predicated region
    $region30: #{tpu_custom_call.1} parent=1 // pred_check
      _
    $region31: #{tpu_custom_call.1} parent=1 // pred_check_branch
      %90 = sbr.rel (0) target = $region33
    $region32: #{tpu_custom_call.1} parent=1 // pred_region
      %s92 = ssub.s32 16, 16
      %93 = vsyncadd [#allocation15], %s92
      %s95 = sshll.u32 [#allocation14], 4
      %s96 = int_to_ptr.vmem [resolvable:$true] %s95
      %98 = dma.hbm_to_vmem [thread:$0]  %s7, 16, %s96, [#allocation15]
    $region33: #{tpu_custom_call.1} parent=1 // pred_fallthru
      _
    // Predicated region
    $region34: #{tpu_custom_call.1} parent=1 // pred_check
      _
    $region35: #{tpu_custom_call.1} parent=1 // pred_check_branch
      %100 = sbr.rel (0) target = $region37
    $region36: #{tpu_custom_call.1} parent=1 // pred_region
      %s102 = ssub.s32 16, 16
      %103 = vsyncadd [#allocation15], %s102
      %s105 = sshll.u32 [#allocation16], 4
      %s106 = int_to_ptr.vmem [resolvable:$true] %s105
      %108 = dma.hbm_to_vmem [thread:$0]  %s8, 16, %s106, [#allocation15]
    $region37: #{tpu_custom_call.1} parent=1 // pred_fallthru
      _
    // Predicated region
    $region38: #{tpu_custom_call.1} parent=1 // pred_check
      _
    $region39: #{tpu_custom_call.1} parent=1 // pred_check_branch
      %110 = sbr.rel (0) target = $region41
    $region40: #{tpu_custom_call.1} parent=1 // pred_region
      %s112 = ssub.s32 2048, 2048
      %113 = vsyncadd [#allocation18], %s112
      %s114 = sshll.u32 [#allocation17], 4
      %s115 = int_to_ptr.vmem [resolvable:$true] %s114
      %120 = dma.hbm_to_vmem [thread:$0]  %s9, 2048, %s115, [#allocation18], 256, 256, 16
    $region41: #{tpu_custom_call.1} parent=1 // pred_fallthru
      _
    // Predicated region
    $region42: #{tpu_custom_call.1} parent=1 // pred_check
      _
    $region43: #{tpu_custom_call.1} parent=1 // pred_check_branch
      %122 = sbr.rel (0) target = $region45
    $region44: #{tpu_custom_call.1} parent=1 // pred_region
      _
    $region45: #{tpu_custom_call.1} parent=1 // pred_fallthru
      _
    // Predicated region
    $region46: #{tpu_custom_call.1} parent=1 // pred_check
      _
    $region47: #{tpu_custom_call.1} parent=1 // pred_check_branch
      %124 = sbr.rel (0) target = $region49
    $region48: #{tpu_custom_call.1} parent=1 // pred_region
      _
    $region49: #{tpu_custom_call.1} parent=1 // pred_fallthru
      _
    // Predicated region
    $region50: #{tpu_custom_call.1} parent=1 // pred_check
      _
    $region51: #{tpu_custom_call.1} parent=1 // pred_check_branch
      %126 = sbr.rel (0) target = $region53
    $region52: #{tpu_custom_call.1} parent=1 // pred_region
      _
    $region53: #{tpu_custom_call.1} parent=1 // pred_fallthru
      _
    // Predicated region
    $region54: #{tpu_custom_call.1} parent=1 // pred_check
      _
    $region55: #{tpu_custom_call.1} parent=1 // pred_check_branch
      %128 = sbr.rel (0) target = $region57
    $region56: #{tpu_custom_call.1} parent=1 // pred_region
      _
    $region57: #{tpu_custom_call.1} parent=1 // pred_fallthru
      _
    // Predicated region
    $region58: #{tpu_custom_call.1} parent=1 // pred_check
      _
    $region59: #{tpu_custom_call.1} parent=1 // pred_check_branch
      %130 = sbr.rel (0) target = $region61
    $region60: #{tpu_custom_call.1} parent=1 // pred_region
      _
    $region61: #{tpu_custom_call.1} parent=1 // pred_fallthru
      _
    // Predicated region
    $region62: #{tpu_custom_call.1} parent=1 // pred_check
      _
    $region63: #{tpu_custom_call.1} parent=1 // pred_check_branch
      %132 = sbr.rel (0) target = $region65
    $region64: #{tpu_custom_call.1} parent=1 // pred_region
      _
    $region65: #{tpu_custom_call.1} parent=1 // pred_fallthru
      _
    // Predicated region
    $region66: #{tpu_custom_call.1} parent=1 // pred_check
      _
    $region67: #{tpu_custom_call.1} parent=1 // pred_check_branch
      %134 = sbr.rel (0) target = $region69
    $region68: #{tpu_custom_call.1} parent=1 // pred_region
      _
    $region69: #{tpu_custom_call.1} parent=1 // pred_fallthru
      _
    // Predicated region
    $region70: #{tpu_custom_call.1} parent=1 // pred_check
      _
    $region71: #{tpu_custom_call.1} parent=1 // pred_check_branch
      %136 = sbr.rel (0) target = $region73
    $region72: #{tpu_custom_call.1} parent=1 // pred_region
      %137 = dma.done [#allocation6], 256
    $region73: #{tpu_custom_call.1} parent=1 // pred_fallthru
      _
    // Predicated region
    $region74: #{tpu_custom_call.1} parent=1 // pred_check
      _
    $region75: #{tpu_custom_call.1} parent=1 // pred_check_branch
      %139 = sbr.rel (0) target = $region77
    $region76: #{tpu_custom_call.1} parent=1 // pred_region
      %140 = dma.done [#allocation9], 512
    $region77: #{tpu_custom_call.1} parent=1 // pred_fallthru
      _
    // Predicated region
    $region78: #{tpu_custom_call.1} parent=1 // pred_check
      _
    $region79: #{tpu_custom_call.1} parent=1 // pred_check_branch
      %142 = sbr.rel (0) target = $region81
    $region80: #{tpu_custom_call.1} parent=1 // pred_region
      %143 = dma.done [#allocation9], 32
    $region81: #{tpu_custom_call.1} parent=1 // pred_fallthru
      _
    // Predicated region
    $region82: #{tpu_custom_call.1} parent=1 // pred_check
      _
    $region83: #{tpu_custom_call.1} parent=1 // pred_check_branch
      %145 = sbr.rel (0) target = $region85
    $region84: #{tpu_custom_call.1} parent=1 // pred_region
      %146 = dma.done [#allocation12], 16
    $region85: #{tpu_custom_call.1} parent=1 // pred_fallthru
      _
    // Predicated region
    $region86: #{tpu_custom_call.1} parent=1 // pred_check
      _
    $region87: #{tpu_custom_call.1} parent=1 // pred_check_branch
      %148 = sbr.rel (0) target = $region89
    $region88: #{tpu_custom_call.1} parent=1 // pred_region
      %149 = dma.done [#allocation12], 16
    $region89: #{tpu_custom_call.1} parent=1 // pred_fallthru
      _
    // Predicated region
    $region90: #{tpu_custom_call.1} parent=1 // pred_check
      _
    $region91: #{tpu_custom_call.1} parent=1 // pred_check_branch
      %151 = sbr.rel (0) target = $region93
    $region92: #{tpu_custom_call.1} parent=1 // pred_region
      %152 = dma.done [#allocation15], 16
    $region93: #{tpu_custom_call.1} parent=1 // pred_fallthru
      _
    // Predicated region
    $region94: #{tpu_custom_call.1} parent=1 // pred_check
      _
    $region95: #{tpu_custom_call.1} parent=1 // pred_check_branch
      %154 = sbr.rel (0) target = $region97
    $region96: #{tpu_custom_call.1} parent=1 // pred_region
      %155 = dma.done [#allocation15], 16
    $region97: #{tpu_custom_call.1} parent=1 // pred_fallthru
      _
    // Predicated region
    $region98: #{tpu_custom_call.1} parent=1 // pred_check
      _
    $region99: #{tpu_custom_call.1} parent=1 // pred_check_branch
      %157 = sbr.rel (0) target = $region101
    $region100: #{tpu_custom_call.1} parent=1 // pred_region
      %158 = dma.done [#allocation18], 2048
    $region101: #{tpu_custom_call.1} parent=1 // pred_fallthru
      _
    %v159 = vld [vmem:[#allocation5] sm:$0xff]
    %v160 = vld [vmem:[#allocation5 + $0x8] sm:$0xff]
    %v161 = vld [vmem:[#allocation8] sm:$0xff]
    %v162 = vld [vmem:[#allocation8 + $0x8] sm:$0xff]
    %v163 = vld [vmem:[#allocation8 + $0x10] sm:$0xff]
    %v164 = vld [vmem:[#allocation8 + $0x18] sm:$0xff]
    %v165 = vld [vmem:[#allocation10] sm:$0x3]
    %v167 = vlaneseq
    %v168 = vshrl.u32 %v167, 7
    %v169 = vsub.s32 0, %v168
    %v170 = vrot.slane %v165, %v169
    %v171 = vlaneseq
    %v172 = vshrl.u32 %v171, 7
    %v173 = vsub.s32 1, %v172
    %v174 = vrot.slane %v165, %v173
    %vm177 = vcmask 130048
    %v179 = vsel %vm177, %v159, 0
    %v182 = vsel %vm177, %v160, 0
    %184 = vmatprep.subr.mxu0 %v162
    %185 = vmatpush1.msra.mxu0 %v161
    %186 = vmatprep.subr.mxu0 %v164
    %187 = vmatpush1.msra.mxu0 %v163
    %188 = vmatprep.subr.mxu0 0.0
    %189 = vmatpush1.msra.mxu0 0.0
    %190 = vmatprep.subr.mxu0 0.0
    %191 = vmatpush1.msra.mxu0 0.0
    %192 = vmatprep.subr.mxu0 0.0
    %193 = vmatpush1.msra.mxu0 0.0
    %194 = vmatprep.subr.mxu0 0.0
    %195 = vmatpush1.msra.mxu0 0.0
    %196 = vmatprep.subr.mxu0 0.0
    %197 = vmatpush1.msra.mxu0 0.0
    %198 = vmatprep.subr.mxu0 0.0
    %199 = vmatpush1.msra.mxu0 0.0
    %200 = vmatprep.subr.mxu0 0.0
    %201 = vmatpush1.msra.mxu0 0.0
    %202 = vmatprep.subr.mxu0 0.0
    %203 = vmatpush1.msra.mxu0 0.0
    %204 = vmatprep.subr.mxu0 0.0
    %205 = vmatpush1.msra.mxu0 0.0
    %206 = vmatprep.subr.mxu0 0.0
    %207 = vmatpush1.msra.mxu0 0.0
    %208 = vmatprep.subr.mxu0 0.0
    %209 = vmatpush1.msra.mxu0 0.0
    %210 = vmatprep.subr.mxu0 0.0
    %211 = vmatpush1.msra.mxu0 0.0
    %212 = vmatprep.subr.mxu0 0.0
    %213 = vmatpush1.msra.mxu0 0.0
    %214 = vmatprep.subr.mxu0 0.0
    %215 = vmatpush1.msra.mxu0 0.0
    %216 = vmatprep.subr.mxu0 0.0
    %217 = vmatpush1.msra.mxu0 0.0
    %218 = vmatprep.subr.mxu0 0.0
    %219 = vmatpush1.msra.mxu0 0.0
    %220 = vmatprep.subr.mxu0 0.0
    %221 = vmatpush1.msra.mxu0 0.0
    %222 = vmatprep.subr.mxu0 0.0
    %223 = vmatpush1.msra.mxu0 0.0
    %224 = vmatprep.subr.mxu0 0.0
    %225 = vmatpush1.msra.mxu0 0.0
    %226 = vmatprep.subr.mxu0 0.0
    %227 = vmatpush1.msra.mxu0 0.0
    %228 = vmatprep.subr.mxu0 0.0
    %229 = vmatpush1.msra.mxu0 0.0
    %230 = vmatprep.subr.mxu0 0.0
    %231 = vmatpush1.msra.mxu0 0.0
    %232 = vmatprep.subr.mxu0 0.0
    %233 = vmatpush1.msra.mxu0 0.0
    %234 = vmatprep.subr.mxu0 0.0
    %235 = vmatpush1.msra.mxu0 0.0
    %236 = vmatprep.subr.mxu0 0.0
    %237 = vmatpush1.msra.mxu0 0.0
    %238 = vmatprep.subr.mxu0 0.0
    %239 = vmatpush1.msra.mxu0 0.0
    %240 = vmatprep.subr.mxu0 0.0
    %241 = vmatpush1.msra.mxu0 0.0
    %242 = vmatprep.subr.mxu0 0.0
    %243 = vmatpush1.msra.mxu0 0.0
    %244 = vmatprep.subr.mxu0 0.0
    %245 = vmatpush1.msra.mxu0 0.0
    %246 = vmatprep.subr.mxu0 0.0
    %247 = vmatpush1.msra.mxu0 0.0
    %248 = vmatprep.mubr.f32.mxu0 0.0
    %249 = vmatmul.mubr.f32.gmra.mrb[0].mxu0 %v179
    %v250 = vpop.f32.mrb[0].mxu0
    %v251 = vadd.f32 %v170, %v250
    %v252 = vpop.f32.mrb[0].mxu0
    %v253 = vadd.f32 %v174, %v252
    %254 = vmatprep.mubr.f32.mxu0 0.0
    %255 = vmatmul.mubr.f32.gmra.mrb[0].mxu0 %v182
    %v256 = vpop.f32.mrb[0].mxu0
    %v257 = vadd.f32 %v170, %v256
    %v258 = vpop.f32.mrb[0].mxu0
    %v259 = vadd.f32 %v174, %v258
    %260 = vdwg.mxu0
    %v263 = vcombine.low %v251, %v253
    %v265 = vunpack.c.l.s4 1983009808
    %v266 = vunpack.c.0.s8 %v265
    %v267 = vlaneseq
    %v268 = vshrl.u32 %v267, 7
    %v269 = vsub.s32 %v266, %v268
    %v270 = vrot.slane %v263, %v269
    %272 = vst [vmem:[#allocation2] sm:$0xf] %v270
    %v273 = vcombine.high %v270, %v270
    %s275 = scalar_lea.vmem [#allocation2], 4
    %276 = vst [vmem:[%s275] sm:$0xf] %v273
    %v277 = vcombine.high %v251, %v253
    %v279 = vunpack.c.l.s4 1983009808
    %v280 = vunpack.c.0.s8 %v279
    %v281 = vlaneseq
    %v282 = vshrl.u32 %v281, 7
    %v283 = vsub.s32 %v280, %v282
    %v284 = vrot.slane %v277, %v283
    %s286 = scalar_lea.vmem [#allocation2], 8
    %287 = vst [vmem:[%s286] sm:$0xf] %v284
    %v288 = vcombine.high %v284, %v284
    %s290 = scalar_lea.vmem [#allocation2], 12
    %291 = vst [vmem:[%s290] sm:$0xf] %v288
    %v294 = vcombine.low %v257, %v259
    %v296 = vunpack.c.l.s4 1983009808
    %v297 = vunpack.c.0.s8 %v296
    %v298 = vlaneseq
    %v299 = vshrl.u32 %v298, 7
    %v300 = vsub.s32 %v297, %v299
    %v301 = vrot.slane %v294, %v300
    %s303 = scalar_lea.vmem [#allocation2], 16
    %304 = vst [vmem:[%s303] sm:$0xf] %v301
    %v305 = vcombine.high %v301, %v301
    %s307 = scalar_lea.vmem [#allocation2], 20
    %308 = vst [vmem:[%s307] sm:$0xf] %v305
    %v309 = vcombine.high %v257, %v259
    %v311 = vunpack.c.l.s4 1983009808
    %v312 = vunpack.c.0.s8 %v311
    %v313 = vlaneseq
    %v314 = vshrl.u32 %v313, 7
    %v315 = vsub.s32 %v312, %v314
    %v316 = vrot.slane %v309, %v315
    %s318 = scalar_lea.vmem [#allocation2], 24
    %319 = vst [vmem:[%s318] sm:$0xf] %v316
    %v320 = vcombine.high %v316, %v316
    %s322 = scalar_lea.vmem [#allocation2], 28
    %323 = vst [vmem:[%s322] sm:$0xf] %v320
    %v324 = vld [vmem:[%s3] sm:$0xff]
    %v325 = vld [vmem:[%s3 + $0x8] sm:$0xff]
    %v326 = vld [vmem:[%s3 + $0x10] sm:$0xff]
    %v327 = vld [vmem:[%s3 + $0x18] sm:$0xff]
    %v328 = vld [vmem:[%s3 + $0x20] sm:$0xff]
    %v329 = vld [vmem:[%s3 + $0x28] sm:$0xff]
    %v330 = vld [vmem:[%s3 + $0x30] sm:$0xff]
    %v331 = vld [vmem:[%s3 + $0x38] sm:$0xff]
    %v332 = vld [vmem:[%s3 + $0x40] sm:$0xff]
    %v333 = vld [vmem:[%s3 + $0x48] sm:$0xff]
    %v334 = vld [vmem:[%s3 + $0x50] sm:$0xff]
    %v335 = vld [vmem:[%s3 + $0x58] sm:$0xff]
    %v336 = vld [vmem:[%s3 + $0x60] sm:$0xff]
    %v337 = vld [vmem:[%s3 + $0x68] sm:$0xff]
    %v338 = vld [vmem:[%s3 + $0x70] sm:$0xff]
    %v339 = vld [vmem:[%s3 + $0x78] sm:$0xff]
    %vm340 = vcmask 523264
    %v342 = vsel %vm340, 0.0, 0
    %344 = vmatprep.subr.mxu0 %v325
    %345 = vmatpush1.msra.mxu0 %v324
    %346 = vmatprep.subr.mxu0 %v327
    %347 = vmatpush1.msra.mxu0 %v326
    %348 = vmatprep.subr.mxu0 %v329
    %349 = vmatpush1.msra.mxu0 %v328
    %350 = vmatprep.subr.mxu0 %v331
    %351 = vmatpush1.msra.mxu0 %v330
    %352 = vmatprep.subr.mxu0 %v333
    %353 = vmatpush1.msra.mxu0 %v332
    %354 = vmatprep.subr.mxu0 %v335
    %355 = vmatpush1.msra.mxu0 %v334
    %356 = vmatprep.subr.mxu0 %v337
    %357 = vmatpush1.msra.mxu0 %v336
    %358 = vmatprep.subr.mxu0 %v339
    %359 = vmatpush1.msra.mxu0 %v338
    %360 = vmatprep.subr.mxu0 0.0
    %361 = vmatpush1.msra.mxu0 0.0
    %362 = vmatprep.subr.mxu0 0.0
    %363 = vmatpush1.msra.mxu0 0.0
    %364 = vmatprep.subr.mxu0 0.0
    %365 = vmatpush1.msra.mxu0 0.0
    %366 = vmatprep.subr.mxu0 0.0
    %367 = vmatpush1.msra.mxu0 0.0
    %368 = vmatprep.subr.mxu0 0.0
    %369 = vmatpush1.msra.mxu0 0.0
    %370 = vmatprep.subr.mxu0 0.0
    %371 = vmatpush1.msra.mxu0 0.0
    %372 = vmatprep.subr.mxu0 0.0
    %373 = vmatpush1.msra.mxu0 0.0
    %374 = vmatprep.subr.mxu0 0.0
    %375 = vmatpush1.msra.mxu0 0.0
    %376 = vmatprep.subr.mxu0 0.0
    %377 = vmatpush1.msra.mxu0 0.0
    %378 = vmatprep.subr.mxu0 0.0
    %379 = vmatpush1.msra.mxu0 0.0
    %380 = vmatprep.subr.mxu0 0.0
    %381 = vmatpush1.msra.mxu0 0.0
    %382 = vmatprep.subr.mxu0 0.0
    %383 = vmatpush1.msra.mxu0 0.0
    %384 = vmatprep.subr.mxu0 0.0
    %385 = vmatpush1.msra.mxu0 0.0
    %386 = vmatprep.subr.mxu0 0.0
    %387 = vmatpush1.msra.mxu0 0.0
    %388 = vmatprep.subr.mxu0 0.0
    %389 = vmatpush1.msra.mxu0 0.0
    %390 = vmatprep.subr.mxu0 0.0
    %391 = vmatpush1.msra.mxu0 0.0
    %392 = vmatprep.subr.mxu0 0.0
    %393 = vmatpush1.msra.mxu0 0.0
    %394 = vmatprep.subr.mxu0 0.0
    %395 = vmatpush1.msra.mxu0 0.0
    %396 = vmatprep.subr.mxu0 0.0
    %397 = vmatpush1.msra.mxu0 0.0
    %398 = vmatprep.subr.mxu0 0.0
    %399 = vmatpush1.msra.mxu0 0.0
    %400 = vmatprep.subr.mxu0 0.0
    %401 = vmatpush1.msra.mxu0 0.0
    %402 = vmatprep.subr.mxu0 0.0
    %403 = vmatpush1.msra.mxu0 0.0
    %404 = vmatprep.subr.mxu0 0.0
    %405 = vmatpush1.msra.mxu0 0.0
    %406 = vmatprep.subr.mxu0 0.0
    %407 = vmatpush1.msra.mxu0 0.0
    %408 = vmatprep.mubr.f32.mxu0 0.0
    %409 = vmatmul.mubr.f32.gmra.mrb[0].mxu0 %v342
    %v410 = vpop.f32.mrb[0].mxu0
    %v411 = vadd.f32 0.0, %v410
    %v412 = vpop.f32.mrb[0].mxu0
    %v413 = vadd.f32 0.0, %v412
    %414 = vdwg.mxu0
    %v415 = vld [vmem:[#allocation2] sm:$0xf]
    %v416 = vadd.f32 %v411, %v415
    %v417 = vld [vmem:[%s322] sm:$0xf]
    %v420 = vunpack.c.l.s4 1983009808
    %v421 = vunpack.c.0.s8 %v420
    %v422 = vlaneseq
    %v423 = vshrl.u32 %v422, 7
    %v424 = vsub.s32 %v421, %v423
    %v425 = vrot.slane %v417, %v424
    %v426 = vcombine.high %v425, %v425
    %v428 = vadd.f32 %v413, %v426
    %v429 = vxor.u32 %v416, 2147483648
    %v430 = vmul.f32 %v429, 1.442695
    %v431 = vpow.pop %v430
    %v432 = vadd.f32 %v431, 1.0
    %v433 = vrcp.pop %v432
    %v434 = vmul.f32 1.0, %v433
    %v435 = vtanh.pop %v416
    %v436 = vmul.f32 %v434, 0.0
    %438 = vrot.lane.b32.xlu0 %v435, 64
    %v439 = vpop.permute.xlu0 %438
    %v441 = vmul.f32 %v434, %v439
    %443 = vrot.lane.b32.xlu0 %v441, 32
    %v444 = vpop.permute.xlu0 %443
    %v446 = vadd.f32 %v436, %v444
    %v447 = vtanh.pop %v446
    %449 = vrot.lane.b32.xlu0 %v447, 64
    %v450 = vpop.permute.xlu0 %449
    %v452 = vmul.f32 %v434, %v450
    %v453 = vxor.u32 %v428, 2147483648
    %v454 = vmul.f32 %v453, 1.442695
    %v455 = vpow.pop %v454
    %v456 = vadd.f32 %v455, 1.0
    %v457 = vrcp.pop %v456
    %v458 = vmul.f32 1.0, %v457
    %v459 = vtanh.pop %v428
    %v460 = vmul.f32 %v458, 0.0
    %462 = vrot.lane.b32.xlu0 %v459, 64
    %v463 = vpop.permute.xlu0 %462
    %v465 = vmul.f32 %v458, %v463
    %467 = vrot.lane.b32.xlu0 %v465, 32
    %v468 = vpop.permute.xlu0 %467
    %v470 = vadd.f32 %v460, %v468
    %v471 = vtanh.pop %v470
    %473 = vrot.lane.b32.xlu0 %v471, 64
    %v474 = vpop.permute.xlu0 %473
    %v476 = vmul.f32 %v458, %v474
    %478 = vrot.lane.b32.xlu0 %v452, 32
    %v479 = vpop.permute.xlu0 %478
    %vm481 = vcmask 253952
    %482 = vst.msk [vmem:[#allocation3] sm:$0x1] %vm481, %v479
    %484 = vrot.lane.b32.xlu0 %v476, 32
    %v485 = vpop.permute.xlu0 %484
    %487 = vst.msk [vmem:[#allocation4 + $0x7] sm:$0x1] %vm481, %v485
    %vm488 = vcmask 254977
    %489 = vst.msk [vmem:[#allocation3 + $0x7] sm:$0x2] %vm488, %v479
    %490 = vst.msk [vmem:[#allocation4 + $0xe] sm:$0x2] %vm488, %v485
    %491 = vrot.lane.b32.xlu0 %v476, 64
    %v492 = vpop.permute.xlu0 %491
    %vm494 = vcmask 261120
    %v495 = vsel %vm494, %v479, %v492
    %v497 = vsel %vm340, %v495, 0
    %499 = vmatprep.subr.mxu0 %v325
    %500 = vmatpush1.msra.mxu0 %v324
    %501 = vmatprep.subr.mxu0 %v327
    %502 = vmatpush1.msra.mxu0 %v326
    %503 = vmatprep.subr.mxu0 %v329
    %504 = vmatpush1.msra.mxu0 %v328
    %505 = vmatprep.subr.mxu0 %v331
    %506 = vmatpush1.msra.mxu0 %v330
    %507 = vmatprep.subr.mxu0 %v333
    %508 = vmatpush1.msra.mxu0 %v332
    %509 = vmatprep.subr.mxu0 %v335
    %510 = vmatpush1.msra.mxu0 %v334
    %511 = vmatprep.subr.mxu0 %v337
    %512 = vmatpush1.msra.mxu0 %v336
    %513 = vmatprep.subr.mxu0 %v339
    %514 = vmatpush1.msra.mxu0 %v338
    %515 = vmatprep.subr.mxu0 0.0
    %516 = vmatpush1.msra.mxu0 0.0
    %517 = vmatprep.subr.mxu0 0.0
    %518 = vmatpush1.msra.mxu0 0.0
    %519 = vmatprep.subr.mxu0 0.0
    %520 = vmatpush1.msra.mxu0 0.0
    %521 = vmatprep.subr.mxu0 0.0
    %522 = vmatpush1.msra.mxu0 0.0
    %523 = vmatprep.subr.mxu0 0.0
    %524 = vmatpush1.msra.mxu0 0.0
    %525 = vmatprep.subr.mxu0 0.0
    %526 = vmatpush1.msra.mxu0 0.0
    %527 = vmatprep.subr.mxu0 0.0
    %528 = vmatpush1.msra.mxu0 0.0
    %529 = vmatprep.subr.mxu0 0.0
    %530 = vmatpush1.msra.mxu0 0.0
    %531 = vmatprep.subr.mxu0 0.0
    %532 = vmatpush1.msra.mxu0 0.0
    %533 = vmatprep.subr.mxu0 0.0
    %534 = vmatpush1.msra.mxu0 0.0
    %535 = vmatprep.subr.mxu0 0.0
    %536 = vmatpush1.msra.mxu0 0.0
    %537 = vmatprep.subr.mxu0 0.0
    %538 = vmatpush1.msra.mxu0 0.0
    %539 = vmatprep.subr.mxu0 0.0
    %540 = vmatpush1.msra.mxu0 0.0
    %541 = vmatprep.subr.mxu0 0.0
    %542 = vmatpush1.msra.mxu0 0.0
    %543 = vmatprep.subr.mxu0 0.0
    %544 = vmatpush1.msra.mxu0 0.0
    %545 = vmatprep.subr.mxu0 0.0
    %546 = vmatpush1.msra.mxu0 0.0
    %547 = vmatprep.subr.mxu0 0.0
    %548 = vmatpush1.msra.mxu0 0.0
    %549 = vmatprep.subr.mxu0 0.0
    %550 = vmatpush1.msra.mxu0 0.0
    %551 = vmatprep.subr.mxu0 0.0
    %552 = vmatpush1.msra.mxu0 0.0
    %553 = vmatprep.subr.mxu0 0.0
    %554 = vmatpush1.msra.mxu0 0.0
    %555 = vmatprep.subr.mxu0 0.0
    %556 = vmatpush1.msra.mxu0 0.0
    %557 = vmatprep.subr.mxu0 0.0
    %558 = vmatpush1.msra.mxu0 0.0
    %559 = vmatprep.subr.mxu0 0.0
    %560 = vmatpush1.msra.mxu0 0.0
    %561 = vmatprep.subr.mxu0 0.0
    %562 = vmatpush1.msra.mxu0 0.0
    %563 = vmatprep.mubr.f32.mxu0 0.0
    %564 = vmatmul.mubr.f32.gmra.mrb[0].mxu0 %v497
    %v565 = vpop.f32.mrb[0].mxu0
    %v566 = vadd.f32 0.0, %v565
    %v567 = vpop.f32.mrb[0].mxu0
    %v568 = vadd.f32 0.0, %v567
    %569 = vdwg.mxu0
    %v570 = vld [vmem:[%s275] sm:$0xf]
    %v571 = vadd.f32 %v566, %v570
    %v572 = vld [vmem:[%s318] sm:$0xf]
    %v575 = vunpack.c.l.s4 1983009808
    %v576 = vunpack.c.0.s8 %v575
    %v577 = vlaneseq
    %v578 = vshrl.u32 %v577, 7
    %v579 = vsub.s32 %v576, %v578
    %v580 = vrot.slane %v572, %v579
    %v581 = vcombine.high %v580, %v580
    %v583 = vadd.f32 %v568, %v581
    %v584 = vxor.u32 %v571, 2147483648
    %v585 = vmul.f32 %v584, 1.442695
    %v586 = vpow.pop %v585
    %v587 = vadd.f32 %v586, 1.0
    %v588 = vrcp.pop %v587
    %v589 = vmul.f32 1.0, %v588
    %v590 = vtanh.pop %v571
    %v591 = vmul.f32 %v589, %v446
    %593 = vrot.lane.b32.xlu0 %v590, 64
    %v594 = vpop.permute.xlu0 %593
    %v596 = vmul.f32 %v589, %v594
    %598 = vrot.lane.b32.xlu0 %v596, 32
    %v599 = vpop.permute.xlu0 %598
    %v601 = vadd.f32 %v591, %v599
    %v602 = vtanh.pop %v601
    %604 = vrot.lane.b32.xlu0 %v602, 64
    %v605 = vpop.permute.xlu0 %604
    %v607 = vmul.f32 %v589, %v605
    %v608 = vxor.u32 %v583, 2147483648
    %v609 = vmul.f32 %v608, 1.442695
    %v610 = vpow.pop %v609
    %v611 = vadd.f32 %v610, 1.0
    %v612 = vrcp.pop %v611
    %v613 = vmul.f32 1.0, %v612
    %v614 = vtanh.pop %v583
    %v615 = vmul.f32 %v613, %v470
    %617 = vrot.lane.b32.xlu0 %v614, 64
    %v618 = vpop.permute.xlu0 %617
    %v620 = vmul.f32 %v613, %v618
    %622 = vrot.lane.b32.xlu0 %v620, 32
    %v623 = vpop.permute.xlu0 %622
    %v625 = vadd.f32 %v615, %v623
    %v626 = vtanh.pop %v625
    %628 = vrot.lane.b32.xlu0 %v626, 64
    %v629 = vpop.permute.xlu0 %628
    %v631 = vmul.f32 %v613, %v629
    %633 = vrot.lane.b32.xlu0 %v607, 32
    %v634 = vpop.permute.xlu0 %633
    %636 = vst.msk [vmem:[#allocation3 + $0x1] sm:$0x1] %vm481, %v634
    %638 = vrot.lane.b32.xlu0 %v631, 32
    %v639 = vpop.permute.xlu0 %638
    %641 = vst.msk [vmem:[#allocation4 + $0x6] sm:$0x1] %vm481, %v639
    %642 = vst.msk [vmem:[#allocation3 + $0x8] sm:$0x2] %vm488, %v634
    %643 = vst.msk [vmem:[#allocation4 + $0xd] sm:$0x2] %vm488, %v639
    %644 = vrot.lane.b32.xlu0 %v631, 64
    %v645 = vpop.permute.xlu0 %644
    %v647 = vsel %vm494, %v634, %v645
    %v649 = vsel %vm340, %v647, 0
    %651 = vmatprep.subr.mxu0 %v325
    %652 = vmatpush1.msra.mxu0 %v324
    %653 = vmatprep.subr.mxu0 %v327
    %654 = vmatpush1.msra.mxu0 %v326
    %655 = vmatprep.subr.mxu0 %v329
    %656 = vmatpush1.msra.mxu0 %v328
    %657 = vmatprep.subr.mxu0 %v331
    %658 = vmatpush1.msra.mxu0 %v330
    %659 = vmatprep.subr.mxu0 %v333
    %660 = vmatpush1.msra.mxu0 %v332
    %661 = vmatprep.subr.mxu0 %v335
    %662 = vmatpush1.msra.mxu0 %v334
    %663 = vmatprep.subr.mxu0 %v337
    %664 = vmatpush1.msra.mxu0 %v336
    %665 = vmatprep.subr.mxu0 %v339
    %666 = vmatpush1.msra.mxu0 %v338
    %667 = vmatprep.subr.mxu0 0.0
    %668 = vmatpush1.msra.mxu0 0.0
    %669 = vmatprep.subr.mxu0 0.0
    %670 = vmatpush1.msra.mxu0 0.0
    %671 = vmatprep.subr.mxu0 0.0
    %672 = vmatpush1.msra.mxu0 0.0
    %673 = vmatprep.subr.mxu0 0.0
    %674 = vmatpush1.msra.mxu0 0.0
    %675 = vmatprep.subr.mxu0 0.0
    %676 = vmatpush1.msra.mxu0 0.0
    %677 = vmatprep.subr.mxu0 0.0
    %678 = vmatpush1.msra.mxu0 0.0
    %679 = vmatprep.subr.mxu0 0.0
    %680 = vmatpush1.msra.mxu0 0.0
    %681 = vmatprep.subr.mxu0 0.0
    %682 = vmatpush1.msra.mxu0 0.0
    %683 = vmatprep.subr.mxu0 0.0
    %684 = vmatpush1.msra.mxu0 0.0
    %685 = vmatprep.subr.mxu0 0.0
    %686 = vmatpush1.msra.mxu0 0.0
    %687 = vmatprep.subr.mxu0 0.0
    %688 = vmatpush1.msra.mxu0 0.0
    %689 = vmatprep.subr.mxu0 0.0
    %690 = vmatpush1.msra.mxu0 0.0
    %691 = vmatprep.subr.mxu0 0.0
    %692 = vmatpush1.msra.mxu0 0.0
    %693 = vmatprep.subr.mxu0 0.0
    %694 = vmatpush1.msra.mxu0 0.0
    %695 = vmatprep.subr.mxu0 0.0
    %696 = vmatpush1.msra.mxu0 0.0
    %697 = vmatprep.subr.mxu0 0.0
    %698 = vmatpush1.msra.mxu0 0.0
    %699 = vmatprep.subr.mxu0 0.0
    %700 = vmatpush1.msra.mxu0 0.0
    %701 = vmatprep.subr.mxu0 0.0
    %702 = vmatpush1.msra.mxu0 0.0
    %703 = vmatprep.subr.mxu0 0.0
    %704 = vmatpush1.msra.mxu0 0.0
    %705 = vmatprep.subr.mxu0 0.0
    %706 = vmatpush1.msra.mxu0 0.0
    %707 = vmatprep.subr.mxu0 0.0
    %708 = vmatpush1.msra.mxu0 0.0
    %709 = vmatprep.subr.mxu0 0.0
    %710 = vmatpush1.msra.mxu0 0.0
    %711 = vmatprep.subr.mxu0 0.0
    %712 = vmatpush1.msra.mxu0 0.0
    %713 = vmatprep.subr.mxu0 0.0
    %714 = vmatpush1.msra.mxu0 0.0
    %715 = vmatprep.mubr.f32.mxu0 0.0
    %716 = vmatmul.mubr.f32.gmra.mrb[0].mxu0 %v649
    %v717 = vpop.f32.mrb[0].mxu0
    %v718 = vadd.f32 0.0, %v717
    %v719 = vpop.f32.mrb[0].mxu0
    %v720 = vadd.f32 0.0, %v719
    %721 = vdwg.mxu0
    %v722 = vld [vmem:[%s286] sm:$0xf]
    %v723 = vadd.f32 %v718, %v722
    %v724 = vld [vmem:[%s307] sm:$0xf]
    %v727 = vunpack.c.l.s4 1983009808
    %v728 = vunpack.c.0.s8 %v727
    %v729 = vlaneseq
    %v730 = vshrl.u32 %v729, 7
    %v731 = vsub.s32 %v728, %v730
    %v732 = vrot.slane %v724, %v731
    %v733 = vcombine.high %v732, %v732
    %v735 = vadd.f32 %v720, %v733
    %v736 = vxor.u32 %v723, 2147483648
    %v737 = vmul.f32 %v736, 1.442695
    %v738 = vpow.pop %v737
    %v739 = vadd.f32 %v738, 1.0
    %v740 = vrcp.pop %v739
    %v741 = vmul.f32 1.0, %v740
    %v742 = vtanh.pop %v723
    %v743 = vmul.f32 %v741, %v601
    %745 = vrot.lane.b32.xlu0 %v742, 64
    %v746 = vpop.permute.xlu0 %745
    %v748 = vmul.f32 %v741, %v746
    %750 = vrot.lane.b32.xlu0 %v748, 32
    %v751 = vpop.permute.xlu0 %750
    %v753 = vadd.f32 %v743, %v751
    %v754 = vtanh.pop %v753
    %756 = vrot.lane.b32.xlu0 %v754, 64
    %v757 = vpop.permute.xlu0 %756
    %v759 = vmul.f32 %v741, %v757
    %v760 = vxor.u32 %v735, 2147483648
    %v761 = vmul.f32 %v760, 1.442695
    %v762 = vpow.pop %v761
    %v763 = vadd.f32 %v762, 1.0
    %v764 = vrcp.pop %v763
    %v765 = vmul.f32 1.0, %v764
    %v766 = vtanh.pop %v735
    %v767 = vmul.f32 %v765, %v625
    %769 = vrot.lane.b32.xlu0 %v766, 64
    %v770 = vpop.permute.xlu0 %769
    %v772 = vmul.f32 %v765, %v770
    %774 = vrot.lane.b32.xlu0 %v772, 32
    %v775 = vpop.permute.xlu0 %774
    %v777 = vadd.f32 %v767, %v775
    %v778 = vtanh.pop %v777
    %780 = vrot.lane.b32.xlu0 %v778, 64
    %v781 = vpop.permute.xlu0 %780
    %v783 = vmul.f32 %v765, %v781
    %785 = vrot.lane.b32.xlu0 %v759, 32
    %v786 = vpop.permute.xlu0 %785
    %788 = vst.msk [vmem:[#allocation3 + $0x2] sm:$0x1] %vm481, %v786
    %790 = vrot.lane.b32.xlu0 %v783, 32
    %v791 = vpop.permute.xlu0 %790
    %793 = vst.msk [vmem:[#allocation4 + $0x5] sm:$0x1] %vm481, %v791
    %794 = vst.msk [vmem:[#allocation3 + $0x9] sm:$0x2] %vm488, %v786
    %795 = vst.msk [vmem:[#allocation4 + $0xc] sm:$0x2] %vm488, %v791
    %796 = vrot.lane.b32.xlu0 %v783, 64
    %v797 = vpop.permute.xlu0 %796
    %v799 = vsel %vm494, %v786, %v797
    %v801 = vsel %vm340, %v799, 0
    %803 = vmatprep.subr.mxu0 %v325
    %804 = vmatpush1.msra.mxu0 %v324
    %805 = vmatprep.subr.mxu0 %v327
    %806 = vmatpush1.msra.mxu0 %v326
    %807 = vmatprep.subr.mxu0 %v329
    %808 = vmatpush1.msra.mxu0 %v328
    %809 = vmatprep.subr.mxu0 %v331
    %810 = vmatpush1.msra.mxu0 %v330
    %811 = vmatprep.subr.mxu0 %v333
    %812 = vmatpush1.msra.mxu0 %v332
    %813 = vmatprep.subr.mxu0 %v335
    %814 = vmatpush1.msra.mxu0 %v334
    %815 = vmatprep.subr.mxu0 %v337
    %816 = vmatpush1.msra.mxu0 %v336
    %817 = vmatprep.subr.mxu0 %v339
    %818 = vmatpush1.msra.mxu0 %v338
    %819 = vmatprep.subr.mxu0 0.0
    %820 = vmatpush1.msra.mxu0 0.0
    %821 = vmatprep.subr.mxu0 0.0
    %822 = vmatpush1.msra.mxu0 0.0
    %823 = vmatprep.subr.mxu0 0.0
    %824 = vmatpush1.msra.mxu0 0.0
    %825 = vmatprep.subr.mxu0 0.0
    %826 = vmatpush1.msra.mxu0 0.0
    %827 = vmatprep.subr.mxu0 0.0
    %828 = vmatpush1.msra.mxu0 0.0
    %829 = vmatprep.subr.mxu0 0.0
    %830 = vmatpush1.msra.mxu0 0.0
    %831 = vmatprep.subr.mxu0 0.0
    %832 = vmatpush1.msra.mxu0 0.0
    %833 = vmatprep.subr.mxu0 0.0
    %834 = vmatpush1.msra.mxu0 0.0
    %835 = vmatprep.subr.mxu0 0.0
    %836 = vmatpush1.msra.mxu0 0.0
    %837 = vmatprep.subr.mxu0 0.0
    %838 = vmatpush1.msra.mxu0 0.0
    %839 = vmatprep.subr.mxu0 0.0
    %840 = vmatpush1.msra.mxu0 0.0
    %841 = vmatprep.subr.mxu0 0.0
    %842 = vmatpush1.msra.mxu0 0.0
    %843 = vmatprep.subr.mxu0 0.0
    %844 = vmatpush1.msra.mxu0 0.0
    %845 = vmatprep.subr.mxu0 0.0
    %846 = vmatpush1.msra.mxu0 0.0
    %847 = vmatprep.subr.mxu0 0.0
    %848 = vmatpush1.msra.mxu0 0.0
    %849 = vmatprep.subr.mxu0 0.0
    %850 = vmatpush1.msra.mxu0 0.0
    %851 = vmatprep.subr.mxu0 0.0
    %852 = vmatpush1.msra.mxu0 0.0
    %853 = vmatprep.subr.mxu0 0.0
    %854 = vmatpush1.msra.mxu0 0.0
    %855 = vmatprep.subr.mxu0 0.0
    %856 = vmatpush1.msra.mxu0 0.0
    %857 = vmatprep.subr.mxu0 0.0
    %858 = vmatpush1.msra.mxu0 0.0
    %859 = vmatprep.subr.mxu0 0.0
    %860 = vmatpush1.msra.mxu0 0.0
    %861 = vmatprep.subr.mxu0 0.0
    %862 = vmatpush1.msra.mxu0 0.0
    %863 = vmatprep.subr.mxu0 0.0
    %864 = vmatpush1.msra.mxu0 0.0
    %865 = vmatprep.subr.mxu0 0.0
    %866 = vmatpush1.msra.mxu0 0.0
    %867 = vmatprep.mubr.f32.mxu0 0.0
    %868 = vmatmul.mubr.f32.gmra.mrb[0].mxu0 %v801
    %v869 = vpop.f32.mrb[0].mxu0
    %v870 = vadd.f32 0.0, %v869
    %v871 = vpop.f32.mrb[0].mxu0
    %v872 = vadd.f32 0.0, %v871
    %873 = vdwg.mxu0
    %v874 = vld [vmem:[%s290] sm:$0xf]
    %v875 = vadd.f32 %v870, %v874
    %v876 = vld [vmem:[%s303] sm:$0xf]
    %v879 = vunpack.c.l.s4 1983009808
    %v880 = vunpack.c.0.s8 %v879
    %v881 = vlaneseq
    %v882 = vshrl.u32 %v881, 7
    %v883 = vsub.s32 %v880, %v882
    %v884 = vrot.slane %v876, %v883
    %v885 = vcombine.high %v884, %v884
    %v887 = vadd.f32 %v872, %v885
    %v888 = vxor.u32 %v875, 2147483648
    %v889 = vmul.f32 %v888, 1.442695
    %v890 = vpow.pop %v889
    %v891 = vadd.f32 %v890, 1.0
    %v892 = vrcp.pop %v891
    %v893 = vmul.f32 1.0, %v892
    %v894 = vtanh.pop %v875
    %v895 = vmul.f32 %v893, %v753
    %897 = vrot.lane.b32.xlu0 %v894, 64
    %v898 = vpop.permute.xlu0 %897
    %v900 = vmul.f32 %v893, %v898
    %902 = vrot.lane.b32.xlu0 %v900, 32
    %v903 = vpop.permute.xlu0 %902
    %v905 = vadd.f32 %v895, %v903
    %v906 = vtanh.pop %v905
    %908 = vrot.lane.b32.xlu0 %v906, 64
    %v909 = vpop.permute.xlu0 %908
    %v911 = vmul.f32 %v893, %v909
    %v912 = vxor.u32 %v887, 2147483648
    %v913 = vmul.f32 %v912, 1.442695
    %v914 = vpow.pop %v913
    %v915 = vadd.f32 %v914, 1.0
    %v916 = vrcp.pop %v915
    %v917 = vmul.f32 1.0, %v916
    %v918 = vtanh.pop %v887
    %v919 = vmul.f32 %v917, %v777
    %921 = vrot.lane.b32.xlu0 %v918, 64
    %v922 = vpop.permute.xlu0 %921
    %v924 = vmul.f32 %v917, %v922
    %926 = vrot.lane.b32.xlu0 %v924, 32
    %v927 = vpop.permute.xlu0 %926
    %v929 = vadd.f32 %v919, %v927
    %v930 = vtanh.pop %v929
    %932 = vrot.lane.b32.xlu0 %v930, 64
    %v933 = vpop.permute.xlu0 %932
    %v935 = vmul.f32 %v917, %v933
    %937 = vrot.lane.b32.xlu0 %v911, 32
    %v938 = vpop.permute.xlu0 %937
    %940 = vst.msk [vmem:[#allocation3 + $0x3] sm:$0x1] %vm481, %v938
    %942 = vrot.lane.b32.xlu0 %v935, 32
    %v943 = vpop.permute.xlu0 %942
    %945 = vst.msk [vmem:[#allocation4 + $0x4] sm:$0x1] %vm481, %v943
    %946 = vst.msk [vmem:[#allocation3 + $0xa] sm:$0x2] %vm488, %v938
    %947 = vst.msk [vmem:[#allocation4 + $0xb] sm:$0x2] %vm488, %v943
    %948 = vrot.lane.b32.xlu0 %v935, 64
    %v949 = vpop.permute.xlu0 %948
    %v951 = vsel %vm494, %v938, %v949
    %v953 = vsel %vm340, %v951, 0
    %955 = vmatprep.subr.mxu0 %v325
    %956 = vmatpush1.msra.mxu0 %v324
    %957 = vmatprep.subr.mxu0 %v327
    %958 = vmatpush1.msra.mxu0 %v326
    %959 = vmatprep.subr.mxu0 %v329
    %960 = vmatpush1.msra.mxu0 %v328
    %961 = vmatprep.subr.mxu0 %v331
    %962 = vmatpush1.msra.mxu0 %v330
    %963 = vmatprep.subr.mxu0 %v333
    %964 = vmatpush1.msra.mxu0 %v332
    %965 = vmatprep.subr.mxu0 %v335
    %966 = vmatpush1.msra.mxu0 %v334
    %967 = vmatprep.subr.mxu0 %v337
    %968 = vmatpush1.msra.mxu0 %v336
    %969 = vmatprep.subr.mxu0 %v339
    %970 = vmatpush1.msra.mxu0 %v338
    %971 = vmatprep.subr.mxu0 0.0
    %972 = vmatpush1.msra.mxu0 0.0
    %973 = vmatprep.subr.mxu0 0.0
    %974 = vmatpush1.msra.mxu0 0.0
    %975 = vmatprep.subr.mxu0 0.0
    %976 = vmatpush1.msra.mxu0 0.0
    %977 = vmatprep.subr.mxu0 0.0
    %978 = vmatpush1.msra.mxu0 0.0
    %979 = vmatprep.subr.mxu0 0.0
    %980 = vmatpush1.msra.mxu0 0.0
    %981 = vmatprep.subr.mxu0 0.0
    %982 = vmatpush1.msra.mxu0 0.0
    %983 = vmatprep.subr.mxu0 0.0
    %984 = vmatpush1.msra.mxu0 0.0
    %985 = vmatprep.subr.mxu0 0.0
    %986 = vmatpush1.msra.mxu0 0.0
    %987 = vmatprep.subr.mxu0 0.0
    %988 = vmatpush1.msra.mxu0 0.0
    %989 = vmatprep.subr.mxu0 0.0
    %990 = vmatpush1.msra.mxu0 0.0
    %991 = vmatprep.subr.mxu0 0.0
    %992 = vmatpush1.msra.mxu0 0.0
    %993 = vmatprep.subr.mxu0 0.0
    %994 = vmatpush1.msra.mxu0 0.0
    %995 = vmatprep.subr.mxu0 0.0
    %996 = vmatpush1.msra.mxu0 0.0
    %997 = vmatprep.subr.mxu0 0.0
    %998 = vmatpush1.msra.mxu0 0.0
    %999 = vmatprep.subr.mxu0 0.0
    %1000 = vmatpush1.msra.mxu0 0.0
    %1001 = vmatprep.subr.mxu0 0.0
    %1002 = vmatpush1.msra.mxu0 0.0
    %1003 = vmatprep.subr.mxu0 0.0
    %1004 = vmatpush1.msra.mxu0 0.0
    %1005 = vmatprep.subr.mxu0 0.0
    %1006 = vmatpush1.msra.mxu0 0.0
    %1007 = vmatprep.subr.mxu0 0.0
    %1008 = vmatpush1.msra.mxu0 0.0
    %1009 = vmatprep.subr.mxu0 0.0
    %1010 = vmatpush1.msra.mxu0 0.0
    %1011 = vmatprep.subr.mxu0 0.0
    %1012 = vmatpush1.msra.mxu0 0.0
    %1013 = vmatprep.subr.mxu0 0.0
    %1014 = vmatpush1.msra.mxu0 0.0
    %1015 = vmatprep.subr.mxu0 0.0
    %1016 = vmatpush1.msra.mxu0 0.0
    %1017 = vmatprep.subr.mxu0 0.0
    %1018 = vmatpush1.msra.mxu0 0.0
    %1019 = vmatprep.mubr.f32.mxu0 0.0
    %1020 = vmatmul.mubr.f32.gmra.mrb[0].mxu0 %v953
    %v1021 = vpop.f32.mrb[0].mxu0
    %v1022 = vadd.f32 0.0, %v1021
    %v1023 = vpop.f32.mrb[0].mxu0
    %v1024 = vadd.f32 0.0, %v1023
    %1025 = vdwg.mxu0
    %v1026 = vld [vmem:[%s303] sm:$0xf]
    %v1027 = vadd.f32 %v1022, %v1026
    %v1028 = vld [vmem:[%s290] sm:$0xf]
    %v1031 = vunpack.c.l.s4 1983009808
    %v1032 = vunpack.c.0.s8 %v1031
    %v1033 = vlaneseq
    %v1034 = vshrl.u32 %v1033, 7
    %v1035 = vsub.s32 %v1032, %v1034
    %v1036 = vrot.slane %v1028, %v1035
    %v1037 = vcombine.high %v1036, %v1036
    %v1039 = vadd.f32 %v1024, %v1037
    %v1040 = vxor.u32 %v1027, 2147483648
    %v1041 = vmul.f32 %v1040, 1.442695
    %v1042 = vpow.pop %v1041
    %v1043 = vadd.f32 %v1042, 1.0
    %v1044 = vrcp.pop %v1043
    %v1045 = vmul.f32 1.0, %v1044
    %v1046 = vtanh.pop %v1027
    %v1047 = vmul.f32 %v1045, %v905
    %1049 = vrot.lane.b32.xlu0 %v1046, 64
    %v1050 = vpop.permute.xlu0 %1049
    %v1052 = vmul.f32 %v1045, %v1050
    %1054 = vrot.lane.b32.xlu0 %v1052, 32
    %v1055 = vpop.permute.xlu0 %1054
    %v1057 = vadd.f32 %v1047, %v1055
    %v1058 = vtanh.pop %v1057
    %1060 = vrot.lane.b32.xlu0 %v1058, 64
    %v1061 = vpop.permute.xlu0 %1060
    %v1063 = vmul.f32 %v1045, %v1061
    %v1064 = vxor.u32 %v1039, 2147483648
    %v1065 = vmul.f32 %v1064, 1.442695
    %v1066 = vpow.pop %v1065
    %v1067 = vadd.f32 %v1066, 1.0
    %v1068 = vrcp.pop %v1067
    %v1069 = vmul.f32 1.0, %v1068
    %v1070 = vtanh.pop %v1039
    %v1071 = vmul.f32 %v1069, %v929
    %1073 = vrot.lane.b32.xlu0 %v1070, 64
    %v1074 = vpop.permute.xlu0 %1073
    %v1076 = vmul.f32 %v1069, %v1074
    %1078 = vrot.lane.b32.xlu0 %v1076, 32
    %v1079 = vpop.permute.xlu0 %1078
    %v1081 = vadd.f32 %v1071, %v1079
    %v1082 = vtanh.pop %v1081
    %1084 = vrot.lane.b32.xlu0 %v1082, 64
    %v1085 = vpop.permute.xlu0 %1084
    %v1087 = vmul.f32 %v1069, %v1085
    %1089 = vrot.lane.b32.xlu0 %v1063, 32
    %v1090 = vpop.permute.xlu0 %1089
    %1092 = vst.msk [vmem:[#allocation3 + $0x4] sm:$0x1] %vm481, %v1090
    %1094 = vrot.lane.b32.xlu0 %v1087, 32
    %v1095 = vpop.permute.xlu0 %1094
    %1097 = vst.msk [vmem:[#allocation4 + $0x3] sm:$0x1] %vm481, %v1095
    %1098 = vst.msk [vmem:[#allocation3 + $0xb] sm:$0x2] %vm488, %v1090
    %1099 = vst.msk [vmem:[#allocation4 + $0xa] sm:$0x2] %vm488, %v1095
    %1100 = vrot.lane.b32.xlu0 %v1087, 64
    %v1101 = vpop.permute.xlu0 %1100
    %v1103 = vsel %vm494, %v1090, %v1101
    %v1105 = vsel %vm340, %v1103, 0
    %1107 = vmatprep.subr.mxu0 %v325
    %1108 = vmatpush1.msra.mxu0 %v324
    %1109 = vmatprep.subr.mxu0 %v327
    %1110 = vmatpush1.msra.mxu0 %v326
    %1111 = vmatprep.subr.mxu0 %v329
    %1112 = vmatpush1.msra.mxu0 %v328
    %1113 = vmatprep.subr.mxu0 %v331
    %1114 = vmatpush1.msra.mxu0 %v330
    %1115 = vmatprep.subr.mxu0 %v333
    %1116 = vmatpush1.msra.mxu0 %v332
    %1117 = vmatprep.subr.mxu0 %v335
    %1118 = vmatpush1.msra.mxu0 %v334
    %1119 = vmatprep.subr.mxu0 %v337
    %1120 = vmatpush1.msra.mxu0 %v336
    %1121 = vmatprep.subr.mxu0 %v339
    %1122 = vmatpush1.msra.mxu0 %v338
    %1123 = vmatprep.subr.mxu0 0.0
    %1124 = vmatpush1.msra.mxu0 0.0
    %1125 = vmatprep.subr.mxu0 0.0
    %1126 = vmatpush1.msra.mxu0 0.0
    %1127 = vmatprep.subr.mxu0 0.0
    %1128 = vmatpush1.msra.mxu0 0.0
    %1129 = vmatprep.subr.mxu0 0.0
    %1130 = vmatpush1.msra.mxu0 0.0
    %1131 = vmatprep.subr.mxu0 0.0
    %1132 = vmatpush1.msra.mxu0 0.0
    %1133 = vmatprep.subr.mxu0 0.0
    %1134 = vmatpush1.msra.mxu0 0.0
    %1135 = vmatprep.subr.mxu0 0.0
    %1136 = vmatpush1.msra.mxu0 0.0
    %1137 = vmatprep.subr.mxu0 0.0
    %1138 = vmatpush1.msra.mxu0 0.0
    %1139 = vmatprep.subr.mxu0 0.0
    %1140 = vmatpush1.msra.mxu0 0.0
    %1141 = vmatprep.subr.mxu0 0.0
    %1142 = vmatpush1.msra.mxu0 0.0
    %1143 = vmatprep.subr.mxu0 0.0
    %1144 = vmatpush1.msra.mxu0 0.0
    %1145 = vmatprep.subr.mxu0 0.0
    %1146 = vmatpush1.msra.mxu0 0.0
    %1147 = vmatprep.subr.mxu0 0.0
    %1148 = vmatpush1.msra.mxu0 0.0
    %1149 = vmatprep.subr.mxu0 0.0
    %1150 = vmatpush1.msra.mxu0 0.0
    %1151 = vmatprep.subr.mxu0 0.0
    %1152 = vmatpush1.msra.mxu0 0.0
    %1153 = vmatprep.subr.mxu0 0.0
    %1154 = vmatpush1.msra.mxu0 0.0
    %1155 = vmatprep.subr.mxu0 0.0
    %1156 = vmatpush1.msra.mxu0 0.0
    %1157 = vmatprep.subr.mxu0 0.0
    %1158 = vmatpush1.msra.mxu0 0.0
    %1159 = vmatprep.subr.mxu0 0.0
    %1160 = vmatpush1.msra.mxu0 0.0
    %1161 = vmatprep.subr.mxu0 0.0
    %1162 = vmatpush1.msra.mxu0 0.0
    %1163 = vmatprep.subr.mxu0 0.0
    %1164 = vmatpush1.msra.mxu0 0.0
    %1165 = vmatprep.subr.mxu0 0.0
    %1166 = vmatpush1.msra.mxu0 0.0
    %1167 = vmatprep.subr.mxu0 0.0
    %1168 = vmatpush1.msra.mxu0 0.0
    %1169 = vmatprep.subr.mxu0 0.0
    %1170 = vmatpush1.msra.mxu0 0.0
    %1171 = vmatprep.mubr.f32.mxu0 0.0
    %1172 = vmatmul.mubr.f32.gmra.mrb[0].mxu0 %v1105
    %v1173 = vpop.f32.mrb[0].mxu0
    %v1174 = vadd.f32 0.0, %v1173
    %v1175 = vpop.f32.mrb[0].mxu0
    %v1176 = vadd.f32 0.0, %v1175
    %1177 = vdwg.mxu0
    %v1178 = vld [vmem:[%s307] sm:$0xf]
    %v1179 = vadd.f32 %v1174, %v1178
    %v1180 = vld [vmem:[%s286] sm:$0xf]
    %v1183 = vunpack.c.l.s4 1983009808
    %v1184 = vunpack.c.0.s8 %v1183
    %v1185 = vlaneseq
    %v1186 = vshrl.u32 %v1185, 7
    %v1187 = vsub.s32 %v1184, %v1186
    %v1188 = vrot.slane %v1180, %v1187
    %v1189 = vcombine.high %v1188, %v1188
    %v1191 = vadd.f32 %v1176, %v1189
    %v1192 = vxor.u32 %v1179, 2147483648
    %v1193 = vmul.f32 %v1192, 1.442695
    %v1194 = vpow.pop %v1193
    %v1195 = vadd.f32 %v1194, 1.0
    %v1196 = vrcp.pop %v1195
    %v1197 = vmul.f32 1.0, %v1196
    %v1198 = vtanh.pop %v1179
    %v1199 = vmul.f32 %v1197, %v1057
    %1201 = vrot.lane.b32.xlu0 %v1198, 64
    %v1202 = vpop.permute.xlu0 %1201
    %v1204 = vmul.f32 %v1197, %v1202
    %1206 = vrot.lane.b32.xlu0 %v1204, 32
    %v1207 = vpop.permute.xlu0 %1206
    %v1209 = vadd.f32 %v1199, %v1207
    %v1210 = vtanh.pop %v1209
    %1212 = vrot.lane.b32.xlu0 %v1210, 64
    %v1213 = vpop.permute.xlu0 %1212
    %v1215 = vmul.f32 %v1197, %v1213
    %v1216 = vxor.u32 %v1191, 2147483648
    %v1217 = vmul.f32 %v1216, 1.442695
    %v1218 = vpow.pop %v1217
    %v1219 = vadd.f32 %v1218, 1.0
    %v1220 = vrcp.pop %v1219
    %v1221 = vmul.f32 1.0, %v1220
    %v1222 = vtanh.pop %v1191
    %v1223 = vmul.f32 %v1221, %v1081
    %1225 = vrot.lane.b32.xlu0 %v1222, 64
    %v1226 = vpop.permute.xlu0 %1225
    %v1228 = vmul.f32 %v1221, %v1226
    %1230 = vrot.lane.b32.xlu0 %v1228, 32
    %v1231 = vpop.permute.xlu0 %1230
    %v1233 = vadd.f32 %v1223, %v1231
    %v1234 = vtanh.pop %v1233
    %1236 = vrot.lane.b32.xlu0 %v1234, 64
    %v1237 = vpop.permute.xlu0 %1236
    %v1239 = vmul.f32 %v1221, %v1237
    %1241 = vrot.lane.b32.xlu0 %v1215, 32
    %v1242 = vpop.permute.xlu0 %1241
    %1244 = vst.msk [vmem:[#allocation3 + $0x5] sm:$0x1] %vm481, %v1242
    %1246 = vrot.lane.b32.xlu0 %v1239, 32
    %v1247 = vpop.permute.xlu0 %1246
    %1249 = vst.msk [vmem:[#allocation4 + $0x2] sm:$0x1] %vm481, %v1247
    %1250 = vst.msk [vmem:[#allocation3 + $0xc] sm:$0x2] %vm488, %v1242
    %1251 = vst.msk [vmem:[#allocation4 + $0x9] sm:$0x2] %vm488, %v1247
    %1252 = vrot.lane.b32.xlu0 %v1239, 64
    %v1253 = vpop.permute.xlu0 %1252
    %v1255 = vsel %vm494, %v1242, %v1253
    %v1257 = vsel %vm340, %v1255, 0
    %1259 = vmatprep.subr.mxu0 %v325
    %1260 = vmatpush1.msra.mxu0 %v324
    %1261 = vmatprep.subr.mxu0 %v327
    %1262 = vmatpush1.msra.mxu0 %v326
    %1263 = vmatprep.subr.mxu0 %v329
    %1264 = vmatpush1.msra.mxu0 %v328
    %1265 = vmatprep.subr.mxu0 %v331
    %1266 = vmatpush1.msra.mxu0 %v330
    %1267 = vmatprep.subr.mxu0 %v333
    %1268 = vmatpush1.msra.mxu0 %v332
    %1269 = vmatprep.subr.mxu0 %v335
    %1270 = vmatpush1.msra.mxu0 %v334
    %1271 = vmatprep.subr.mxu0 %v337
    %1272 = vmatpush1.msra.mxu0 %v336
    %1273 = vmatprep.subr.mxu0 %v339
    %1274 = vmatpush1.msra.mxu0 %v338
    %1275 = vmatprep.subr.mxu0 0.0
    %1276 = vmatpush1.msra.mxu0 0.0
    %1277 = vmatprep.subr.mxu0 0.0
    %1278 = vmatpush1.msra.mxu0 0.0
    %1279 = vmatprep.subr.mxu0 0.0
    %1280 = vmatpush1.msra.mxu0 0.0
    %1281 = vmatprep.subr.mxu0 0.0
    %1282 = vmatpush1.msra.mxu0 0.0
    %1283 = vmatprep.subr.mxu0 0.0
    %1284 = vmatpush1.msra.mxu0 0.0
    %1285 = vmatprep.subr.mxu0 0.0
    %1286 = vmatpush1.msra.mxu0 0.0
    %1287 = vmatprep.subr.mxu0 0.0
    %1288 = vmatpush1.msra.mxu0 0.0
    %1289 = vmatprep.subr.mxu0 0.0
    %1290 = vmatpush1.msra.mxu0 0.0
    %1291 = vmatprep.subr.mxu0 0.0
    %1292 = vmatpush1.msra.mxu0 0.0
    %1293 = vmatprep.subr.mxu0 0.0
    %1294 = vmatpush1.msra.mxu0 0.0
    %1295 = vmatprep.subr.mxu0 0.0
    %1296 = vmatpush1.msra.mxu0 0.0
    %1297 = vmatprep.subr.mxu0 0.0
    %1298 = vmatpush1.msra.mxu0 0.0
    %1299 = vmatprep.subr.mxu0 0.0
    %1300 = vmatpush1.msra.mxu0 0.0
    %1301 = vmatprep.subr.mxu0 0.0
    %1302 = vmatpush1.msra.mxu0 0.0
    %1303 = vmatprep.subr.mxu0 0.0
    %1304 = vmatpush1.msra.mxu0 0.0
    %1305 = vmatprep.subr.mxu0 0.0
    %1306 = vmatpush1.msra.mxu0 0.0
    %1307 = vmatprep.subr.mxu0 0.0
    %1308 = vmatpush1.msra.mxu0 0.0
    %1309 = vmatprep.subr.mxu0 0.0
    %1310 = vmatpush1.msra.mxu0 0.0
    %1311 = vmatprep.subr.mxu0 0.0
    %1312 = vmatpush1.msra.mxu0 0.0
    %1313 = vmatprep.subr.mxu0 0.0
    %1314 = vmatpush1.msra.mxu0 0.0
    %1315 = vmatprep.subr.mxu0 0.0
    %1316 = vmatpush1.msra.mxu0 0.0
    %1317 = vmatprep.subr.mxu0 0.0
    %1318 = vmatpush1.msra.mxu0 0.0
    %1319 = vmatprep.subr.mxu0 0.0
    %1320 = vmatpush1.msra.mxu0 0.0
    %1321 = vmatprep.subr.mxu0 0.0
    %1322 = vmatpush1.msra.mxu0 0.0
    %1323 = vmatprep.mubr.f32.mxu0 0.0
    %1324 = vmatmul.mubr.f32.gmra.mrb[0].mxu0 %v1257
    %v1325 = vpop.f32.mrb[0].mxu0
    %v1326 = vadd.f32 0.0, %v1325
    %v1327 = vpop.f32.mrb[0].mxu0
    %v1328 = vadd.f32 0.0, %v1327
    %1329 = vdwg.mxu0
    %v1330 = vld [vmem:[%s318] sm:$0xf]
    %v1331 = vadd.f32 %v1326, %v1330
    %v1332 = vld [vmem:[%s275] sm:$0xf]
    %v1335 = vunpack.c.l.s4 1983009808
    %v1336 = vunpack.c.0.s8 %v1335
    %v1337 = vlaneseq
    %v1338 = vshrl.u32 %v1337, 7
    %v1339 = vsub.s32 %v1336, %v1338
    %v1340 = vrot.slane %v1332, %v1339
    %v1341 = vcombine.high %v1340, %v1340
    %v1343 = vadd.f32 %v1328, %v1341
    %v1344 = vxor.u32 %v1331, 2147483648
    %v1345 = vmul.f32 %v1344, 1.442695
    %v1346 = vpow.pop %v1345
    %v1347 = vadd.f32 %v1346, 1.0
    %v1348 = vrcp.pop %v1347
    %v1349 = vmul.f32 1.0, %v1348
    %v1350 = vtanh.pop %v1331
    %v1351 = vmul.f32 %v1349, %v1209
    %1353 = vrot.lane.b32.xlu0 %v1350, 64
    %v1354 = vpop.permute.xlu0 %1353
    %v1356 = vmul.f32 %v1349, %v1354
    %1358 = vrot.lane.b32.xlu0 %v1356, 32
    %v1359 = vpop.permute.xlu0 %1358
    %v1361 = vadd.f32 %v1351, %v1359
    %v1362 = vtanh.pop %v1361
    %1364 = vrot.lane.b32.xlu0 %v1362, 64
    %v1365 = vpop.permute.xlu0 %1364
    %v1367 = vmul.f32 %v1349, %v1365
    %v1368 = vxor.u32 %v1343, 2147483648
    %v1369 = vmul.f32 %v1368, 1.442695
    %v1370 = vpow.pop %v1369
    %v1371 = vadd.f32 %v1370, 1.0
    %v1372 = vrcp.pop %v1371
    %v1373 = vmul.f32 1.0, %v1372
    %v1374 = vtanh.pop %v1343
    %v1375 = vmul.f32 %v1373, %v1233
    %1377 = vrot.lane.b32.xlu0 %v1374, 64
    %v1378 = vpop.permute.xlu0 %1377
    %v1380 = vmul.f32 %v1373, %v1378
    %1382 = vrot.lane.b32.xlu0 %v1380, 32
    %v1383 = vpop.permute.xlu0 %1382
    %v1385 = vadd.f32 %v1375, %v1383
    %v1386 = vtanh.pop %v1385
    %1388 = vrot.lane.b32.xlu0 %v1386, 64
    %v1389 = vpop.permute.xlu0 %1388
    %v1391 = vmul.f32 %v1373, %v1389
    %1393 = vrot.lane.b32.xlu0 %v1367, 32
    %v1394 = vpop.permute.xlu0 %1393
    %1396 = vst.msk [vmem:[#allocation3 + $0x6] sm:$0x1] %vm481, %v1394
    %1398 = vrot.lane.b32.xlu0 %v1391, 32
    %v1399 = vpop.permute.xlu0 %1398
    %1401 = vst.msk [vmem:[#allocation4 + $0x1] sm:$0x1] %vm481, %v1399
    %1402 = vst.msk [vmem:[#allocation3 + $0xd] sm:$0x2] %vm488, %v1394
    %1403 = vst.msk [vmem:[#allocation4 + $0x8] sm:$0x2] %vm488, %v1399
    %1404 = vrot.lane.b32.xlu0 %v1391, 64
    %v1405 = vpop.permute.xlu0 %1404
    %v1407 = vsel %vm494, %v1394, %v1405
    %v1409 = vsel %vm340, %v1407, 0
    %1411 = vmatprep.subr.mxu0 %v325
    %1412 = vmatpush1.msra.mxu0 %v324
    %1413 = vmatprep.subr.mxu0 %v327
    %1414 = vmatpush1.msra.mxu0 %v326
    %1415 = vmatprep.subr.mxu0 %v329
    %1416 = vmatpush1.msra.mxu0 %v328
    %1417 = vmatprep.subr.mxu0 %v331
    %1418 = vmatpush1.msra.mxu0 %v330
    %1419 = vmatprep.subr.mxu0 %v333
    %1420 = vmatpush1.msra.mxu0 %v332
    %1421 = vmatprep.subr.mxu0 %v335
    %1422 = vmatpush1.msra.mxu0 %v334
    %1423 = vmatprep.subr.mxu0 %v337
    %1424 = vmatpush1.msra.mxu0 %v336
    %1425 = vmatprep.subr.mxu0 %v339
    %1426 = vmatpush1.msra.mxu0 %v338
    %1427 = vmatprep.subr.mxu0 0.0
    %1428 = vmatpush1.msra.mxu0 0.0
    %1429 = vmatprep.subr.mxu0 0.0
    %1430 = vmatpush1.msra.mxu0 0.0
    %1431 = vmatprep.subr.mxu0 0.0
    %1432 = vmatpush1.msra.mxu0 0.0
    %1433 = vmatprep.subr.mxu0 0.0
    %1434 = vmatpush1.msra.mxu0 0.0
    %1435 = vmatprep.subr.mxu0 0.0
    %1436 = vmatpush1.msra.mxu0 0.0
    %1437 = vmatprep.subr.mxu0 0.0
    %1438 = vmatpush1.msra.mxu0 0.0
    %1439 = vmatprep.subr.mxu0 0.0
    %1440 = vmatpush1.msra.mxu0 0.0
    %1441 = vmatprep.subr.mxu0 0.0
    %1442 = vmatpush1.msra.mxu0 0.0
    %1443 = vmatprep.subr.mxu0 0.0
    %1444 = vmatpush1.msra.mxu0 0.0
    %1445 = vmatprep.subr.mxu0 0.0
    %1446 = vmatpush1.msra.mxu0 0.0
    %1447 = vmatprep.subr.mxu0 0.0
    %1448 = vmatpush1.msra.mxu0 0.0
    %1449 = vmatprep.subr.mxu0 0.0
    %1450 = vmatpush1.msra.mxu0 0.0
    %1451 = vmatprep.subr.mxu0 0.0
    %1452 = vmatpush1.msra.mxu0 0.0
    %1453 = vmatprep.subr.mxu0 0.0
    %1454 = vmatpush1.msra.mxu0 0.0
    %1455 = vmatprep.subr.mxu0 0.0
    %1456 = vmatpush1.msra.mxu0 0.0
    %1457 = vmatprep.subr.mxu0 0.0
    %1458 = vmatpush1.msra.mxu0 0.0
    %1459 = vmatprep.subr.mxu0 0.0
    %1460 = vmatpush1.msra.mxu0 0.0
    %1461 = vmatprep.subr.mxu0 0.0
    %1462 = vmatpush1.msra.mxu0 0.0
    %1463 = vmatprep.subr.mxu0 0.0
    %1464 = vmatpush1.msra.mxu0 0.0
    %1465 = vmatprep.subr.mxu0 0.0
    %1466 = vmatpush1.msra.mxu0 0.0
    %1467 = vmatprep.subr.mxu0 0.0
    %1468 = vmatpush1.msra.mxu0 0.0
    %1469 = vmatprep.subr.mxu0 0.0
    %1470 = vmatpush1.msra.mxu0 0.0
    %1471 = vmatprep.subr.mxu0 0.0
    %1472 = vmatpush1.msra.mxu0 0.0
    %1473 = vmatprep.subr.mxu0 0.0
    %1474 = vmatpush1.msra.mxu0 0.0
    %1475 = vmatprep.mubr.f32.mxu0 0.0
    %1476 = vmatmul.mubr.f32.gmra.mrb[0].mxu0 %v1409
    %v1477 = vpop.f32.mrb[0].mxu0
    %v1478 = vadd.f32 0.0, %v1477
    %v1479 = vpop.f32.mrb[0].mxu0
    %v1480 = vadd.f32 0.0, %v1479
    %1481 = vdwg.mxu0
    %v1482 = vld [vmem:[%s322] sm:$0xf]
    %v1483 = vadd.f32 %v1478, %v1482
    %v1484 = vld [vmem:[#allocation2] sm:$0xf]
    %v1487 = vunpack.c.l.s4 1983009808
    %v1488 = vunpack.c.0.s8 %v1487
    %v1489 = vlaneseq
    %v1490 = vshrl.u32 %v1489, 7
    %v1491 = vsub.s32 %v1488, %v1490
    %v1492 = vrot.slane %v1484, %v1491
    %v1493 = vcombine.high %v1492, %v1492
    %v1495 = vadd.f32 %v1480, %v1493
    %v1496 = vxor.u32 %v1483, 2147483648
    %v1497 = vmul.f32 %v1496, 1.442695
    %v1498 = vpow.pop %v1497
    %v1499 = vadd.f32 %v1498, 1.0
    %v1500 = vrcp.pop %v1499
    %v1501 = vmul.f32 1.0, %v1500
    %v1502 = vtanh.pop %v1483
    %v1503 = vmul.f32 %v1501, %v1361
    %1505 = vrot.lane.b32.xlu0 %v1502, 64
    %v1506 = vpop.permute.xlu0 %1505
    %v1508 = vmul.f32 %v1501, %v1506
    %1510 = vrot.lane.b32.xlu0 %v1508, 32
    %v1511 = vpop.permute.xlu0 %1510
    %v1513 = vadd.f32 %v1503, %v1511
    %v1514 = vtanh.pop %v1513
    %1516 = vrot.lane.b32.xlu0 %v1514, 64
    %v1517 = vpop.permute.xlu0 %1516
    %v1519 = vmul.f32 %v1501, %v1517
    %v1520 = vxor.u32 %v1495, 2147483648
    %v1521 = vmul.f32 %v1520, 1.442695
    %v1522 = vpow.pop %v1521
    %v1523 = vadd.f32 %v1522, 1.0
    %v1524 = vrcp.pop %v1523
    %v1525 = vmul.f32 1.0, %v1524
    %v1526 = vtanh.pop %v1495
    %v1527 = vmul.f32 %v1525, %v1385
    %1529 = vrot.lane.b32.xlu0 %v1526, 64
    %v1530 = vpop.permute.xlu0 %1529
    %v1532 = vmul.f32 %v1525, %v1530
    %1534 = vrot.lane.b32.xlu0 %v1532, 32
    %v1535 = vpop.permute.xlu0 %1534
    %v1537 = vadd.f32 %v1527, %v1535
    %v1538 = vtanh.pop %v1537
    %1540 = vrot.lane.b32.xlu0 %v1538, 64
    %v1541 = vpop.permute.xlu0 %1540
    %v1543 = vmul.f32 %v1525, %v1541
    %1545 = vrot.lane.b32.xlu0 %v1519, 32
    %v1546 = vpop.permute.xlu0 %1545
    %1548 = vst.msk [vmem:[#allocation3 + $0x7] sm:$0x1] %vm481, %v1546
    %1550 = vrot.lane.b32.xlu0 %v1543, 32
    %v1551 = vpop.permute.xlu0 %1550
    %1553 = vst.msk [vmem:[#allocation4] sm:$0x1] %vm481, %v1551
    %1554 = vst.msk [vmem:[#allocation3 + $0xe] sm:$0x2] %vm488, %v1546
    %1555 = vst.msk [vmem:[#allocation4 + $0x7] sm:$0x2] %vm488, %v1551
    %v1556 = vld [vmem:[#allocation3] sm:$0xff]
    %v1557 = vld [vmem:[#allocation3 + $0x8] sm:$0xff]
    %v1558 = vld [vmem:[#allocation4] sm:$0xff]
    %v1559 = vld [vmem:[#allocation4 + $0x8] sm:$0xff]
    %1562 = vrot.lane.b32.xlu0 %v1558, 32
    %v1563 = vpop.permute.xlu0 %1562
    %1564 = vrot.lane.b32.xlu0 %v1559, 32
    %v1565 = vpop.permute.xlu0 %1564
    %v1568 = vsel %vm494, %v1556, %v1563
    %v1569 = vsel %vm494, %v1557, %v1565
    %v1570 = vld [vmem:[#allocation11] sm:$0x1]
    %v1571 = vld [vmem:[#allocation13] sm:$0x1]
    %v1572 = vsel %vm340, %v1568, 0.0
    %1573 = vadd.xlane.f32.xlu0 %v1572
    %v1574 = vpop.xlane.xlu0 %1573
    %v1575 = vsel %vm340, %v1569, 0.0
    %1576 = vadd.xlane.f32.xlu0 %v1575
    %v1577 = vpop.xlane.xlu0 %1576
    %v1578 = vrcp.pop 64.0
    %v1579 = vmul.f32 %v1574, %v1578
    %v1580 = vmul.f32 %v1577, %v1578
    %v1581 = vsub.f32 %v1568, %v1579
    %v1582 = vsub.f32 %v1569, %v1580
    %v1583 = vmul.f32 %v1581, %v1581
    %v1584 = vmul.f32 %v1582, %v1582
    %v1585 = vsel %vm340, %v1583, 0.0
    %1586 = vadd.xlane.f32.xlu0 %v1585
    %v1587 = vpop.xlane.xlu0 %1586
    %v1588 = vsel %vm340, %v1584, 0.0
    %1589 = vadd.xlane.f32.xlu0 %v1588
    %v1590 = vpop.xlane.xlu0 %1589
    %v1591 = vmul.f32 %v1587, %v1578
    %v1592 = vmul.f32 %v1590, %v1578
    %v1593 = vadd.f32 %v1591, 1e-05
    %v1594 = vadd.f32 %v1592, 1e-05
    %v1595 = vrsqrt.pop %v1593
    %v1596 = vrsqrt.pop %v1594
    %v1597 = vmul.f32 %v1581, %v1595
    %v1598 = vmul.f32 %v1582, %v1596
    %v1600 = vlaneseq
    %v1601 = vshrl.u32 %v1600, 7
    %v1602 = vsub.s32 0, %v1601
    %v1603 = vrot.slane %v1570, %v1602
    %v1605 = vmul.f32 %v1597, %v1603
    %v1606 = vmul.f32 %v1598, %v1603
    %v1608 = vlaneseq
    %v1609 = vshrl.u32 %v1608, 7
    %v1610 = vsub.s32 0, %v1609
    %v1611 = vrot.slane %v1571, %v1610
    %v1613 = vadd.f32 %v1605, %v1611
    %v1614 = vadd.f32 %v1606, %v1611
    %v1615 = vld [vmem:[#allocation14] sm:$0x1]
    %v1616 = vld [vmem:[#allocation16] sm:$0x1]
    %v1617 = vsel %vm340, %v1613, 0.0
    %1618 = vadd.xlane.f32.xlu0 %v1617
    %v1619 = vpop.xlane.xlu0 %1618
    %v1620 = vsel %vm340, %v1614, 0.0
    %1621 = vadd.xlane.f32.xlu0 %v1620
    %v1622 = vpop.xlane.xlu0 %1621
    %v1623 = vmul.f32 %v1619, %v1578
    %v1624 = vmul.f32 %v1622, %v1578
    %v1625 = vsub.f32 %v1613, %v1623
    %v1626 = vsub.f32 %v1614, %v1624
    %v1627 = vmul.f32 %v1625, %v1625
    %v1628 = vmul.f32 %v1626, %v1626
    %v1629 = vsel %vm340, %v1627, 0.0
    %1630 = vadd.xlane.f32.xlu0 %v1629
    %v1631 = vpop.xlane.xlu0 %1630
    %v1632 = vsel %vm340, %v1628, 0.0
    %1633 = vadd.xlane.f32.xlu0 %v1632
    %v1634 = vpop.xlane.xlu0 %1633
    %v1635 = vmul.f32 %v1631, %v1578
    %v1636 = vmul.f32 %v1634, %v1578
    %v1637 = vadd.f32 %v1635, 1e-05
    %v1638 = vadd.f32 %v1636, 1e-05
    %v1639 = vrsqrt.pop %v1637
    %v1640 = vrsqrt.pop %v1638
    %v1641 = vmul.f32 %v1625, %v1639
    %v1642 = vmul.f32 %v1626, %v1640
    %v1644 = vlaneseq
    %v1645 = vshrl.u32 %v1644, 7
    %v1646 = vsub.s32 0, %v1645
    %v1647 = vrot.slane %v1615, %v1646
    %v1649 = vmul.f32 %v1641, %v1647
    %v1650 = vmul.f32 %v1642, %v1647
    %v1652 = vlaneseq
    %v1653 = vshrl.u32 %v1652, 7
    %v1654 = vsub.s32 0, %v1653
    %v1655 = vrot.slane %v1616, %v1654
    %v1657 = vadd.f32 %v1649, %v1655
    %v1658 = vadd.f32 %v1650, %v1655
    %v1659 = vld [vmem:[#allocation17] sm:$0xff]
    %v1660 = vld [vmem:[#allocation17 + $0x8] sm:$0xff]
    %v1661 = vld [vmem:[#allocation17 + $0x10] sm:$0xff]
    %v1662 = vld [vmem:[#allocation17 + $0x18] sm:$0xff]
    %v1663 = vld [vmem:[#allocation17 + $0x20] sm:$0xff]
    %v1664 = vld [vmem:[#allocation17 + $0x28] sm:$0xff]
    %v1665 = vld [vmem:[#allocation17 + $0x30] sm:$0xff]
    %v1666 = vld [vmem:[#allocation17 + $0x38] sm:$0xff]
    %v1667 = vld [vmem:[#allocation17 + $0x40] sm:$0xff]
    %v1668 = vld [vmem:[#allocation17 + $0x48] sm:$0xff]
    %v1669 = vld [vmem:[#allocation17 + $0x50] sm:$0xff]
    %v1670 = vld [vmem:[#allocation17 + $0x58] sm:$0xff]
    %v1671 = vld [vmem:[#allocation17 + $0x60] sm:$0xff]
    %v1672 = vld [vmem:[#allocation17 + $0x68] sm:$0xff]
    %v1673 = vld [vmem:[#allocation17 + $0x70] sm:$0xff]
    %v1674 = vld [vmem:[#allocation17 + $0x78] sm:$0xff]
    %v1675 = vld [vmem:[%s10] sm:$0x3]
    %v1677 = vlaneseq
    %v1678 = vshrl.u32 %v1677, 7
    %v1679 = vsub.s32 0, %v1678
    %v1680 = vrot.slane %v1675, %v1679
    %v1681 = vlaneseq
    %v1682 = vshrl.u32 %v1681, 7
    %v1683 = vsub.s32 1, %v1682
    %v1684 = vrot.slane %v1675, %v1683
    %v1688 = vsel %vm340, %v1657, 0
    %v1691 = vsel %vm340, %v1658, 0
    %1693 = vmatprep.subr.mxu0 %v1660
    %1694 = vmatpush1.msra.mxu0 %v1659
    %1695 = vmatprep.subr.mxu0 %v1662
    %1696 = vmatpush1.msra.mxu0 %v1661
    %1697 = vmatprep.subr.mxu0 %v1664
    %1698 = vmatpush1.msra.mxu0 %v1663
    %1699 = vmatprep.subr.mxu0 %v1666
    %1700 = vmatpush1.msra.mxu0 %v1665
    %1701 = vmatprep.subr.mxu0 %v1668
    %1702 = vmatpush1.msra.mxu0 %v1667
    %1703 = vmatprep.subr.mxu0 %v1670
    %1704 = vmatpush1.msra.mxu0 %v1669
    %1705 = vmatprep.subr.mxu0 %v1672
    %1706 = vmatpush1.msra.mxu0 %v1671
    %1707 = vmatprep.subr.mxu0 %v1674
    %1708 = vmatpush1.msra.mxu0 %v1673
    %1709 = vmatprep.subr.mxu0 0.0
    %1710 = vmatpush1.msra.mxu0 0.0
    %1711 = vmatprep.subr.mxu0 0.0
    %1712 = vmatpush1.msra.mxu0 0.0
    %1713 = vmatprep.subr.mxu0 0.0
    %1714 = vmatpush1.msra.mxu0 0.0
    %1715 = vmatprep.subr.mxu0 0.0
    %1716 = vmatpush1.msra.mxu0 0.0
    %1717 = vmatprep.subr.mxu0 0.0
    %1718 = vmatpush1.msra.mxu0 0.0
    %1719 = vmatprep.subr.mxu0 0.0
    %1720 = vmatpush1.msra.mxu0 0.0
    %1721 = vmatprep.subr.mxu0 0.0
    %1722 = vmatpush1.msra.mxu0 0.0
    %1723 = vmatprep.subr.mxu0 0.0
    %1724 = vmatpush1.msra.mxu0 0.0
    %1725 = vmatprep.subr.mxu0 0.0
    %1726 = vmatpush1.msra.mxu0 0.0
    %1727 = vmatprep.subr.mxu0 0.0
    %1728 = vmatpush1.msra.mxu0 0.0
    %1729 = vmatprep.subr.mxu0 0.0
    %1730 = vmatpush1.msra.mxu0 0.0
    %1731 = vmatprep.subr.mxu0 0.0
    %1732 = vmatpush1.msra.mxu0 0.0
    %1733 = vmatprep.subr.mxu0 0.0
    %1734 = vmatpush1.msra.mxu0 0.0
    %1735 = vmatprep.subr.mxu0 0.0
    %1736 = vmatpush1.msra.mxu0 0.0
    %1737 = vmatprep.subr.mxu0 0.0
    %1738 = vmatpush1.msra.mxu0 0.0
    %1739 = vmatprep.subr.mxu0 0.0
    %1740 = vmatpush1.msra.mxu0 0.0
    %1741 = vmatprep.subr.mxu0 0.0
    %1742 = vmatpush1.msra.mxu0 0.0
    %1743 = vmatprep.subr.mxu0 0.0
    %1744 = vmatpush1.msra.mxu0 0.0
    %1745 = vmatprep.subr.mxu0 0.0
    %1746 = vmatpush1.msra.mxu0 0.0
    %1747 = vmatprep.subr.mxu0 0.0
    %1748 = vmatpush1.msra.mxu0 0.0
    %1749 = vmatprep.subr.mxu0 0.0
    %1750 = vmatpush1.msra.mxu0 0.0
    %1751 = vmatprep.subr.mxu0 0.0
    %1752 = vmatpush1.msra.mxu0 0.0
    %1753 = vmatprep.subr.mxu0 0.0
    %1754 = vmatpush1.msra.mxu0 0.0
    %1755 = vmatprep.subr.mxu0 0.0
    %1756 = vmatpush1.msra.mxu0 0.0
    %1757 = vmatprep.mubr.f32.mxu0 0.0
    %1758 = vmatmul.mubr.f32.gmra.mrb[0].mxu0 %v1688
    %v1759 = vpop.f32.mrb[0].mxu0
    %v1760 = vadd.f32 %v1680, %v1759
    %v1761 = vpop.f32.mrb[0].mxu0
    %v1762 = vadd.f32 %v1684, %v1761
    %1763 = vmatprep.mubr.f32.mxu0 0.0
    %1764 = vmatmul.mubr.f32.gmra.mrb[0].mxu0 %v1691
    %v1765 = vpop.f32.mrb[0].mxu0
    %v1766 = vadd.f32 %v1680, %v1765
    %v1767 = vpop.f32.mrb[0].mxu0
    %v1768 = vadd.f32 %v1684, %v1767
    %1769 = vdwg.mxu0
    %1771 = vrot.lane.b32.xlu0 %v1760, 64
    %v1772 = vpop.permute.xlu0 %1771
    %v1773 = vsel %vm340, %v1760, 0
    %v1775 = vsel %vm340, %v1772, 0
    %1777 = vmatprep.subr.mxu0 0.0
    %1778 = vmatpush1.xpose.msra.mxu0 %v1775
    %1779 = vmatprep.subr.mxu0 0.0
    %1780 = vmatpush1.xpose.msra.mxu0 0.0
    %1781 = vmatprep.subr.mxu0 0.0
    %1782 = vmatpush1.xpose.msra.mxu0 0.0
    %1783 = vmatprep.subr.mxu0 0.0
    %1784 = vmatpush1.xpose.msra.mxu0 0.0
    %1785 = vmatprep.subr.mxu0 0.0
    %1786 = vmatpush1.xpose.msra.mxu0 0.0
    %1787 = vmatprep.subr.mxu0 0.0
    %1788 = vmatpush1.xpose.msra.mxu0 0.0
    %1789 = vmatprep.subr.mxu0 0.0
    %1790 = vmatpush1.xpose.msra.mxu0 0.0
    %1791 = vmatprep.subr.mxu0 0.0
    %1792 = vmatpush1.xpose.msra.mxu0 0.0
    %1793 = vmatprep.subr.mxu0 0.0
    %1794 = vmatpush1.xpose.msra.mxu0 0.0
    %1795 = vmatprep.subr.mxu0 0.0
    %1796 = vmatpush1.xpose.msra.mxu0 0.0
    %1797 = vmatprep.subr.mxu0 0.0
    %1798 = vmatpush1.xpose.msra.mxu0 0.0
    %1799 = vmatprep.subr.mxu0 0.0
    %1800 = vmatpush1.xpose.msra.mxu0 0.0
    %1801 = vmatprep.subr.mxu0 0.0
    %1802 = vmatpush1.xpose.msra.mxu0 0.0
    %1803 = vmatprep.subr.mxu0 0.0
    %1804 = vmatpush1.xpose.msra.mxu0 0.0
    %1805 = vmatprep.subr.mxu0 0.0
    %1806 = vmatpush1.xpose.msra.mxu0 0.0
    %1807 = vmatprep.subr.mxu0 0.0
    %1808 = vmatpush1.xpose.msra.mxu0 0.0
    %1809 = vmatprep.subr.mxu0 0.0
    %1810 = vmatpush1.xpose.msra.mxu0 0.0
    %1811 = vmatprep.subr.mxu0 0.0
    %1812 = vmatpush1.xpose.msra.mxu0 0.0
    %1813 = vmatprep.subr.mxu0 0.0
    %1814 = vmatpush1.xpose.msra.mxu0 0.0
    %1815 = vmatprep.subr.mxu0 0.0
    %1816 = vmatpush1.xpose.msra.mxu0 0.0
    %1817 = vmatprep.subr.mxu0 0.0
    %1818 = vmatpush1.xpose.msra.mxu0 0.0
    %1819 = vmatprep.subr.mxu0 0.0
    %1820 = vmatpush1.xpose.msra.mxu0 0.0
    %1821 = vmatprep.subr.mxu0 0.0
    %1822 = vmatpush1.xpose.msra.mxu0 0.0
    %1823 = vmatprep.subr.mxu0 0.0
    %1824 = vmatpush1.xpose.msra.mxu0 0.0
    %1825 = vmatprep.subr.mxu0 0.0
    %1826 = vmatpush1.xpose.msra.mxu0 0.0
    %1827 = vmatprep.subr.mxu0 0.0
    %1828 = vmatpush1.xpose.msra.mxu0 0.0
    %1829 = vmatprep.subr.mxu0 0.0
    %1830 = vmatpush1.xpose.msra.mxu0 0.0
    %1831 = vmatprep.subr.mxu0 0.0
    %1832 = vmatpush1.xpose.msra.mxu0 0.0
    %1833 = vmatprep.subr.mxu0 0.0
    %1834 = vmatpush1.xpose.msra.mxu0 0.0
    %1835 = vmatprep.subr.mxu0 0.0
    %1836 = vmatpush1.xpose.msra.mxu0 0.0
    %1837 = vmatprep.subr.mxu0 0.0
    %1838 = vmatpush1.xpose.msra.mxu0 0.0
    %1839 = vmatprep.subr.mxu0 0.0
    %1840 = vmatpush1.xpose.msra.mxu0 0.0
    %1841 = vmatprep.mubr.f32.mxu0 0.0
    %1842 = vmatmul.mubr.f32.gmra.mrb[0].mxu0 %v1773
    %v1843 = vpop.f32.mrb[0].mxu0
    %v1844 = vadd.f32 0.0, %v1843
    %v1845 = vpop.f32.mrb[0].mxu0
    %1846 = vdwg.mxu0
    %1848 = vrot.lane.b32.xlu0 %v1766, 64
    %v1849 = vpop.permute.xlu0 %1848
    %v1850 = vsel %vm340, %v1766, 0
    %v1852 = vsel %vm340, %v1849, 0
    %1854 = vmatprep.subr.mxu0 0.0
    %1855 = vmatpush1.xpose.msra.mxu0 %v1852
    %1856 = vmatprep.subr.mxu0 0.0
    %1857 = vmatpush1.xpose.msra.mxu0 0.0
    %1858 = vmatprep.subr.mxu0 0.0
    %1859 = vmatpush1.xpose.msra.mxu0 0.0
    %1860 = vmatprep.subr.mxu0 0.0
    %1861 = vmatpush1.xpose.msra.mxu0 0.0
    %1862 = vmatprep.subr.mxu0 0.0
    %1863 = vmatpush1.xpose.msra.mxu0 0.0
    %1864 = vmatprep.subr.mxu0 0.0
    %1865 = vmatpush1.xpose.msra.mxu0 0.0
    %1866 = vmatprep.subr.mxu0 0.0
    %1867 = vmatpush1.xpose.msra.mxu0 0.0
    %1868 = vmatprep.subr.mxu0 0.0
    %1869 = vmatpush1.xpose.msra.mxu0 0.0
    %1870 = vmatprep.subr.mxu0 0.0
    %1871 = vmatpush1.xpose.msra.mxu0 0.0
    %1872 = vmatprep.subr.mxu0 0.0
    %1873 = vmatpush1.xpose.msra.mxu0 0.0
    %1874 = vmatprep.subr.mxu0 0.0
    %1875 = vmatpush1.xpose.msra.mxu0 0.0
    %1876 = vmatprep.subr.mxu0 0.0
    %1877 = vmatpush1.xpose.msra.mxu0 0.0
    %1878 = vmatprep.subr.mxu0 0.0
    %1879 = vmatpush1.xpose.msra.mxu0 0.0
    %1880 = vmatprep.subr.mxu0 0.0
    %1881 = vmatpush1.xpose.msra.mxu0 0.0
    %1882 = vmatprep.subr.mxu0 0.0
    %1883 = vmatpush1.xpose.msra.mxu0 0.0
    %1884 = vmatprep.subr.mxu0 0.0
    %1885 = vmatpush1.xpose.msra.mxu0 0.0
    %1886 = vmatprep.subr.mxu0 0.0
    %1887 = vmatpush1.xpose.msra.mxu0 0.0
    %1888 = vmatprep.subr.mxu0 0.0
    %1889 = vmatpush1.xpose.msra.mxu0 0.0
    %1890 = vmatprep.subr.mxu0 0.0
    %1891 = vmatpush1.xpose.msra.mxu0 0.0
    %1892 = vmatprep.subr.mxu0 0.0
    %1893 = vmatpush1.xpose.msra.mxu0 0.0
    %1894 = vmatprep.subr.mxu0 0.0
    %1895 = vmatpush1.xpose.msra.mxu0 0.0
    %1896 = vmatprep.subr.mxu0 0.0
    %1897 = vmatpush1.xpose.msra.mxu0 0.0
    %1898 = vmatprep.subr.mxu0 0.0
    %1899 = vmatpush1.xpose.msra.mxu0 0.0
    %1900 = vmatprep.subr.mxu0 0.0
    %1901 = vmatpush1.xpose.msra.mxu0 0.0
    %1902 = vmatprep.subr.mxu0 0.0
    %1903 = vmatpush1.xpose.msra.mxu0 0.0
    %1904 = vmatprep.subr.mxu0 0.0
    %1905 = vmatpush1.xpose.msra.mxu0 0.0
    %1906 = vmatprep.subr.mxu0 0.0
    %1907 = vmatpush1.xpose.msra.mxu0 0.0
    %1908 = vmatprep.subr.mxu0 0.0
    %1909 = vmatpush1.xpose.msra.mxu0 0.0
    %1910 = vmatprep.subr.mxu0 0.0
    %1911 = vmatpush1.xpose.msra.mxu0 0.0
    %1912 = vmatprep.subr.mxu0 0.0
    %1913 = vmatpush1.xpose.msra.mxu0 0.0
    %1914 = vmatprep.subr.mxu0 0.0
    %1915 = vmatpush1.xpose.msra.mxu0 0.0
    %1916 = vmatprep.subr.mxu0 0.0
    %1917 = vmatpush1.xpose.msra.mxu0 0.0
    %1918 = vmatprep.mubr.f32.mxu0 0.0
    %1919 = vmatmul.mubr.f32.gmra.mrb[0].mxu0 %v1850
    %v1920 = vpop.f32.mrb[0].mxu0
    %v1921 = vadd.f32 0.0, %v1920
    %v1922 = vpop.f32.mrb[0].mxu0
    %1923 = vdwg.mxu0
    %v1924 = vmul.f32 %v1844, 0.125
    %v1925 = vmul.f32 %v1921, 0.125
    %v1926 = vld [vmem:[%s1] sm:$0x1]
    %v1927 = vld [vmem:[%s1 + $0x1] sm:$0x1]
    %vm1928 = vcmp.gt.f32.partialorder %v1926, 0.5
    %vm1929 = vcmp.gt.f32.partialorder %v1927, 0.5
    %v1930 = vsel %vm1928, 1, 0
    %v1931 = vsel %vm1929, 1, 0
    %v1932 = vlaneseq
    %v1933 = vshrl.u32 %v1932, 7
    %v1934 = vsub.s32 0, %v1933
    %v1935 = vrot.slane %v1930, %v1934
    %v1936 = vlaneseq
    %v1937 = vshrl.u32 %v1936, 7
    %v1938 = vsub.s32 0, %v1937
    %v1939 = vrot.slane %v1931, %v1938
    %vm1940 = vcmp.eq.s32.totalorder %v1935, 1
    %vm1941 = vcmp.eq.s32.totalorder %v1939, 1
    %v1942 = vsel %vm1940, %v1924, -1e+10
    %v1943 = vsel %vm1941, %v1925, -1e+10
    %vm1944 = vcmask 64512
    %v1945 = vsel %vm1944, %v1942, -inf
    %1946 = vmax.xlane.f32.xlu0 %v1945
    %v1947 = vpop.xlane.xlu0 %1946
    %v1948 = vsel %vm1944, %v1943, -inf
    %1949 = vmax.xlane.f32.xlu0 %v1948
    %v1950 = vpop.xlane.xlu0 %1949
    %v1951 = vsub.f32 %v1942, %v1947
    %v1952 = vsub.f32 %v1943, %v1950
    %v1953 = vmul.f32 %v1951, 1.442695
    %v1954 = vpow.pop %v1953
    %v1955 = vmul.f32 %v1952, 1.442695
    %v1956 = vpow.pop %v1955
    %v1957 = vsel %vm1944, %v1954, 0.0
    %1958 = vadd.xlane.f32.xlu0 %v1957
    %v1959 = vpop.xlane.xlu0 %1958
    %v1960 = vsel %vm1944, %v1956, 0.0
    %1961 = vadd.xlane.f32.xlu0 %v1960
    %v1962 = vpop.xlane.xlu0 %1961
    %v1963 = vrcp.pop %v1959
    %v1964 = vmul.f32 %v1954, %v1963
    %v1965 = vrcp.pop %v1962
    %v1966 = vmul.f32 %v1956, %v1965
    %1967 = vst.msk [vmem:[#allocation20] sm:$0xff] %vm1944, %v1964
    %1968 = vst.msk [vmem:[#allocation20 + $0x8] sm:$0xff] %vm1944, %v1966
    %v1970 = vsel %vm1944, %v1964, 0
    %1972 = vmatprep.subr.mxu0 0.0
    %1973 = vmatpush1.msra.mxu0 %v1762
    %1974 = vmatprep.subr.mxu0 0.0
    %1975 = vmatpush1.msra.mxu0 0.0
    %1976 = vmatprep.subr.mxu0 0.0
    %1977 = vmatpush1.msra.mxu0 0.0
    %1978 = vmatprep.subr.mxu0 0.0
    %1979 = vmatpush1.msra.mxu0 0.0
    %1980 = vmatprep.subr.mxu0 0.0
    %1981 = vmatpush1.msra.mxu0 0.0
    %1982 = vmatprep.subr.mxu0 0.0
    %1983 = vmatpush1.msra.mxu0 0.0
    %1984 = vmatprep.subr.mxu0 0.0
    %1985 = vmatpush1.msra.mxu0 0.0
    %1986 = vmatprep.subr.mxu0 0.0
    %1987 = vmatpush1.msra.mxu0 0.0
    %1988 = vmatprep.subr.mxu0 0.0
    %1989 = vmatpush1.msra.mxu0 0.0
    %1990 = vmatprep.subr.mxu0 0.0
    %1991 = vmatpush1.msra.mxu0 0.0
    %1992 = vmatprep.subr.mxu0 0.0
    %1993 = vmatpush1.msra.mxu0 0.0
    %1994 = vmatprep.subr.mxu0 0.0
    %1995 = vmatpush1.msra.mxu0 0.0
    %1996 = vmatprep.subr.mxu0 0.0
    %1997 = vmatpush1.msra.mxu0 0.0
    %1998 = vmatprep.subr.mxu0 0.0
    %1999 = vmatpush1.msra.mxu0 0.0
    %2000 = vmatprep.subr.mxu0 0.0
    %2001 = vmatpush1.msra.mxu0 0.0
    %2002 = vmatprep.subr.mxu0 0.0
    %2003 = vmatpush1.msra.mxu0 0.0
    %2004 = vmatprep.subr.mxu0 0.0
    %2005 = vmatpush1.msra.mxu0 0.0
    %2006 = vmatprep.subr.mxu0 0.0
    %2007 = vmatpush1.msra.mxu0 0.0
    %2008 = vmatprep.subr.mxu0 0.0
    %2009 = vmatpush1.msra.mxu0 0.0
    %2010 = vmatprep.subr.mxu0 0.0
    %2011 = vmatpush1.msra.mxu0 0.0
    %2012 = vmatprep.subr.mxu0 0.0
    %2013 = vmatpush1.msra.mxu0 0.0
    %2014 = vmatprep.subr.mxu0 0.0
    %2015 = vmatpush1.msra.mxu0 0.0
    %2016 = vmatprep.subr.mxu0 0.0
    %2017 = vmatpush1.msra.mxu0 0.0
    %2018 = vmatprep.subr.mxu0 0.0
    %2019 = vmatpush1.msra.mxu0 0.0
    %2020 = vmatprep.subr.mxu0 0.0
    %2021 = vmatpush1.msra.mxu0 0.0
    %2022 = vmatprep.subr.mxu0 0.0
    %2023 = vmatpush1.msra.mxu0 0.0
    %2024 = vmatprep.subr.mxu0 0.0
    %2025 = vmatpush1.msra.mxu0 0.0
    %2026 = vmatprep.subr.mxu0 0.0
    %2027 = vmatpush1.msra.mxu0 0.0
    %2028 = vmatprep.subr.mxu0 0.0
    %2029 = vmatpush1.msra.mxu0 0.0
    %2030 = vmatprep.subr.mxu0 0.0
    %2031 = vmatpush1.msra.mxu0 0.0
    %2032 = vmatprep.subr.mxu0 0.0
    %2033 = vmatpush1.msra.mxu0 0.0
    %2034 = vmatprep.subr.mxu0 0.0
    %2035 = vmatpush1.msra.mxu0 0.0
    %2036 = vmatprep.mubr.f32.mxu0 0.0
    %2037 = vmatmul.mubr.f32.gmra.mrb[0].mxu0 %v1970
    %v2038 = vpop.f32.mrb[0].mxu0
    %v2039 = vadd.f32 %v1613, %v2038
    %v2040 = vpop.f32.mrb[0].mxu0
    %2041 = vdwg.mxu0
    %v2043 = vsel %vm1944, %v1966, 0
    %2045 = vmatprep.subr.mxu0 0.0
    %2046 = vmatpush1.msra.mxu0 %v1768
    %2047 = vmatprep.subr.mxu0 0.0
    %2048 = vmatpush1.msra.mxu0 0.0
    %2049 = vmatprep.subr.mxu0 0.0
    %2050 = vmatpush1.msra.mxu0 0.0
    %2051 = vmatprep.subr.mxu0 0.0
    %2052 = vmatpush1.msra.mxu0 0.0
    %2053 = vmatprep.subr.mxu0 0.0
    %2054 = vmatpush1.msra.mxu0 0.0
    %2055 = vmatprep.subr.mxu0 0.0
    %2056 = vmatpush1.msra.mxu0 0.0
    %2057 = vmatprep.subr.mxu0 0.0
    %2058 = vmatpush1.msra.mxu0 0.0
    %2059 = vmatprep.subr.mxu0 0.0
    %2060 = vmatpush1.msra.mxu0 0.0
    %2061 = vmatprep.subr.mxu0 0.0
    %2062 = vmatpush1.msra.mxu0 0.0
    %2063 = vmatprep.subr.mxu0 0.0
    %2064 = vmatpush1.msra.mxu0 0.0
    %2065 = vmatprep.subr.mxu0 0.0
    %2066 = vmatpush1.msra.mxu0 0.0
    %2067 = vmatprep.subr.mxu0 0.0
    %2068 = vmatpush1.msra.mxu0 0.0
    %2069 = vmatprep.subr.mxu0 0.0
    %2070 = vmatpush1.msra.mxu0 0.0
    %2071 = vmatprep.subr.mxu0 0.0
    %2072 = vmatpush1.msra.mxu0 0.0
    %2073 = vmatprep.subr.mxu0 0.0
    %2074 = vmatpush1.msra.mxu0 0.0
    %2075 = vmatprep.subr.mxu0 0.0
    %2076 = vmatpush1.msra.mxu0 0.0
    %2077 = vmatprep.subr.mxu0 0.0
    %2078 = vmatpush1.msra.mxu0 0.0
    %2079 = vmatprep.subr.mxu0 0.0
    %2080 = vmatpush1.msra.mxu0 0.0
    %2081 = vmatprep.subr.mxu0 0.0
    %2082 = vmatpush1.msra.mxu0 0.0
    %2083 = vmatprep.subr.mxu0 0.0
    %2084 = vmatpush1.msra.mxu0 0.0
    %2085 = vmatprep.subr.mxu0 0.0
    %2086 = vmatpush1.msra.mxu0 0.0
    %2087 = vmatprep.subr.mxu0 0.0
    %2088 = vmatpush1.msra.mxu0 0.0
    %2089 = vmatprep.subr.mxu0 0.0
    %2090 = vmatpush1.msra.mxu0 0.0
    %2091 = vmatprep.subr.mxu0 0.0
    %2092 = vmatpush1.msra.mxu0 0.0
    %2093 = vmatprep.subr.mxu0 0.0
    %2094 = vmatpush1.msra.mxu0 0.0
    %2095 = vmatprep.subr.mxu0 0.0
    %2096 = vmatpush1.msra.mxu0 0.0
    %2097 = vmatprep.subr.mxu0 0.0
    %2098 = vmatpush1.msra.mxu0 0.0
    %2099 = vmatprep.subr.mxu0 0.0
    %2100 = vmatpush1.msra.mxu0 0.0
    %2101 = vmatprep.subr.mxu0 0.0
    %2102 = vmatpush1.msra.mxu0 0.0
    %2103 = vmatprep.subr.mxu0 0.0
    %2104 = vmatpush1.msra.mxu0 0.0
    %2105 = vmatprep.subr.mxu0 0.0
    %2106 = vmatpush1.msra.mxu0 0.0
    %2107 = vmatprep.subr.mxu0 0.0
    %2108 = vmatpush1.msra.mxu0 0.0
    %2109 = vmatprep.mubr.f32.mxu0 0.0
    %2110 = vmatmul.mubr.f32.gmra.mrb[0].mxu0 %v2043
    %v2111 = vpop.f32.mrb[0].mxu0
    %v2112 = vadd.f32 %v1614, %v2111
    %v2113 = vpop.f32.mrb[0].mxu0
    %2114 = vdwg.mxu0
    %v2115 = vsel %vm340, %v2039, -inf
    %v2116 = vrot.slane %v2115, 4
    %v2117 = vmax.f32 %v2115, %v2116
    %v2118 = vrot.slane %v2117, 2
    %v2119 = vmax.f32 %v2117, %v2118
    %v2120 = vrot.slane %v2119, 1
    %v2121 = vmax.f32 %v2119, %v2120
    %v2122 = vsel %vm340, %v2112, -inf
    %v2123 = vrot.slane %v2122, 4
    %v2124 = vmax.f32 %v2122, %v2123
    %v2125 = vrot.slane %v2124, 2
    %v2126 = vmax.f32 %v2124, %v2125
    %v2127 = vrot.slane %v2126, 1
    %v2128 = vmax.f32 %v2126, %v2127
    %v2129 = vld [vmem:[%s11] sm:$0xff]
    %v2130 = vld [vmem:[%s11 + $0x8] sm:$0xff]
    %v2131 = vld [vmem:[%s11 + $0x10] sm:$0xff]
    %v2132 = vld [vmem:[%s11 + $0x18] sm:$0xff]
    %v2133 = vld [vmem:[%s11 + $0x20] sm:$0xff]
    %v2134 = vld [vmem:[%s11 + $0x28] sm:$0xff]
    %v2135 = vld [vmem:[%s11 + $0x30] sm:$0xff]
    %v2136 = vld [vmem:[%s11 + $0x38] sm:$0xff]
    %v2137 = vld [vmem:[%s12] sm:$0x1]
    %v2139 = vlaneseq
    %v2140 = vshrl.u32 %v2139, 7
    %v2141 = vsub.s32 0, %v2140
    %v2142 = vrot.slane %v2137, %v2141
    %vm2146 = vcmask 1041409
    %v2147 = vsel %vm2146, %v2128, %v2121
    %v2148 = vsel %vm340, %v2147, 0
    %2150 = vmatprep.subr.mxu0 0.0
    %2151 = vmatpush1.msra.mxu0 %v2129
    %2152 = vmatprep.subr.mxu0 0.0
    %2153 = vmatpush1.msra.mxu0 %v2130
    %2154 = vmatprep.subr.mxu0 0.0
    %2155 = vmatpush1.msra.mxu0 %v2131
    %2156 = vmatprep.subr.mxu0 0.0
    %2157 = vmatpush1.msra.mxu0 %v2132
    %2158 = vmatprep.subr.mxu0 0.0
    %2159 = vmatpush1.msra.mxu0 %v2133
    %2160 = vmatprep.subr.mxu0 0.0
    %2161 = vmatpush1.msra.mxu0 %v2134
    %2162 = vmatprep.subr.mxu0 0.0
    %2163 = vmatpush1.msra.mxu0 %v2135
    %2164 = vmatprep.subr.mxu0 0.0
    %2165 = vmatpush1.msra.mxu0 %v2136
    %2166 = vmatprep.subr.mxu0 0.0
    %2167 = vmatpush1.msra.mxu0 0.0
    %2168 = vmatprep.subr.mxu0 0.0
    %2169 = vmatpush1.msra.mxu0 0.0
    %2170 = vmatprep.subr.mxu0 0.0
    %2171 = vmatpush1.msra.mxu0 0.0
    %2172 = vmatprep.subr.mxu0 0.0
    %2173 = vmatpush1.msra.mxu0 0.0
    %2174 = vmatprep.subr.mxu0 0.0
    %2175 = vmatpush1.msra.mxu0 0.0
    %2176 = vmatprep.subr.mxu0 0.0
    %2177 = vmatpush1.msra.mxu0 0.0
    %2178 = vmatprep.subr.mxu0 0.0
    %2179 = vmatpush1.msra.mxu0 0.0
    %2180 = vmatprep.subr.mxu0 0.0
    %2181 = vmatpush1.msra.mxu0 0.0
    %2182 = vmatprep.subr.mxu0 0.0
    %2183 = vmatpush1.msra.mxu0 0.0
    %2184 = vmatprep.subr.mxu0 0.0
    %2185 = vmatpush1.msra.mxu0 0.0
    %2186 = vmatprep.subr.mxu0 0.0
    %2187 = vmatpush1.msra.mxu0 0.0
    %2188 = vmatprep.subr.mxu0 0.0
    %2189 = vmatpush1.msra.mxu0 0.0
    %2190 = vmatprep.subr.mxu0 0.0
    %2191 = vmatpush1.msra.mxu0 0.0
    %2192 = vmatprep.subr.mxu0 0.0
    %2193 = vmatpush1.msra.mxu0 0.0
    %2194 = vmatprep.subr.mxu0 0.0
    %2195 = vmatpush1.msra.mxu0 0.0
    %2196 = vmatprep.subr.mxu0 0.0
    %2197 = vmatpush1.msra.mxu0 0.0
    %2198 = vmatprep.subr.mxu0 0.0
    %2199 = vmatpush1.msra.mxu0 0.0
    %2200 = vmatprep.subr.mxu0 0.0
    %2201 = vmatpush1.msra.mxu0 0.0
    %2202 = vmatprep.subr.mxu0 0.0
    %2203 = vmatpush1.msra.mxu0 0.0
    %2204 = vmatprep.subr.mxu0 0.0
    %2205 = vmatpush1.msra.mxu0 0.0
    %2206 = vmatprep.subr.mxu0 0.0
    %2207 = vmatpush1.msra.mxu0 0.0
    %2208 = vmatprep.subr.mxu0 0.0
    %2209 = vmatpush1.msra.mxu0 0.0
    %2210 = vmatprep.subr.mxu0 0.0
    %2211 = vmatpush1.msra.mxu0 0.0
    %2212 = vmatprep.subr.mxu0 0.0
    %2213 = vmatpush1.msra.mxu0 0.0
    %2214 = vmatprep.mubr.f32.mxu0 0.0
    %2215 = vmatmul.mubr.f32.gmra.mrb[0].mxu0 %v2148
    %v2216 = vpop.f32.mrb[0].mxu0
    %v2217 = vadd.f32 %v2142, %v2216
    %v2218 = vpop.f32.mrb[0].mxu0
    %2219 = vdwg.mxu0
    %v2220 = vld [vmem:[%s13] sm:$0x1]
    %v2221 = vld [vmem:[%s14] sm:$0x1]
    %vm2222 = vcmask 254976
    %v2223 = vsel %vm2222, %v2217, 0.0
    %2224 = vadd.xlane.f32.xlu0 %v2223
    %v2225 = vpop.xlane.xlu0 %2224
    %v2226 = vrcp.pop 32.0
    %v2227 = vmul.f32 %v2225, %v2226
    %v2228 = vsub.f32 %v2217, %v2227
    %v2229 = vmul.f32 %v2228, %v2228
    %v2230 = vsel %vm2222, %v2229, 0.0
    %2231 = vadd.xlane.f32.xlu0 %v2230
    %v2232 = vpop.xlane.xlu0 %2231
    %v2233 = vmul.f32 %v2232, %v2226
    %v2234 = vadd.f32 %v2233, 1e-05
    %v2235 = vrsqrt.pop %v2234
    %v2236 = vmul.f32 %v2228, %v2235
    %v2238 = vlaneseq
    %v2239 = vshrl.u32 %v2238, 7
    %v2240 = vsub.s32 0, %v2239
    %v2241 = vrot.slane %v2220, %v2240
    %v2243 = vmul.f32 %v2236, %v2241
    %v2245 = vlaneseq
    %v2246 = vshrl.u32 %v2245, 7
    %v2247 = vsub.s32 0, %v2246
    %v2248 = vrot.slane %v2221, %v2247
    %v2250 = vadd.f32 %v2243, %v2248
    %v2251 = vmax.f32 %v2250, 0.0
    %v2252 = vld [vmem:[%s15] sm:$0xff]
    %v2253 = vld [vmem:[%s15 + $0x8] sm:$0xff]
    %v2254 = vld [vmem:[%s15 + $0x10] sm:$0xff]
    %v2255 = vld [vmem:[%s15 + $0x18] sm:$0xff]
    %v2256 = vld [vmem:[%s16] sm:$0x1]
    %v2258 = vlaneseq
    %v2259 = vshrl.u32 %v2258, 7
    %v2260 = vsub.s32 0, %v2259
    %v2261 = vrot.slane %v2256, %v2260
    %v2264 = vsel %vm494, %v2251, 0
    %2266 = vmatprep.subr.mxu0 0.0
    %2267 = vmatpush1.msra.mxu0 %v2252
    %2268 = vmatprep.subr.mxu0 0.0
    %2269 = vmatpush1.msra.mxu0 %v2253
    %2270 = vmatprep.subr.mxu0 0.0
    %2271 = vmatpush1.msra.mxu0 %v2254
    %2272 = vmatprep.subr.mxu0 0.0
    %2273 = vmatpush1.msra.mxu0 %v2255
    %2274 = vmatprep.subr.mxu0 0.0
    %2275 = vmatpush1.msra.mxu0 0.0
    %2276 = vmatprep.subr.mxu0 0.0
    %2277 = vmatpush1.msra.mxu0 0.0
    %2278 = vmatprep.subr.mxu0 0.0
    %2279 = vmatpush1.msra.mxu0 0.0
    %2280 = vmatprep.subr.mxu0 0.0
    %2281 = vmatpush1.msra.mxu0 0.0
    %2282 = vmatprep.subr.mxu0 0.0
    %2283 = vmatpush1.msra.mxu0 0.0
    %2284 = vmatprep.subr.mxu0 0.0
    %2285 = vmatpush1.msra.mxu0 0.0
    %2286 = vmatprep.subr.mxu0 0.0
    %2287 = vmatpush1.msra.mxu0 0.0
    %2288 = vmatprep.subr.mxu0 0.0
    %2289 = vmatpush1.msra.mxu0 0.0
    %2290 = vmatprep.subr.mxu0 0.0
    %2291 = vmatpush1.msra.mxu0 0.0
    %2292 = vmatprep.subr.mxu0 0.0
    %2293 = vmatpush1.msra.mxu0 0.0
    %2294 = vmatprep.subr.mxu0 0.0
    %2295 = vmatpush1.msra.mxu0 0.0
    %2296 = vmatprep.subr.mxu0 0.0
    %2297 = vmatpush1.msra.mxu0 0.0
    %2298 = vmatprep.subr.mxu0 0.0
    %2299 = vmatpush1.msra.mxu0 0.0
    %2300 = vmatprep.subr.mxu0 0.0
    %2301 = vmatpush1.msra.mxu0 0.0
    %2302 = vmatprep.subr.mxu0 0.0
    %2303 = vmatpush1.msra.mxu0 0.0
    %2304 = vmatprep.subr.mxu0 0.0
    %2305 = vmatpush1.msra.mxu0 0.0
    %2306 = vmatprep.subr.mxu0 0.0
    %2307 = vmatpush1.msra.mxu0 0.0
    %2308 = vmatprep.subr.mxu0 0.0
    %2309 = vmatpush1.msra.mxu0 0.0
    %2310 = vmatprep.subr.mxu0 0.0
    %2311 = vmatpush1.msra.mxu0 0.0
    %2312 = vmatprep.subr.mxu0 0.0
    %2313 = vmatpush1.msra.mxu0 0.0
    %2314 = vmatprep.subr.mxu0 0.0
    %2315 = vmatpush1.msra.mxu0 0.0
    %2316 = vmatprep.subr.mxu0 0.0
    %2317 = vmatpush1.msra.mxu0 0.0
    %2318 = vmatprep.subr.mxu0 0.0
    %2319 = vmatpush1.msra.mxu0 0.0
    %2320 = vmatprep.subr.mxu0 0.0
    %2321 = vmatpush1.msra.mxu0 0.0
    %2322 = vmatprep.subr.mxu0 0.0
    %2323 = vmatpush1.msra.mxu0 0.0
    %2324 = vmatprep.subr.mxu0 0.0
    %2325 = vmatpush1.msra.mxu0 0.0
    %2326 = vmatprep.subr.mxu0 0.0
    %2327 = vmatpush1.msra.mxu0 0.0
    %2328 = vmatprep.subr.mxu0 0.0
    %2329 = vmatpush1.msra.mxu0 0.0
    %2330 = vmatprep.mubr.f32.mxu0 0.0
    %2331 = vmatmul.mubr.f32.gmra.mrb[0].mxu0 %v2264
    %v2332 = vpop.f32.mrb[0].mxu0
    %v2333 = vadd.f32 %v2261, %v2332
    %v2334 = vpop.f32.mrb[0].mxu0
    %2335 = vdwg.mxu0
    %vm2336 = vcmask 41984
    %2337 = vst.msk [vmem:[#allocation19] sm:$0x3] %vm2336, %v2333
    // Predicated region
    $region102: #{tpu_custom_call.1} parent=1 // pred_check
      _
    $region103: #{tpu_custom_call.1} parent=1 // pred_check_branch
      %2339 = sbr.rel (0) target = $region105
    $region104: #{tpu_custom_call.1} parent=1 // pred_region
      %s2341 = ssub.s32 32, 32
      %2342 = vsyncadd [#allocation7], %s2341
      %s2344 = sshll.u32 [#allocation19], 4
      %s2345 = int_to_ptr.vmem [resolvable:$true] %s2344
      %2347 = dma.vmem_to_hbm [thread:$0]  %s2345, 32, %s17, [#allocation7]
    $region105: #{tpu_custom_call.1} parent=1 // pred_fallthru
      _
    // Predicated region
    $region106: #{tpu_custom_call.1} parent=1 // pred_check
      _
    $region107: #{tpu_custom_call.1} parent=1 // pred_check_branch
      %2349 = sbr.rel (0) target = $region109
    $region108: #{tpu_custom_call.1} parent=1 // pred_region
      %s2351 = ssub.s32 256, 256
      %2352 = vsyncadd [#allocation21], %s2351
      %s2353 = sshll.u32 [#allocation20], 4
      %s2354 = int_to_ptr.vmem [resolvable:$true] %s2353
      %2359 = dma.vmem_to_hbm [thread:$0]  %s2354, 256, %s18, [#allocation21], 128, 128, 8
    $region109: #{tpu_custom_call.1} parent=1 // pred_fallthru
      _
    // Predicated region
    $region110: #{tpu_custom_call.1} parent=1 // pred_check
      _
    $region111: #{tpu_custom_call.1} parent=1 // pred_check_branch
      %2361 = sbr.rel (0) target = $region113
    $region112: #{tpu_custom_call.1} parent=1 // pred_region
      %2362 = dma.done [#allocation7], 32
    $region113: #{tpu_custom_call.1} parent=1 // pred_fallthru
      _
    // Predicated region
    $region114: #{tpu_custom_call.1} parent=1 // pred_check
      _
    $region115: #{tpu_custom_call.1} parent=1 // pred_check_branch
      %2364 = sbr.rel (0) target = $region117
    $region116: #{tpu_custom_call.1} parent=1 // pred_region
      %2365 = dma.done [#allocation21], 256
    $region117: #{tpu_custom_call.1} parent=1 // pred_fallthru
      _
    %2366 = vsyncpa [#allocation6], 1
    %2367 = vsyncpa [#allocation9], 1
    %2368 = vsyncpa [#allocation12], 1
    %2369 = vsyncpa [#allocation15], 1
    %2370 = vsyncpa [#allocation18], 1
    %2371 = vsyncpa [#allocation7], 1
    %2372 = vsyncpa [#allocation21], 1

</llo_original>
